<compile_context>
chip_gen: v7x
topology: tpu7x:2x2x1
jax: 0.10.0
libtpu: 0.0.40
codegen_flags: <defaults>
</compile_context>

<pallas_src>
import functools

import jax
import jax.numpy as jnp
import numpy as np
from jax import lax
from jax.experimental import pallas as pl
from jax.experimental.pallas import tpu as pltpu


def _seq_branch_kernel(x_ref, w1_ref, b1_ref, w2_ref, b2_ref,
                       m1_ref, bm1_ref, m2_ref, bm2_ref, o_ref, *, use_roll=True):
    Nb, H, W, _ = x_ref.shape
    Cp = o_ref.shape[-1]          # lane-padded output width (multiple of 128)

    # Activations / shifts / bias / ReLU in f32 (small buffers); the large per-kh im2col
    # slabs below are built in the MXU dtype (bf16 by default).
    x = x_ref[...].astype(jnp.float32)                          # (Nb, H, W, Cin)

    def conv3x3_circ(inp, w_ref, b_ref):
        # inp: (Nb, H, W, Ci) f32; w_ref: (3, 3*Ci, Co) per-kh im2col weights; b_ref: (1, Co) f32
        Nb_, Hh, Ww, Ci = inp.shape
        Co = w_ref.shape[-1]
        mm_dtype = w_ref.dtype

        # H zero-pad hoisted out of the tap loop: one leading-axis concat per layer.
        zrow = jnp.zeros((Nb_, 1, Ww, Ci), dtype=inp.dtype)
        inp_pad = jnp.concatenate([zrow, inp, zrow], axis=1)     # (Nb, H+2, W, Ci)

        # Circular shift along W (DOA axis) for each kw tap; roll commutes with the H pad,
        # so only 2 XLU sublane rotates per layer (concat fallback for restricted toolchains).
        rolled = []
        for kw in range(3):
            s = (1 - kw) % Ww
            if s == 0:
                rw = inp_pad
            elif use_roll:
                rw = pltpu.roll(inp_pad, shift=s, axis=2)
            else:
                rw = jnp.concatenate([inp_pad[:, :, Ww - s:], inp_pad[:, :, :Ww - s]],
                                     axis=2)
            rolled.append(rw)

        # kh-split im2col: 3 matmuls of K = 3*Ci each (taps ordered (kw, ci) per kh to
        # match the wrapper's per-kh weight reshape); f32 accumulation.
        acc = None
        for kh in range(3):
            slab = jnp.concatenate(
                [rolled[kw][:, kh:kh + Hh].astype(mm_dtype) for kw in range(3)],
                axis=-1)                                         # (Nb, H, W, 3*Ci)
            slab = slab.reshape(Nb_ * Hh * Ww, 3 * Ci)
            part = jnp.dot(slab, w_ref[kh], preferred_element_type=jnp.float32)
            acc = part if acc is None else acc + part
        acc = acc + b_ref[...]                                   # (1, Co) broadcasts, f32
        return acc.reshape(Nb_, Hh, Ww, Co)

    # conv2d sequence (ReLU after each layer)
    y = jnp.maximum(conv3x3_circ(x, w1_ref, b1_ref), 0.0)
    y = jnp.maximum(conv3x3_circ(y, w2_ref, b2_ref), 0.0)

    # global average pool over spatial axis 0 (H); the 1/H scale is folded into m1
    # wrapper-side, so a plain sum suffices here.
    y = jnp.sum(y, axis=1)                                       # (Nb, W, C2)

    # MLP (stack of kernel_size-1 Conv1d) == per-W-position channel matmuls.
    C2 = y.shape[-1]
    yf = y.reshape(Nb * W, C2)
    h = jnp.maximum(jnp.dot(yf.astype(m1_ref.dtype), m1_ref[...],
                            preferred_element_type=jnp.float32) + bm1_ref[...], 0.0)
    out = jnp.dot(h.astype(m2_ref.dtype), m2_ref[...],
                  preferred_element_type=jnp.float32) + bm2_ref[...]
    out = jax.nn.sigmoid(out)                                    # (Nb*W, Cp) f32, output_act
    # Cp is a multiple of 128 -> unmasked full-lane stores; split-major reshape is cheap.
    o_ref[...] = out.reshape(Nb, W, Cp).astype(o_ref.dtype)


def _pick_block_n(N, per_sample_bytes, budget_bytes, min_steps):
    cap_mem = max(1, int(budget_bytes // max(per_sample_bytes, 1)))
    cap_steps = N if min_steps <= 1 else max(1, N // min_steps)
    cap = min(N, cap_mem, max(1, cap_steps))
    for cand in range(cap, 0, -1):
        if N % cand == 0:
            return cand
    return 1


def sequence_wise_branch(x_nhwc, params, *, compute_dtype=jnp.bfloat16,
                         block_n=None, use_roll=True, min_grid_steps=2):
    """x_nhwc: (N, H, W, Cin); returns (N, W, Cout) float32."""
    N, H, W, Cin = x_nhwc.shape
    w1, b1, w2, b2, m1, bm1, m2, bm2 = params
    C1, C2 = w1.shape[3], w2.shape[3]
    Hm, Cout = m2.shape
    # Lane-dense output width (multiple of 128 lanes); wrapper slices the pad back off.
    Cp = ((Cout + 127) // 128) * 128

    # Wrapper-side weight prep:
    #  * conv weights -> per-kh flat im2col slabs ordered (kh, (kw, ci), co), MXU dtype
    #  * 1/H global-average-pool scale folded into m1
    #  * m2 / bm2 zero-padded on the output-channel (lane) axis to Cp
    #  * biases stay f32 (added on the f32 accumulator)
    w1_k = w1.reshape(3, 3 * Cin, C1).astype(compute_dtype)
    w2_k = w2.reshape(3, 3 * C1, C2).astype(compute_dtype)
    m1_c = (m1 / float(H)).astype(compute_dtype)
    m2_c = jnp.zeros((Hm, Cp), dtype=compute_dtype).at[:, :Cout].set(m2.astype(compute_dtype))
    bm2_c = jnp.zeros((1, Cp), dtype=jnp.float32).at[:, :Cout].set(bm2.astype(jnp.float32))
    b1_f, b2_f = b1.astype(jnp.float32), b2.astype(jnp.float32)
    bm1_f = bm1.astype(jnp.float32)
    # x cast to the MXU dtype (halves HBM->VMEM DMA); when compute_dtype=f32 the
    # input is fed at f32, which is what the tight-tolerance check relies on.
    x_c = x_nhwc.astype(compute_dtype)

    itm = np.dtype(compute_dtype).itemsize
    Cmax = max(Cin, C1, C2)

    # Scoped VMEM: raise the limit explicitly (v5e default is only 16 MiB) but stay at
    # <= half of physical capacity (64 MiB on v7x, 128 MiB on v5e/v6e).
    try:
        vmem_cap = int(getattr(pltpu.get_tpu_info(), "vmem_capacity_bytes", 64 * 2**20))
    except Exception:
        vmem_cap = 64 * 2**20
    vmem_limit = int(min(max(vmem_cap // 2, 32 * 2**20), 64 * 2**20))

    if block_n is None:
        # VMEM-budgeted block size.  Dominant per-sample terms: double-buffered x block,
        # padded f32 layer input + 3 rolled copies, one kh patch slab (MXU dtype),
        # f32 layer output, MLP activations; 2x safety factor for compiler temporaries.
        # min_grid_steps=2 keeps both v7x TensorCores busy; single-TC chips only pay
        # ~0.35us for the extra step (pass min_grid_steps=1 to relax on v5e/v6e).
        per_sample = (
            2 * H * W * Cin * itm
            + 4 * (H + 2) * W * Cmax * 4
            + H * W * 3 * Cmax * itm
            + 2 * H * W * Cmax * 4
            + 2 * W * max(Hm, C2, Cp) * 4
        ) * 2
        block_n = _pick_block_n(N, per_sample, int(vmem_limit * 0.6), min_grid_steps)
    assert N % block_n == 0

    # Advisory cost estimate so XLA can schedule/overlap this small kernel.
    flops = (2 * N * H * W * 9 * (Cin * C1 + C1 * C2)
             + 2 * N * W * (C2 * Hm + Hm * Cp))
    bytes_accessed = (x_c.size * itm + N * W * Cp * 4
                      + (w1_k.size + w2_k.size + m1_c.size + m2_c.size) * itm
                      + (b1_f.size + b2_f.size + bm1_f.size + bm2_c.size) * 4)
    cost = pl.CostEstimate(flops=int(flops), transcendentals=int(N * W * Cp),
                           bytes_accessed=int(bytes_accessed))

    def const_spec(a):
        # Constant operands: full-array block pinned to block 0.
        return pl.BlockSpec(a.shape, lambda n: (0,) * a.ndim)

    kernel = functools.partial(_seq_branch_kernel, use_roll=use_roll)

    out_pad = pl.pallas_call(
        kernel,
        out_shape=jax.ShapeDtypeStruct((N, W, Cp), jnp.float32),
        grid_spec=pltpu.PrefetchScalarGridSpec(
            num_scalar_prefetch=0,
            grid=(N // block_n,),
            in_specs=[pl.BlockSpec((block_n, H, W, Cin), lambda n: (n, 0, 0, 0)),
                      const_spec(w1_k), const_spec(b1_f),
                      const_spec(w2_k), const_spec(b2_f),
                      const_spec(m1_c), const_spec(bm1_f),
                      const_spec(m2_c), const_spec(bm2_c)],
            out_specs=pl.BlockSpec((block_n, W, Cp), lambda n: (n, 0, 0)),
        ),
        compiler_params=pltpu.CompilerParams(
            dimension_semantics=("parallel",),
            vmem_limit_bytes=vmem_limit),
        cost_estimate=cost,
    )(x_c, w1_k, b1_f, w2_k, b2_f, m1_c, bm1_f, m2_c, bm2_c)

    return out_pad[:, :, :Cout]


def _reference(x_nhwc, params):
    """Pure-JAX reference (lax.conv) for correctness check."""
    w1, b1, w2, b2, m1, bm1, m2, bm2 = params

    def conv(inp, w, b):
        xp = jnp.pad(inp, ((0, 0), (0, 0), (1, 1), (0, 0)), mode="wrap")   # circular W
        xp = jnp.pad(xp, ((0, 0), (1, 1), (0, 0), (0, 0)))                 # zero H
        y = lax.conv_general_dilated(xp, w, (1, 1), "VALID",
                                     dimension_numbers=("NHWC", "HWIO", "NHWC"))
        return y + b.reshape(1, 1, 1, -1)

    y = jax.nn.relu(conv(x_nhwc, w1, b1))
    y = jax.nn.relu(conv(y, w2, b2))
    y = jnp.mean(y, axis=1)                                  # pool over H -> (N, W, C2)
    h = jax.nn.relu(jnp.einsum("nwc,cd->nwd", y, m1) + bm1)
    out = jnp.einsum("nwd,de->nwe", h, m2) + bm2
    return jax.nn.sigmoid(out)


if __name__ == "__main__":
    # module config (synthetic, deterministic): conv_args 4->8->8 (3x3),
    # pool='avg' over axis 0, mlp_args=[8, 32, 12], output_act=sigmoid.
    N, Cin, H, W = 2, 4, 16, 16
    C1, C2 = 8, 8
    Hm, Cout = 32, 12

    key = jax.random.PRNGKey(0)
    ks = jax.random.split(key, 9)
    x_nchw = jax.random.normal(ks[0], (N, Cin, H, W), dtype=jnp.float32)
    x_nhwc = jnp.transpose(x_nchw, (0, 2, 3, 1))

    params = (
        0.1 * jax.random.normal(ks[1], (3, 3, Cin, C1), dtype=jnp.float32),
        0.1 * jax.random.normal(ks[2], (1, C1), dtype=jnp.float32),
        0.1 * jax.random.normal(ks[3], (3, 3, C1, C2), dtype=jnp.float32),
        0.1 * jax.random.normal(ks[4], (1, C2), dtype=jnp.float32),
        0.1 * jax.random.normal(ks[5], (C2, Hm), dtype=jnp.float32),
        0.1 * jax.random.normal(ks[6], (1, Hm), dtype=jnp.float32),
        0.1 * jax.random.normal(ks[7], (Hm, Cout), dtype=jnp.float32),
        0.1 * jax.random.normal(ks[8], (1, Cout), dtype=jnp.float32),
    )

    ref = jax.block_until_ready(_reference(x_nhwc, params))

    def _run(use_roll):
        out32 = sequence_wise_branch(x_nhwc, params, compute_dtype=jnp.float32,
                                     use_roll=use_roll)
        out_bf = sequence_wise_branch(x_nhwc, params, use_roll=use_roll)
        return jax.block_until_ready(out32), jax.block_until_ready(out_bf)

    try:
        out32, out_bf = _run(use_roll=True)
    except (pltpu.LoweringException, NotImplementedError):
        # Only lowering rejections (toolchains that restrict sublane rotates) fall back to
        # the concat-based circular shift; numerical failures are NOT masked here.
        out32, out_bf = _run(use_roll=False)

    # f32 MXU path: tight tolerance (x is fed at f32 when compute_dtype=f32).
    np.testing.assert_allclose(np.asarray(out32), np.asarray(ref), atol=2e-4, rtol=2e-4)
    # default bf16 MXU path (v6e/v7x): f32 accumulation, looser tolerance.
    np.testing.assert_allclose(np.asarray(out_bf), np.asarray(ref), atol=2e-2, rtol=2e-2)

    print("KERNEL_OK")
</pallas_src>

<mosaic_0001>
module attributes {stable_mosaic.version = 11 : i64} {
  func.func @_seq_branch_kernel(%arg0: i32, %arg1: memref<1x16x16x4xf32, #tpu.memory_space<vmem>>, %arg2: memref<3x12x8xf32, #tpu.memory_space<vmem>>, %arg3: memref<1x8xf32, #tpu.memory_space<vmem>>, %arg4: memref<3x24x8xf32, #tpu.memory_space<vmem>>, %arg5: memref<1x8xf32, #tpu.memory_space<vmem>>, %arg6: memref<8x32xf32, #tpu.memory_space<vmem>>, %arg7: memref<1x32xf32, #tpu.memory_space<vmem>>, %arg8: memref<32x128xf32, #tpu.memory_space<vmem>>, %arg9: memref<1x128xf32, #tpu.memory_space<vmem>>, %arg10: memref<1x16x128xf32, #tpu.memory_space<vmem>>) attributes {dimension_semantics = [#tpu.dimension_semantics<parallel>], iteration_bounds = array<i64: 2>, scalar_prefetch = 0 : i64, scratch_operands = 0 : i64, tpu.core_type = #tpu.core_type<tc>, window_params = [{transform_indices = @transform_0, window_bounds = array<i64: 1, 16, 16, 4>}, {pipeline_mode = #tpu.pipeline_mode<synchronous>, transform_indices = @transform_1, window_bounds = array<i64: 3, 12, 8>}, {pipeline_mode = #tpu.pipeline_mode<synchronous>, transform_indices = @transform_2, window_bounds = array<i64: 1, 8>}, {pipeline_mode = #tpu.pipeline_mode<synchronous>, transform_indices = @transform_3, window_bounds = array<i64: 3, 24, 8>}, {pipeline_mode = #tpu.pipeline_mode<synchronous>, transform_indices = @transform_4, window_bounds = array<i64: 1, 8>}, {pipeline_mode = #tpu.pipeline_mode<synchronous>, transform_indices = @transform_5, window_bounds = array<i64: 8, 32>}, {pipeline_mode = #tpu.pipeline_mode<synchronous>, transform_indices = @transform_6, window_bounds = array<i64: 1, 32>}, {pipeline_mode = #tpu.pipeline_mode<synchronous>, transform_indices = @transform_7, window_bounds = array<i64: 32, 128>}, {pipeline_mode = #tpu.pipeline_mode<synchronous>, transform_indices = @transform_8, window_bounds = array<i64: 1, 128>}, {transform_indices = @transform_9, window_bounds = array<i64: 1, 16, 128>}]} {
    %c0 = arith.constant 0 : index
    %c0_0 = arith.constant 0 : index
    %c0_1 = arith.constant 0 : index
    %c0_2 = arith.constant 0 : index
    %0 = vector.load %arg1[%c0, %c0_0, %c0_1, %c0_2] : memref<1x16x16x4xf32, #tpu.memory_space<vmem>>, vector<1x16x16x4xf32>
    %cst = arith.constant 0.000000e+00 : f32
    %1 = vector.broadcast %cst : f32 to vector<1x1x16x4xf32>
    %2 = tpu.concatenate %1, %0, %1 in 1 : vector<1x1x16x4xf32>, vector<1x16x16x4xf32>, vector<1x1x16x4xf32> -> vector<1x18x16x4xf32>
    %c1_i32 = arith.constant 1 : i32
    %3 = tpu.dynamic_rotate %2 by %c1_i32 dim 2 : vector<1x18x16x4xf32>, i32 -> vector<1x18x16x4xf32>
    %c15_i32 = arith.constant 15 : i32
    %4 = tpu.dynamic_rotate %2 by %c15_i32 dim 2 : vector<1x18x16x4xf32>, i32 -> vector<1x18x16x4xf32>
    %5 = vector.extract_strided_slice %3 {offsets = [0, 0, 0, 0], sizes = [1, 16, 16, 4], strides = [1, 1, 1, 1]} : vector<1x18x16x4xf32> to vector<1x16x16x4xf32>
    %6 = vector.extract_strided_slice %2 {offsets = [0, 0, 0, 0], sizes = [1, 16, 16, 4], strides = [1, 1, 1, 1]} : vector<1x18x16x4xf32> to vector<1x16x16x4xf32>
    %7 = vector.extract_strided_slice %4 {offsets = [0, 0, 0, 0], sizes = [1, 16, 16, 4], strides = [1, 1, 1, 1]} : vector<1x18x16x4xf32> to vector<1x16x16x4xf32>
    %8 = tpu.concatenate %5, %6, %7 in 3 : vector<1x16x16x4xf32>, vector<1x16x16x4xf32>, vector<1x16x16x4xf32> -> vector<1x16x16x12xf32>
    %9 = vector.shape_cast %8 : vector<1x16x16x12xf32> to vector<256x12xf32>
    %c0_3 = arith.constant 0 : index
    %c0_4 = arith.constant 0 : index
    %c0_5 = arith.constant 0 : index
    %10 = vector.load %arg2[%c0_3, %c0_4, %c0_5] : memref<3x12x8xf32, #tpu.memory_space<vmem>>, vector<1x12x8xf32>
    %11 = vector.shape_cast %10 : vector<1x12x8xf32> to vector<12x8xf32>
    %cst_6 = arith.constant dense<0.000000e+00> : vector<256x8xf32>
    %12 = tpu.matmul %9, %11, %cst_6 {dimension_numbers = #tpu.dot_dimension_numbers<[1], [0], [0], [1], [0, 0, 1, 1], [], []>} : vector<256x12xf32>, vector<12x8xf32>, vector<256x8xf32> -> vector<256x8xf32>
    %13 = vector.extract_strided_slice %3 {offsets = [0, 1, 0, 0], sizes = [1, 16, 16, 4], strides = [1, 1, 1, 1]} : vector<1x18x16x4xf32> to vector<1x16x16x4xf32>
    %14 = vector.extract_strided_slice %2 {offsets = [0, 1, 0, 0], sizes = [1, 16, 16, 4], strides = [1, 1, 1, 1]} : vector<1x18x16x4xf32> to vector<1x16x16x4xf32>
    %15 = vector.extract_strided_slice %4 {offsets = [0, 1, 0, 0], sizes = [1, 16, 16, 4], strides = [1, 1, 1, 1]} : vector<1x18x16x4xf32> to vector<1x16x16x4xf32>
    %16 = tpu.concatenate %13, %14, %15 in 3 : vector<1x16x16x4xf32>, vector<1x16x16x4xf32>, vector<1x16x16x4xf32> -> vector<1x16x16x12xf32>
    %17 = vector.shape_cast %16 : vector<1x16x16x12xf32> to vector<256x12xf32>
    %c1 = arith.constant 1 : index
    %c0_7 = arith.constant 0 : index
    %c0_8 = arith.constant 0 : index
    %18 = vector.load %arg2[%c1, %c0_7, %c0_8] : memref<3x12x8xf32, #tpu.memory_space<vmem>>, vector<1x12x8xf32>
    %19 = vector.shape_cast %18 : vector<1x12x8xf32> to vector<12x8xf32>
    %cst_9 = arith.constant dense<0.000000e+00> : vector<256x8xf32>
    %20 = tpu.matmul %17, %19, %cst_9 {dimension_numbers = #tpu.dot_dimension_numbers<[1], [0], [0], [1], [0, 0, 1, 1], [], []>} : vector<256x12xf32>, vector<12x8xf32>, vector<256x8xf32> -> vector<256x8xf32>
    %21 = arith.addf %12, %20 : vector<256x8xf32>
    %22 = vector.extract_strided_slice %3 {offsets = [0, 2, 0, 0], sizes = [1, 16, 16, 4], strides = [1, 1, 1, 1]} : vector<1x18x16x4xf32> to vector<1x16x16x4xf32>
    %23 = vector.extract_strided_slice %2 {offsets = [0, 2, 0, 0], sizes = [1, 16, 16, 4], strides = [1, 1, 1, 1]} : vector<1x18x16x4xf32> to vector<1x16x16x4xf32>
    %24 = vector.extract_strided_slice %4 {offsets = [0, 2, 0, 0], sizes = [1, 16, 16, 4], strides = [1, 1, 1, 1]} : vector<1x18x16x4xf32> to vector<1x16x16x4xf32>
    %25 = tpu.concatenate %22, %23, %24 in 3 : vector<1x16x16x4xf32>, vector<1x16x16x4xf32>, vector<1x16x16x4xf32> -> vector<1x16x16x12xf32>
    %26 = vector.shape_cast %25 : vector<1x16x16x12xf32> to vector<256x12xf32>
    %c2 = arith.constant 2 : index
    %c0_10 = arith.constant 0 : index
    %c0_11 = arith.constant 0 : index
    %27 = vector.load %arg2[%c2, %c0_10, %c0_11] : memref<3x12x8xf32, #tpu.memory_space<vmem>>, vector<1x12x8xf32>
    %28 = vector.shape_cast %27 : vector<1x12x8xf32> to vector<12x8xf32>
    %cst_12 = arith.constant dense<0.000000e+00> : vector<256x8xf32>
    %29 = tpu.matmul %26, %28, %cst_12 {dimension_numbers = #tpu.dot_dimension_numbers<[1], [0], [0], [1], [0, 0, 1, 1], [], []>} : vector<256x12xf32>, vector<12x8xf32>, vector<256x8xf32> -> vector<256x8xf32>
    %30 = arith.addf %21, %29 : vector<256x8xf32>
    %c0_13 = arith.constant 0 : index
    %c0_14 = arith.constant 0 : index
    %31 = vector.load %arg3[%c0_13, %c0_14] : memref<1x8xf32, #tpu.memory_space<vmem>>, vector<1x8xf32>
    %32 = vector.broadcast %31 : vector<1x8xf32> to vector<256x8xf32>
    %33 = arith.addf %30, %32 : vector<256x8xf32>
    %34 = vector.shape_cast %33 : vector<256x8xf32> to vector<1x16x16x8xf32>
    %cst_15 = arith.constant 0.000000e+00 : f32
    %35 = vector.broadcast %cst_15 : f32 to vector<1x16x16x8xf32>
    %36 = arith.maximumf %34, %35 : vector<1x16x16x8xf32>
    %cst_16 = arith.constant 0.000000e+00 : f32
    %37 = vector.broadcast %cst_16 : f32 to vector<1x1x16x8xf32>
    %38 = tpu.concatenate %37, %36, %37 in 1 : vector<1x1x16x8xf32>, vector<1x16x16x8xf32>, vector<1x1x16x8xf32> -> vector<1x18x16x8xf32>
    %c1_i32_17 = arith.constant 1 : i32
    %39 = tpu.dynamic_rotate %38 by %c1_i32_17 dim 2 : vector<1x18x16x8xf32>, i32 -> vector<1x18x16x8xf32>
    %c15_i32_18 = arith.constant 15 : i32
    %40 = tpu.dynamic_rotate %38 by %c15_i32_18 dim 2 : vector<1x18x16x8xf32>, i32 -> vector<1x18x16x8xf32>
    %41 = vector.extract_strided_slice %39 {offsets = [0, 0, 0, 0], sizes = [1, 16, 16, 8], strides = [1, 1, 1, 1]} : vector<1x18x16x8xf32> to vector<1x16x16x8xf32>
    %42 = vector.extract_strided_slice %38 {offsets = [0, 0, 0, 0], sizes = [1, 16, 16, 8], strides = [1, 1, 1, 1]} : vector<1x18x16x8xf32> to vector<1x16x16x8xf32>
    %43 = vector.extract_strided_slice %40 {offsets = [0, 0, 0, 0], sizes = [1, 16, 16, 8], strides = [1, 1, 1, 1]} : vector<1x18x16x8xf32> to vector<1x16x16x8xf32>
    %44 = tpu.concatenate %41, %42, %43 in 3 : vector<1x16x16x8xf32>, vector<1x16x16x8xf32>, vector<1x16x16x8xf32> -> vector<1x16x16x24xf32>
    %45 = vector.shape_cast %44 : vector<1x16x16x24xf32> to vector<256x24xf32>
    %c0_19 = arith.constant 0 : index
    %c0_20 = arith.constant 0 : index
    %c0_21 = arith.constant 0 : index
    %46 = vector.load %arg4[%c0_19, %c0_20, %c0_21] : memref<3x24x8xf32, #tpu.memory_space<vmem>>, vector<1x24x8xf32>
    %47 = vector.shape_cast %46 : vector<1x24x8xf32> to vector<24x8xf32>
    %cst_22 = arith.constant dense<0.000000e+00> : vector<256x8xf32>
    %48 = tpu.matmul %45, %47, %cst_22 {dimension_numbers = #tpu.dot_dimension_numbers<[1], [0], [0], [1], [0, 0, 1, 1], [], []>} : vector<256x24xf32>, vector<24x8xf32>, vector<256x8xf32> -> vector<256x8xf32>
    %49 = vector.extract_strided_slice %39 {offsets = [0, 1, 0, 0], sizes = [1, 16, 16, 8], strides = [1, 1, 1, 1]} : vector<1x18x16x8xf32> to vector<1x16x16x8xf32>
    %50 = vector.extract_strided_slice %38 {offsets = [0, 1, 0, 0], sizes = [1, 16, 16, 8], strides = [1, 1, 1, 1]} : vector<1x18x16x8xf32> to vector<1x16x16x8xf32>
    %51 = vector.extract_strided_slice %40 {offsets = [0, 1, 0, 0], sizes = [1, 16, 16, 8], strides = [1, 1, 1, 1]} : vector<1x18x16x8xf32> to vector<1x16x16x8xf32>
    %52 = tpu.concatenate %49, %50, %51 in 3 : vector<1x16x16x8xf32>, vector<1x16x16x8xf32>, vector<1x16x16x8xf32> -> vector<1x16x16x24xf32>
    %53 = vector.shape_cast %52 : vector<1x16x16x24xf32> to vector<256x24xf32>
    %c1_23 = arith.constant 1 : index
    %c0_24 = arith.constant 0 : index
    %c0_25 = arith.constant 0 : index
    %54 = vector.load %arg4[%c1_23, %c0_24, %c0_25] : memref<3x24x8xf32, #tpu.memory_space<vmem>>, vector<1x24x8xf32>
    %55 = vector.shape_cast %54 : vector<1x24x8xf32> to vector<24x8xf32>
    %cst_26 = arith.constant dense<0.000000e+00> : vector<256x8xf32>
    %56 = tpu.matmul %53, %55, %cst_26 {dimension_numbers = #tpu.dot_dimension_numbers<[1], [0], [0], [1], [0, 0, 1, 1], [], []>} : vector<256x24xf32>, vector<24x8xf32>, vector<256x8xf32> -> vector<256x8xf32>
    %57 = arith.addf %48, %56 : vector<256x8xf32>
    %58 = vector.extract_strided_slice %39 {offsets = [0, 2, 0, 0], sizes = [1, 16, 16, 8], strides = [1, 1, 1, 1]} : vector<1x18x16x8xf32> to vector<1x16x16x8xf32>
    %59 = vector.extract_strided_slice %38 {offsets = [0, 2, 0, 0], sizes = [1, 16, 16, 8], strides = [1, 1, 1, 1]} : vector<1x18x16x8xf32> to vector<1x16x16x8xf32>
    %60 = vector.extract_strided_slice %40 {offsets = [0, 2, 0, 0], sizes = [1, 16, 16, 8], strides = [1, 1, 1, 1]} : vector<1x18x16x8xf32> to vector<1x16x16x8xf32>
    %61 = tpu.concatenate %58, %59, %60 in 3 : vector<1x16x16x8xf32>, vector<1x16x16x8xf32>, vector<1x16x16x8xf32> -> vector<1x16x16x24xf32>
    %62 = vector.shape_cast %61 : vector<1x16x16x24xf32> to vector<256x24xf32>
    %c2_27 = arith.constant 2 : index
    %c0_28 = arith.constant 0 : index
    %c0_29 = arith.constant 0 : index
    %63 = vector.load %arg4[%c2_27, %c0_28, %c0_29] : memref<3x24x8xf32, #tpu.memory_space<vmem>>, vector<1x24x8xf32>
    %64 = vector.shape_cast %63 : vector<1x24x8xf32> to vector<24x8xf32>
    %cst_30 = arith.constant dense<0.000000e+00> : vector<256x8xf32>
    %65 = tpu.matmul %62, %64, %cst_30 {dimension_numbers = #tpu.dot_dimension_numbers<[1], [0], [0], [1], [0, 0, 1, 1], [], []>} : vector<256x24xf32>, vector<24x8xf32>, vector<256x8xf32> -> vector<256x8xf32>
    %66 = arith.addf %57, %65 : vector<256x8xf32>
    %c0_31 = arith.constant 0 : index
    %c0_32 = arith.constant 0 : index
    %67 = vector.load %arg5[%c0_31, %c0_32] : memref<1x8xf32, #tpu.memory_space<vmem>>, vector<1x8xf32>
    %68 = vector.broadcast %67 : vector<1x8xf32> to vector<256x8xf32>
    %69 = arith.addf %66, %68 : vector<256x8xf32>
    %70 = vector.shape_cast %69 : vector<256x8xf32> to vector<1x16x16x8xf32>
    %cst_33 = arith.constant 0.000000e+00 : f32
    %71 = vector.broadcast %cst_33 : f32 to vector<1x16x16x8xf32>
    %72 = arith.maximumf %70, %71 : vector<1x16x16x8xf32>
    %cst_34 = arith.constant dense<0.000000e+00> : vector<1x16x8xf32>
    %73 = vector.multi_reduction <add>, %72, %cst_34 [1] : vector<1x16x16x8xf32> to vector<1x16x8xf32>
    %74 = vector.shape_cast %73 : vector<1x16x8xf32> to vector<16x8xf32>
    %c0_35 = arith.constant 0 : index
    %c0_36 = arith.constant 0 : index
    %75 = vector.load %arg6[%c0_35, %c0_36] : memref<8x32xf32, #tpu.memory_space<vmem>>, vector<8x32xf32>
    %cst_37 = arith.constant dense<0.000000e+00> : vector<16x32xf32>
    %76 = tpu.matmul %74, %75, %cst_37 {dimension_numbers = #tpu.dot_dimension_numbers<[1], [0], [0], [1], [0, 0, 1, 1], [], []>} : vector<16x8xf32>, vector<8x32xf32>, vector<16x32xf32> -> vector<16x32xf32>
    %c0_38 = arith.constant 0 : index
    %c0_39 = arith.constant 0 : index
    %77 = vector.load %arg7[%c0_38, %c0_39] : memref<1x32xf32, #tpu.memory_space<vmem>>, vector<1x32xf32>
    %78 = vector.broadcast %77 : vector<1x32xf32> to vector<16x32xf32>
    %79 = arith.addf %76, %78 : vector<16x32xf32>
    %cst_40 = arith.constant 0.000000e+00 : f32
    %80 = vector.broadcast %cst_40 : f32 to vector<16x32xf32>
    %81 = arith.maximumf %79, %80 : vector<16x32xf32>
    %c0_41 = arith.constant 0 : index
    %c0_42 = arith.constant 0 : index
    %82 = vector.load %arg8[%c0_41, %c0_42] : memref<32x128xf32, #tpu.memory_space<vmem>>, vector<32x128xf32>
    %cst_43 = arith.constant dense<0.000000e+00> : vector<16x128xf32>
    %83 = tpu.matmul %81, %82, %cst_43 {dimension_numbers = #tpu.dot_dimension_numbers<[1], [0], [0], [1], [0, 0, 1, 1], [], []>} : vector<16x32xf32>, vector<32x128xf32>, vector<16x128xf32> -> vector<16x128xf32>
    %c0_44 = arith.constant 0 : index
    %c0_45 = arith.constant 0 : index
    %84 = vector.load %arg9[%c0_44, %c0_45] : memref<1x128xf32, #tpu.memory_space<vmem>>, vector<1x128xf32>
    %85 = vector.broadcast %84 : vector<1x128xf32> to vector<16x128xf32>
    %86 = arith.addf %83, %85 : vector<16x128xf32>
    %87 = arith.negf %86 : vector<16x128xf32>
    %88 = math.exp %87 : vector<16x128xf32>
    %cst_46 = arith.constant 1.000000e+00 : f32
    %89 = vector.broadcast %cst_46 : f32 to vector<16x128xf32>
    %90 = arith.addf %89, %88 : vector<16x128xf32>
    %91 = arith.divf %89, %90 : vector<16x128xf32>
    %92 = vector.shape_cast %91 : vector<16x128xf32> to vector<1x16x128xf32>
    %c0_47 = arith.constant 0 : index
    %c0_48 = arith.constant 0 : index
    %c0_49 = arith.constant 0 : index
    %93 = vector.load %arg10[%c0_47, %c0_48, %c0_49] : memref<1x16x128xf32, #tpu.memory_space<vmem>>, vector<1x16x128xf32>
    tpu.vector_store %arg10[%c0_47, %c0_48, %c0_49], %92 {strides = array<i32>} : memref<1x16x128xf32, #tpu.memory_space<vmem>>, vector<1x16x128xf32>,
    return
  }
  func.func @transform_0(%arg0: i32) -> (i32, i32, i32, i32) {
    %c0_i32 = arith.constant 0 : i32
    %c0_i32_0 = arith.constant 0 : i32
    %c0_i32_1 = arith.constant 0 : i32
    %c0_i32_2 = arith.constant 0 : i32
    return %arg0, %c0_i32, %c0_i32_0, %c0_i32_1 : i32, i32, i32, i32
  }
  func.func @transform_1(%arg0: i32) -> (i32, i32, i32) {
    %c0_i32 = arith.constant 0 : i32
    %c0_i32_0 = arith.constant 0 : i32
    %c0_i32_1 = arith.constant 0 : i32
    %c0_i32_2 = arith.constant 0 : i32
    return %c0_i32, %c0_i32_0, %c0_i32_1 : i32, i32, i32
  }
  func.func @transform_2(%arg0: i32) -> (i32, i32) {
    %c0_i32 = arith.constant 0 : i32
    %c0_i32_0 = arith.constant 0 : i32
    %c0_i32_1 = arith.constant 0 : i32
    return %c0_i32, %c0_i32_0 : i32, i32
  }
  func.func @transform_3(%arg0: i32) -> (i32, i32, i32) {
    %c0_i32 = arith.constant 0 : i32
    %c0_i32_0 = arith.constant 0 : i32
    %c0_i32_1 = arith.constant 0 : i32
    %c0_i32_2 = arith.constant 0 : i32
    return %c0_i32, %c0_i32_0, %c0_i32_1 : i32, i32, i32
  }
  func.func @transform_4(%arg0: i32) -> (i32, i32) {
    %c0_i32 = arith.constant 0 : i32
    %c0_i32_0 = arith.constant 0 : i32
    %c0_i32_1 = arith.constant 0 : i32
    return %c0_i32, %c0_i32_0 : i32, i32
  }
  func.func @transform_5(%arg0: i32) -> (i32, i32) {
    %c0_i32 = arith.constant 0 : i32
    %c0_i32_0 = arith.constant 0 : i32
    %c0_i32_1 = arith.constant 0 : i32
    return %c0_i32, %c0_i32_0 : i32, i32
  }
  func.func @transform_6(%arg0: i32) -> (i32, i32) {
    %c0_i32 = arith.constant 0 : i32
    %c0_i32_0 = arith.constant 0 : i32
    %c0_i32_1 = arith.constant 0 : i32
    return %c0_i32, %c0_i32_0 : i32, i32
  }
  func.func @transform_7(%arg0: i32) -> (i32, i32) {
    %c0_i32 = arith.constant 0 : i32
    %c0_i32_0 = arith.constant 0 : i32
    %c0_i32_1 = arith.constant 0 : i32
    return %c0_i32, %c0_i32_0 : i32, i32
  }
  func.func @transform_8(%arg0: i32) -> (i32, i32) {
    %c0_i32 = arith.constant 0 : i32
    %c0_i32_0 = arith.constant 0 : i32
    %c0_i32_1 = arith.constant 0 : i32
    return %c0_i32, %c0_i32_0 : i32, i32
  }
  func.func @transform_9(%arg0: i32) -> (i32, i32, i32) {
    %c0_i32 = arith.constant 0 : i32
    %c0_i32_0 = arith.constant 0 : i32
    %c0_i32_1 = arith.constant 0 : i32
    return %arg0, %c0_i32, %c0_i32_0 : i32, i32, i32
  }
}

</mosaic_0001>

<llo_original>
// kernel: tpu_custom_call.1
$region0: #{tpu_custom_call.1}
  #allocation0 [shape = 'u32[]', space=smem, size = 0x4, offset = 0x4, fixed_abs, tag = 'smem constant byte address 0x4 - core index']
  #allocation1 [shape = 'u32[144,128]{1,0:T(1,128)}', space=vmem, size = 0x12000, scoped, tag = 'internal scratch']
  %s0 = inlined_call_operand.vmem [shape: f32[2,16,16,4], index: 0, kind: input, shape index: {}]
  %s1 = inlined_call_operand.vmem [shape: f32[3,12,8], index: 1, kind: input, shape index: {}]
  %s2 = inlined_call_operand.vmem [shape: f32[1,8], index: 2, kind: input, shape index: {}]
  %s3 = inlined_call_operand.vmem [shape: f32[3,24,8], index: 3, kind: input, shape index: {}]
  %s4 = inlined_call_operand.vmem [shape: f32[1,8], index: 4, kind: input, shape index: {}]
  %s5 = inlined_call_operand.vmem [shape: f32[8,32], index: 5, kind: input, shape index: {}]
  %s6 = inlined_call_operand.vmem [shape: f32[1,32], index: 6, kind: input, shape index: {}]
  %s7 = inlined_call_operand.vmem [shape: f32[32,128], index: 7, kind: input, shape index: {}]
  %s8 = inlined_call_operand.vmem [shape: f32[1,128], index: 8, kind: input, shape index: {}]
  %s9 = inlined_call_operand.hbm [shape: f32[2,16,128], index: 9, kind: output, shape index: {}]
  %s10 = sld [smem:[#allocation0]]
  $region69: #{tpu_custom_call.1} parent=0
    _
  %s12 = ssub.s32 1, %s10
  %s13 = scalar_select 0, %s12, %s10
  $region1: #{tpu_custom_call.1} parent=0
    #allocation2 [shape = 'u8[16384]{0}', space=vmem, size = 0x4000, scoped, tag = 'output window, operand 0']
    #allocation3 [shape = 's32[2]{0}', space=sflag, size = 0x8, scoped, tag = 'scoped memory for tpu_custom_call.1']
    %14 = vsyncpa [#allocation3], 0
    %s15 = scalar_lea.sflag [#allocation3], 1
    %16 = vsyncpa %s15, 0
    loop: start=0, step=1, limit=4
    $region2: #{tpu_custom_call.1} parent=1 // loop_pre_header
      _
    $region3: #{tpu_custom_call.1} parent=1 // loop_header
      %s18 = sphi 0, %s22
      %p19 = scmp.ge.s32.totalorder %s18, 4
      %s28 = sphi 0, %s30
      %s31 = sphi 0, %s28
      %s32 = sphi 0, %s31
      %s48 = sphi 0, %s32
      %s52 = sphi 0, %s52
      %s54 = sphi 0, %s52
      %s55 = sphi 0, %s54
      %s69 = sphi 0, %s55
      %s73 = sphi 0, %s73
      %s75 = sphi 0, %s73
      %s76 = sphi 0, %s75
      %s90 = sphi 0, %s76
      %s94 = sphi 0, %s94
      %s96 = sphi 0, %s94
      %s97 = sphi 0, %s96
      %s111 = sphi 0, %s97
      %s115 = sphi 0, %s115
      %s117 = sphi 0, %s115
      %s118 = sphi 0, %s117
      %s132 = sphi 0, %s118
      %s136 = sphi 0, %s136
      %s138 = sphi 0, %s136
      %s139 = sphi 0, %s138
      %s153 = sphi 0, %s139
      %s157 = sphi 0, %s157
      %s159 = sphi 0, %s157
      %s160 = sphi 0, %s159
      %s174 = sphi 0, %s160
      %s178 = sphi 0, %s178
      %s180 = sphi 0, %s178
      %s181 = sphi 0, %s180
      %s195 = sphi 0, %s181
      %s199 = sphi 0, %s199
      %s201 = sphi 0, %s199
      %s202 = sphi 0, %s201
      %s216 = sphi 0, %s202
      %s222 = sphi 0, %s224
      %s225 = sphi 0, %s222
      %s226 = sphi 0, %s225
      %s242 = sphi 0, %s226
    $region4: #{tpu_custom_call.1} parent=1 // loop_header_branch
      %21 = sbr.rel (%p19) target = $region8
    $region5: #{tpu_custom_call.1} parent=1 // loop_body
      %s23 = ssub.s32 %s18, 1
      %s24 = ssub.s32 %s18, 2
      %s25 = sadd.s32 %s18, 1
      %s26 = ssub.s32 %s18, %s25
      %p27 = scmp.eq.s32.totalorder %s26, 0
      %s29 = sadd.s32 %s28, 1
      %s30 = scalar_select %p27, %s28, %s29
      %p33 = pneg %p27
      %p34 = scmp.eq.s32.totalorder %s18, 1
      %p35 = por %p33, %p34
      %p36 = scmp.ne.s32.totalorder %s28, %s31
      %p37 = scmp.eq.s32.totalorder %s18, 0
      %p38 = por %p36, %p37
      %p39 = scmp.ne.s32.totalorder %s28, %s31
      %p40 = scmp.eq.s32.totalorder %s23, 1
      %p41 = por %p39, %p40
      %p42 = scmp.ne.s32.totalorder %s31, %s32
      %p43 = scmp.eq.s32.totalorder %s23, 0
      %p44 = por %p42, %p43
      %p45 = scmp.ne.s32.totalorder %s31, %s32
      %p46 = scmp.eq.s32.totalorder %s24, 1
      %p47 = por %p45, %p46
      %p49 = scmp.ne.s32.totalorder %s32, %s48
      %p50 = scmp.eq.s32.totalorder %s24, 0
      %p51 = por %p49, %p50
      %s53 = sadd.s32 %s52, 1
      %p56 = scmp.eq.s32.totalorder %s18, 1
      %p57 = scmp.ne.s32.totalorder %s52, %s54
      %p58 = scmp.eq.s32.totalorder %s18, 0
      %p59 = por %p57, %p58
      %p60 = scmp.ne.s32.totalorder %s52, %s54
      %p61 = scmp.eq.s32.totalorder %s23, 1
      %p62 = por %p60, %p61
      %p63 = scmp.ne.s32.totalorder %s54, %s55
      %p64 = scmp.eq.s32.totalorder %s23, 0
      %p65 = por %p63, %p64
      %p66 = scmp.ne.s32.totalorder %s54, %s55
      %p67 = scmp.eq.s32.totalorder %s24, 1
      %p68 = por %p66, %p67
      %p70 = scmp.ne.s32.totalorder %s55, %s69
      %p71 = scmp.eq.s32.totalorder %s24, 0
      %p72 = por %p70, %p71
      %s74 = sadd.s32 %s73, 1
      %p77 = scmp.eq.s32.totalorder %s18, 1
      %p78 = scmp.ne.s32.totalorder %s73, %s75
      %p79 = scmp.eq.s32.totalorder %s18, 0
      %p80 = por %p78, %p79
      %p81 = scmp.ne.s32.totalorder %s73, %s75
      %p82 = scmp.eq.s32.totalorder %s23, 1
      %p83 = por %p81, %p82
      %p84 = scmp.ne.s32.totalorder %s75, %s76
      %p85 = scmp.eq.s32.totalorder %s23, 0
      %p86 = por %p84, %p85
      %p87 = scmp.ne.s32.totalorder %s75, %s76
      %p88 = scmp.eq.s32.totalorder %s24, 1
      %p89 = por %p87, %p88
      %p91 = scmp.ne.s32.totalorder %s76, %s90
      %p92 = scmp.eq.s32.totalorder %s24, 0
      %p93 = por %p91, %p92
      %s95 = sadd.s32 %s94, 1
      %p98 = scmp.eq.s32.totalorder %s18, 1
      %p99 = scmp.ne.s32.totalorder %s94, %s96
      %p100 = scmp.eq.s32.totalorder %s18, 0
      %p101 = por %p99, %p100
      %p102 = scmp.ne.s32.totalorder %s94, %s96
      %p103 = scmp.eq.s32.totalorder %s23, 1
      %p104 = por %p102, %p103
      %p105 = scmp.ne.s32.totalorder %s96, %s97
      %p106 = scmp.eq.s32.totalorder %s23, 0
      %p107 = por %p105, %p106
      %p108 = scmp.ne.s32.totalorder %s96, %s97
      %p109 = scmp.eq.s32.totalorder %s24, 1
      %p110 = por %p108, %p109
      %p112 = scmp.ne.s32.totalorder %s97, %s111
      %p113 = scmp.eq.s32.totalorder %s24, 0
      %p114 = por %p112, %p113
      %s116 = sadd.s32 %s115, 1
      %p119 = scmp.eq.s32.totalorder %s18, 1
      %p120 = scmp.ne.s32.totalorder %s115, %s117
      %p121 = scmp.eq.s32.totalorder %s18, 0
      %p122 = por %p120, %p121
      %p123 = scmp.ne.s32.totalorder %s115, %s117
      %p124 = scmp.eq.s32.totalorder %s23, 1
      %p125 = por %p123, %p124
      %p126 = scmp.ne.s32.totalorder %s117, %s118
      %p127 = scmp.eq.s32.totalorder %s23, 0
      %p128 = por %p126, %p127
      %p129 = scmp.ne.s32.totalorder %s117, %s118
      %p130 = scmp.eq.s32.totalorder %s24, 1
      %p131 = por %p129, %p130
      %p133 = scmp.ne.s32.totalorder %s118, %s132
      %p134 = scmp.eq.s32.totalorder %s24, 0
      %p135 = por %p133, %p134
      %s137 = sadd.s32 %s136, 1
      %p140 = scmp.eq.s32.totalorder %s18, 1
      %p141 = scmp.ne.s32.totalorder %s136, %s138
      %p142 = scmp.eq.s32.totalorder %s18, 0
      %p143 = por %p141, %p142
      %p144 = scmp.ne.s32.totalorder %s136, %s138
      %p145 = scmp.eq.s32.totalorder %s23, 1
      %p146 = por %p144, %p145
      %p147 = scmp.ne.s32.totalorder %s138, %s139
      %p148 = scmp.eq.s32.totalorder %s23, 0
      %p149 = por %p147, %p148
      %p150 = scmp.ne.s32.totalorder %s138, %s139
      %p151 = scmp.eq.s32.totalorder %s24, 1
      %p152 = por %p150, %p151
      %p154 = scmp.ne.s32.totalorder %s139, %s153
      %p155 = scmp.eq.s32.totalorder %s24, 0
      %p156 = por %p154, %p155
      %s158 = sadd.s32 %s157, 1
      %p161 = scmp.eq.s32.totalorder %s18, 1
      %p162 = scmp.ne.s32.totalorder %s157, %s159
      %p163 = scmp.eq.s32.totalorder %s18, 0
      %p164 = por %p162, %p163
      %p165 = scmp.ne.s32.totalorder %s157, %s159
      %p166 = scmp.eq.s32.totalorder %s23, 1
      %p167 = por %p165, %p166
      %p168 = scmp.ne.s32.totalorder %s159, %s160
      %p169 = scmp.eq.s32.totalorder %s23, 0
      %p170 = por %p168, %p169
      %p171 = scmp.ne.s32.totalorder %s159, %s160
      %p172 = scmp.eq.s32.totalorder %s24, 1
      %p173 = por %p171, %p172
      %p175 = scmp.ne.s32.totalorder %s160, %s174
      %p176 = scmp.eq.s32.totalorder %s24, 0
      %p177 = por %p175, %p176
      %s179 = sadd.s32 %s178, 1
      %p182 = scmp.eq.s32.totalorder %s18, 1
      %p183 = scmp.ne.s32.totalorder %s178, %s180
      %p184 = scmp.eq.s32.totalorder %s18, 0
      %p185 = por %p183, %p184
      %p186 = scmp.ne.s32.totalorder %s178, %s180
      %p187 = scmp.eq.s32.totalorder %s23, 1
      %p188 = por %p186, %p187
      %p189 = scmp.ne.s32.totalorder %s180, %s181
      %p190 = scmp.eq.s32.totalorder %s23, 0
      %p191 = por %p189, %p190
      %p192 = scmp.ne.s32.totalorder %s180, %s181
      %p193 = scmp.eq.s32.totalorder %s24, 1
      %p194 = por %p192, %p193
      %p196 = scmp.ne.s32.totalorder %s181, %s195
      %p197 = scmp.eq.s32.totalorder %s24, 0
      %p198 = por %p196, %p197
      %s200 = sadd.s32 %s199, 1
      %p203 = scmp.eq.s32.totalorder %s18, 1
      %p204 = scmp.ne.s32.totalorder %s199, %s201
      %p205 = scmp.eq.s32.totalorder %s18, 0
      %p206 = por %p204, %p205
      %p207 = scmp.ne.s32.totalorder %s199, %s201
      %p208 = scmp.eq.s32.totalorder %s23, 1
      %p209 = por %p207, %p208
      %p210 = scmp.ne.s32.totalorder %s201, %s202
      %p211 = scmp.eq.s32.totalorder %s23, 0
      %p212 = por %p210, %p211
      %p213 = scmp.ne.s32.totalorder %s201, %s202
      %p214 = scmp.eq.s32.totalorder %s24, 1
      %p215 = por %p213, %p214
      %p217 = scmp.ne.s32.totalorder %s202, %s216
      %p218 = scmp.eq.s32.totalorder %s24, 0
      %p219 = por %p217, %p218
      %s220 = ssub.s32 %s18, %s25
      %p221 = scmp.eq.s32.totalorder %s220, 0
      %s223 = sadd.s32 %s222, 1
      %s224 = scalar_select %p221, %s222, %s223
      %p227 = pneg %p221
      %p228 = scmp.eq.s32.totalorder %s18, 1
      %p229 = por %p227, %p228
      %p230 = scmp.ne.s32.totalorder %s222, %s225
      %p231 = scmp.eq.s32.totalorder %s18, 0
      %p232 = por %p230, %p231
      %p233 = scmp.ne.s32.totalorder %s222, %s225
      %p234 = scmp.eq.s32.totalorder %s23, 1
      %p235 = por %p233, %p234
      %p236 = scmp.ne.s32.totalorder %s225, %s226
      %p237 = scmp.eq.s32.totalorder %s23, 0
      %p238 = por %p236, %p237
      %p239 = scmp.ne.s32.totalorder %s225, %s226
      %p240 = scmp.eq.s32.totalorder %s24, 1
      %p241 = por %p239, %p240
      %p243 = scmp.ne.s32.totalorder %s226, %s242
      %p244 = scmp.eq.s32.totalorder %s24, 0
      %p245 = por %p243, %p244
      %p246 = scmp.le.s32.totalorder 1, %s18
      %p247 = scmp.lt.s32.totalorder %s18, 3
      %p248 = pnand %p246, %p247
      %p249 = pneg %p248
      // Predicated region
      $region9: #{tpu_custom_call.1} parent=5 // pred_check
        _
      $region10: #{tpu_custom_call.1} parent=5 // pred_check_branch
        %251 = sbr.rel (%p248) target = $region12
      $region11: #{tpu_custom_call.1} parent=5 // pred_region
        %s252 = ssub.s32 %s18, 1
        // Predicated region
        $region13: #{tpu_custom_call.1} parent=11 // pred_check
          %p253 = pneg %p65
        $region14: #{tpu_custom_call.1} parent=11 // pred_check_branch
          %255 = sbr.rel (%p253) target = $region16
        $region15: #{tpu_custom_call.1} parent=11 // pred_region
          _
        $region16: #{tpu_custom_call.1} parent=11 // pred_fallthru
          _
        // Predicated region
        $region17: #{tpu_custom_call.1} parent=11 // pred_check
          %p256 = pneg %p86
        $region18: #{tpu_custom_call.1} parent=11 // pred_check_branch
          %258 = sbr.rel (%p256) target = $region20
        $region19: #{tpu_custom_call.1} parent=11 // pred_region
          _
        $region20: #{tpu_custom_call.1} parent=11 // pred_fallthru
          _
        // Predicated region
        $region21: #{tpu_custom_call.1} parent=11 // pred_check
          %p259 = pneg %p107
        $region22: #{tpu_custom_call.1} parent=11 // pred_check_branch
          %261 = sbr.rel (%p259) target = $region24
        $region23: #{tpu_custom_call.1} parent=11 // pred_region
          _
        $region24: #{tpu_custom_call.1} parent=11 // pred_fallthru
          _
        // Predicated region
        $region25: #{tpu_custom_call.1} parent=11 // pred_check
          %p262 = pneg %p128
        $region26: #{tpu_custom_call.1} parent=11 // pred_check_branch
          %264 = sbr.rel (%p262) target = $region28
        $region27: #{tpu_custom_call.1} parent=11 // pred_region
          _
        $region28: #{tpu_custom_call.1} parent=11 // pred_fallthru
          _
        // Predicated region
        $region29: #{tpu_custom_call.1} parent=11 // pred_check
          %p265 = pneg %p149
        $region30: #{tpu_custom_call.1} parent=11 // pred_check_branch
          %267 = sbr.rel (%p265) target = $region32
        $region31: #{tpu_custom_call.1} parent=11 // pred_region
          _
        $region32: #{tpu_custom_call.1} parent=11 // pred_fallthru
          _
        // Predicated region
        $region33: #{tpu_custom_call.1} parent=11 // pred_check
          %p268 = pneg %p170
        $region34: #{tpu_custom_call.1} parent=11 // pred_check_branch
          %270 = sbr.rel (%p268) target = $region36
        $region35: #{tpu_custom_call.1} parent=11 // pred_region
          _
        $region36: #{tpu_custom_call.1} parent=11 // pred_fallthru
          _
        // Predicated region
        $region37: #{tpu_custom_call.1} parent=11 // pred_check
          %p271 = pneg %p191
        $region38: #{tpu_custom_call.1} parent=11 // pred_check_branch
          %273 = sbr.rel (%p271) target = $region40
        $region39: #{tpu_custom_call.1} parent=11 // pred_region
          _
        $region40: #{tpu_custom_call.1} parent=11 // pred_fallthru
          _
        // Predicated region
        $region41: #{tpu_custom_call.1} parent=11 // pred_check
          %p274 = pneg %p212
        $region42: #{tpu_custom_call.1} parent=11 // pred_check_branch
          %276 = sbr.rel (%p274) target = $region44
        $region43: #{tpu_custom_call.1} parent=11 // pred_region
          _
        $region44: #{tpu_custom_call.1} parent=11 // pred_fallthru
          _
      $region12: #{tpu_custom_call.1} parent=5 // pred_fallthru
        _
      %p277 = scmp.lt.s32.totalorder %s18, 2
      // Predicated region
      $region45: #{tpu_custom_call.1} parent=5 // pred_check
        %p278 = pneg %p277
      $region46: #{tpu_custom_call.1} parent=5 // pred_check_branch
        %280 = sbr.rel (%p278) target = $region48
      $region47: #{tpu_custom_call.1} parent=5 // pred_region
        // Predicated region
        $region49: #{tpu_custom_call.1} parent=47 // pred_check
          %p281 = pneg %p38
        $region50: #{tpu_custom_call.1} parent=47 // pred_check_branch
          %283 = sbr.rel (%p281) target = $region52
        $region51: #{tpu_custom_call.1} parent=47 // pred_region
          %p284 = scmp.lt.s32.totalorder %s18, 1
          %s285 = scalar_select %p284, %s18, 1
          %s286 = smul.addr %s285, 32
          %s287 = smul.addr %s286, 8
          %s288 = scalar_lea.vmem %s0, %s287
        $region52: #{tpu_custom_call.1} parent=47 // pred_fallthru
          _
      $region48: #{tpu_custom_call.1} parent=5 // pred_fallthru
        _
      %p289 = scmp.le.s32.totalorder 1, %s18
      %p290 = scmp.lt.s32.totalorder %s18, 3
      %p291 = pnand %p289, %p290
      %p292 = pneg %p291
      // Predicated region
      $region53: #{tpu_custom_call.1} parent=5 // pred_check
        _
      $region54: #{tpu_custom_call.1} parent=5 // pred_check_branch
        %294 = sbr.rel (%p291) target = $region56
      $region55: #{tpu_custom_call.1} parent=5 // pred_region
        %s295 = ssub.s32 %s18, 1
        %p296 = scmp.lt.s32.totalorder %s23, 1
        %s297 = scalar_select %p296, %s23, 1
        %s298 = smul.addr %s297, 32
        %s299 = smul.addr %s298, 8
        %s300 = scalar_lea.vmem %s0, %s299
        %p301 = pneg %p44
        %p302 = pneg %p41
        %p303 = pneg %p65
        %p304 = pneg %p62
        %p305 = pneg %p86
        %p306 = pneg %p83
        %p307 = pneg %p107
        %p308 = pneg %p104
        %p309 = pneg %p128
        %p310 = pneg %p125
        %p311 = pneg %p149
        %p312 = pneg %p146
        %p313 = pneg %p170
        %p314 = pneg %p167
        %p315 = pneg %p191
        %p316 = pneg %p188
        %p317 = pneg %p212
        %p318 = pneg %p209
        %p319 = pneg %p238
        %p320 = pneg %p235
        %s321 = sand.u32 %s225, 1
        %s322 = scalar_lea.sflag [#allocation3], %s321
        %s323 = sand.u32 %s225, 1
        %s324 = smul.addr %s323, 16
        %s325 = scalar_lea.vmem [#allocation2], %s324
        %p326 = scmp.lt.s32.totalorder %s23, 1
        %s327 = scalar_select %p326, %s23, 1
        %s328 = smul.addr %s327, 32
        %s329 = smul.addr %s328, 8
        %s330 = scalar_lea.vmem %s0, %s329
        %v331 = vld [vmem:[%s330] sm:$0xff]
        %v332 = vld [vmem:[%s330 + $0x8] sm:$0xff]
        %v333 = vld [vmem:[%s330 + $0x10] sm:$0xff]
        %v334 = vld [vmem:[%s330 + $0x18] sm:$0xff]
        %v335 = vld [vmem:[%s330 + $0x20] sm:$0xff]
        %v336 = vld [vmem:[%s330 + $0x28] sm:$0xff]
        %v337 = vld [vmem:[%s330 + $0x30] sm:$0xff]
        %v338 = vld [vmem:[%s330 + $0x38] sm:$0xff]
        %v339 = vld [vmem:[%s330 + $0x40] sm:$0xff]
        %v340 = vld [vmem:[%s330 + $0x48] sm:$0xff]
        %v341 = vld [vmem:[%s330 + $0x50] sm:$0xff]
        %v342 = vld [vmem:[%s330 + $0x58] sm:$0xff]
        %v343 = vld [vmem:[%s330 + $0x60] sm:$0xff]
        %v344 = vld [vmem:[%s330 + $0x68] sm:$0xff]
        %v345 = vld [vmem:[%s330 + $0x70] sm:$0xff]
        %v346 = vld [vmem:[%s330 + $0x78] sm:$0xff]
        %v347 = vld [vmem:[%s330 + $0x80] sm:$0xff]
        %v348 = vld [vmem:[%s330 + $0x88] sm:$0xff]
        %v349 = vld [vmem:[%s330 + $0x90] sm:$0xff]
        %v350 = vld [vmem:[%s330 + $0x98] sm:$0xff]
        %v351 = vld [vmem:[%s330 + $0xa0] sm:$0xff]
        %v352 = vld [vmem:[%s330 + $0xa8] sm:$0xff]
        %v353 = vld [vmem:[%s330 + $0xb0] sm:$0xff]
        %v354 = vld [vmem:[%s330 + $0xb8] sm:$0xff]
        %v355 = vld [vmem:[%s330 + $0xc0] sm:$0xff]
        %v356 = vld [vmem:[%s330 + $0xc8] sm:$0xff]
        %v357 = vld [vmem:[%s330 + $0xd0] sm:$0xff]
        %v358 = vld [vmem:[%s330 + $0xd8] sm:$0xff]
        %v359 = vld [vmem:[%s330 + $0xe0] sm:$0xff]
        %v360 = vld [vmem:[%s330 + $0xe8] sm:$0xff]
        %v361 = vld [vmem:[%s330 + $0xf0] sm:$0xff]
        %v362 = vld [vmem:[%s330 + $0xf8] sm:$0xff]
        %v363 = vrot.slane %v331, 7
        %v364 = vrot.slane %v333, 7
        %v365 = vrot.slane %v335, 7
        %v366 = vrot.slane %v337, 7
        %v367 = vrot.slane %v339, 7
        %v368 = vrot.slane %v341, 7
        %v369 = vrot.slane %v343, 7
        %v370 = vrot.slane %v345, 7
        %v371 = vrot.slane %v347, 7
        %v372 = vrot.slane %v349, 7
        %v373 = vrot.slane %v351, 7
        %v374 = vrot.slane %v353, 7
        %v375 = vrot.slane %v355, 7
        %v376 = vrot.slane %v357, 7
        %v377 = vrot.slane %v359, 7
        %v378 = vrot.slane %v361, 7
        %v379 = vrot.slane %v332, 7
        %v380 = vrot.slane %v334, 7
        %v381 = vrot.slane %v336, 7
        %v382 = vrot.slane %v338, 7
        %v383 = vrot.slane %v340, 7
        %v384 = vrot.slane %v342, 7
        %v385 = vrot.slane %v344, 7
        %v386 = vrot.slane %v346, 7
        %v387 = vrot.slane %v348, 7
        %v388 = vrot.slane %v350, 7
        %v389 = vrot.slane %v352, 7
        %v390 = vrot.slane %v354, 7
        %v391 = vrot.slane %v356, 7
        %v392 = vrot.slane %v358, 7
        %v393 = vrot.slane %v360, 7
        %v394 = vrot.slane %v362, 7
        %v395 = vlaneseq
        %v396 = vshrl.u32 %v395, 7
        %vm397 = vcmp.lt.s32.totalorder %v396, 1
        %v398 = vsel %vm397, %v363, %v379
        %v399 = vsel %vm397, %v364, %v380
        %v400 = vsel %vm397, %v365, %v381
        %v401 = vsel %vm397, %v366, %v382
        %v402 = vsel %vm397, %v367, %v383
        %v403 = vsel %vm397, %v368, %v384
        %v404 = vsel %vm397, %v369, %v385
        %v405 = vsel %vm397, %v370, %v386
        %v406 = vsel %vm397, %v371, %v387
        %v407 = vsel %vm397, %v372, %v388
        %v408 = vsel %vm397, %v373, %v389
        %v409 = vsel %vm397, %v374, %v390
        %v410 = vsel %vm397, %v375, %v391
        %v411 = vsel %vm397, %v376, %v392
        %v412 = vsel %vm397, %v377, %v393
        %v413 = vsel %vm397, %v378, %v394
        %v414 = vsel %vm397, %v379, %v363
        %v415 = vsel %vm397, %v380, %v364
        %v416 = vsel %vm397, %v381, %v365
        %v417 = vsel %vm397, %v382, %v366
        %v418 = vsel %vm397, %v383, %v367
        %v419 = vsel %vm397, %v384, %v368
        %v420 = vsel %vm397, %v385, %v369
        %v421 = vsel %vm397, %v386, %v370
        %v422 = vsel %vm397, %v387, %v371
        %v423 = vsel %vm397, %v388, %v372
        %v424 = vsel %vm397, %v389, %v373
        %v425 = vsel %vm397, %v390, %v374
        %v426 = vsel %vm397, %v391, %v375
        %v427 = vsel %vm397, %v392, %v376
        %v428 = vsel %vm397, %v393, %v377
        %v429 = vsel %vm397, %v394, %v378
        %v430 = vrot.slane %v331, 1
        %v431 = vrot.slane %v333, 1
        %v432 = vrot.slane %v335, 1
        %v433 = vrot.slane %v337, 1
        %v434 = vrot.slane %v339, 1
        %v435 = vrot.slane %v341, 1
        %v436 = vrot.slane %v343, 1
        %v437 = vrot.slane %v345, 1
        %v438 = vrot.slane %v347, 1
        %v439 = vrot.slane %v349, 1
        %v440 = vrot.slane %v351, 1
        %v441 = vrot.slane %v353, 1
        %v442 = vrot.slane %v355, 1
        %v443 = vrot.slane %v357, 1
        %v444 = vrot.slane %v359, 1
        %v445 = vrot.slane %v361, 1
        %v446 = vrot.slane %v332, 1
        %v447 = vrot.slane %v334, 1
        %v448 = vrot.slane %v336, 1
        %v449 = vrot.slane %v338, 1
        %v450 = vrot.slane %v340, 1
        %v451 = vrot.slane %v342, 1
        %v452 = vrot.slane %v344, 1
        %v453 = vrot.slane %v346, 1
        %v454 = vrot.slane %v348, 1
        %v455 = vrot.slane %v350, 1
        %v456 = vrot.slane %v352, 1
        %v457 = vrot.slane %v354, 1
        %v458 = vrot.slane %v356, 1
        %v459 = vrot.slane %v358, 1
        %v460 = vrot.slane %v360, 1
        %v461 = vrot.slane %v362, 1
        %vm462 = vcmp.lt.s32.totalorder %v396, 7
        %v463 = vsel %vm462, %v430, %v446
        %v464 = vsel %vm462, %v431, %v447
        %v465 = vsel %vm462, %v432, %v448
        %v466 = vsel %vm462, %v433, %v449
        %v467 = vsel %vm462, %v434, %v450
        %v468 = vsel %vm462, %v435, %v451
        %v469 = vsel %vm462, %v436, %v452
        %v470 = vsel %vm462, %v437, %v453
        %v471 = vsel %vm462, %v438, %v454
        %v472 = vsel %vm462, %v439, %v455
        %v473 = vsel %vm462, %v440, %v456
        %v474 = vsel %vm462, %v441, %v457
        %v475 = vsel %vm462, %v442, %v458
        %v476 = vsel %vm462, %v443, %v459
        %v477 = vsel %vm462, %v444, %v460
        %v478 = vsel %vm462, %v445, %v461
        %v479 = vsel %vm462, %v446, %v430
        %v480 = vsel %vm462, %v447, %v431
        %v481 = vsel %vm462, %v448, %v432
        %v482 = vsel %vm462, %v449, %v433
        %v483 = vsel %vm462, %v450, %v434
        %v484 = vsel %vm462, %v451, %v435
        %v485 = vsel %vm462, %v452, %v436
        %v486 = vsel %vm462, %v453, %v437
        %v487 = vsel %vm462, %v454, %v438
        %v488 = vsel %vm462, %v455, %v439
        %v489 = vsel %vm462, %v456, %v440
        %v490 = vsel %vm462, %v457, %v441
        %v491 = vsel %vm462, %v458, %v442
        %v492 = vsel %vm462, %v459, %v443
        %v493 = vsel %vm462, %v460, %v444
        %v494 = vsel %vm462, %v461, %v445
        %526 = vrot.lane.b32.xlu0 0.0, 4
        %v527 = vpop.permute.xlu0 %526
        %528 = vrot.lane.b32.xlu0 %v331, 4
        %v529 = vpop.permute.xlu0 %528
        %530 = vrot.lane.b32.xlu0 %v332, 4
        %v531 = vpop.permute.xlu0 %530
        %532 = vrot.lane.b32.xlu0 %v333, 4
        %v533 = vpop.permute.xlu0 %532
        %534 = vrot.lane.b32.xlu0 %v334, 4
        %v535 = vpop.permute.xlu0 %534
        %536 = vrot.lane.b32.xlu0 %v335, 4
        %v537 = vpop.permute.xlu0 %536
        %538 = vrot.lane.b32.xlu0 %v336, 4
        %v539 = vpop.permute.xlu0 %538
        %540 = vrot.lane.b32.xlu0 %v337, 4
        %v541 = vpop.permute.xlu0 %540
        %542 = vrot.lane.b32.xlu0 %v338, 4
        %v543 = vpop.permute.xlu0 %542
        %544 = vrot.lane.b32.xlu0 %v339, 4
        %v545 = vpop.permute.xlu0 %544
        %546 = vrot.lane.b32.xlu0 %v340, 4
        %v547 = vpop.permute.xlu0 %546
        %548 = vrot.lane.b32.xlu0 %v341, 4
        %v549 = vpop.permute.xlu0 %548
        %550 = vrot.lane.b32.xlu0 %v342, 4
        %v551 = vpop.permute.xlu0 %550
        %552 = vrot.lane.b32.xlu0 %v343, 4
        %v553 = vpop.permute.xlu0 %552
        %554 = vrot.lane.b32.xlu0 %v344, 4
        %v555 = vpop.permute.xlu0 %554
        %556 = vrot.lane.b32.xlu0 %v345, 4
        %v557 = vpop.permute.xlu0 %556
        %558 = vrot.lane.b32.xlu0 %v346, 4
        %v559 = vpop.permute.xlu0 %558
        %560 = vrot.lane.b32.xlu0 %v347, 4
        %v561 = vpop.permute.xlu0 %560
        %562 = vrot.lane.b32.xlu0 %v348, 4
        %v563 = vpop.permute.xlu0 %562
        %564 = vrot.lane.b32.xlu0 %v349, 4
        %v565 = vpop.permute.xlu0 %564
        %566 = vrot.lane.b32.xlu0 %v350, 4
        %v567 = vpop.permute.xlu0 %566
        %568 = vrot.lane.b32.xlu0 %v351, 4
        %v569 = vpop.permute.xlu0 %568
        %570 = vrot.lane.b32.xlu0 %v352, 4
        %v571 = vpop.permute.xlu0 %570
        %572 = vrot.lane.b32.xlu0 %v353, 4
        %v573 = vpop.permute.xlu0 %572
        %574 = vrot.lane.b32.xlu0 %v354, 4
        %v575 = vpop.permute.xlu0 %574
        %576 = vrot.lane.b32.xlu0 %v355, 4
        %v577 = vpop.permute.xlu0 %576
        %578 = vrot.lane.b32.xlu0 %v356, 4
        %v579 = vpop.permute.xlu0 %578
        %580 = vrot.lane.b32.xlu0 %v357, 4
        %v581 = vpop.permute.xlu0 %580
        %582 = vrot.lane.b32.xlu0 %v358, 4
        %v583 = vpop.permute.xlu0 %582
        %584 = vrot.lane.b32.xlu0 %v359, 4
        %v585 = vpop.permute.xlu0 %584
        %586 = vrot.lane.b32.xlu0 %v360, 4
        %v587 = vpop.permute.xlu0 %586
        %650 = vrot.lane.b32.xlu0 0.0, 8
        %v651 = vpop.permute.xlu0 %650
        %652 = vrot.lane.b32.xlu0 %v463, 8
        %v653 = vpop.permute.xlu0 %652
        %654 = vrot.lane.b32.xlu0 %v479, 8
        %v655 = vpop.permute.xlu0 %654
        %656 = vrot.lane.b32.xlu0 %v464, 8
        %v657 = vpop.permute.xlu0 %656
        %658 = vrot.lane.b32.xlu0 %v480, 8
        %v659 = vpop.permute.xlu0 %658
        %660 = vrot.lane.b32.xlu0 %v465, 8
        %v661 = vpop.permute.xlu0 %660
        %662 = vrot.lane.b32.xlu0 %v481, 8
        %v663 = vpop.permute.xlu0 %662
        %664 = vrot.lane.b32.xlu0 %v466, 8
        %v665 = vpop.permute.xlu0 %664
        %666 = vrot.lane.b32.xlu0 %v482, 8
        %v667 = vpop.permute.xlu0 %666
        %668 = vrot.lane.b32.xlu0 %v467, 8
        %v669 = vpop.permute.xlu0 %668
        %670 = vrot.lane.b32.xlu0 %v483, 8
        %v671 = vpop.permute.xlu0 %670
        %672 = vrot.lane.b32.xlu0 %v468, 8
        %v673 = vpop.permute.xlu0 %672
        %674 = vrot.lane.b32.xlu0 %v484, 8
        %v675 = vpop.permute.xlu0 %674
        %676 = vrot.lane.b32.xlu0 %v469, 8
        %v677 = vpop.permute.xlu0 %676
        %678 = vrot.lane.b32.xlu0 %v485, 8
        %v679 = vpop.permute.xlu0 %678
        %680 = vrot.lane.b32.xlu0 %v470, 8
        %v681 = vpop.permute.xlu0 %680
        %682 = vrot.lane.b32.xlu0 %v486, 8
        %v683 = vpop.permute.xlu0 %682
        %684 = vrot.lane.b32.xlu0 %v471, 8
        %v685 = vpop.permute.xlu0 %684
        %686 = vrot.lane.b32.xlu0 %v487, 8
        %v687 = vpop.permute.xlu0 %686
        %688 = vrot.lane.b32.xlu0 %v472, 8
        %v689 = vpop.permute.xlu0 %688
        %690 = vrot.lane.b32.xlu0 %v488, 8
        %v691 = vpop.permute.xlu0 %690
        %692 = vrot.lane.b32.xlu0 %v473, 8
        %v693 = vpop.permute.xlu0 %692
        %694 = vrot.lane.b32.xlu0 %v489, 8
        %v695 = vpop.permute.xlu0 %694
        %696 = vrot.lane.b32.xlu0 %v474, 8
        %v697 = vpop.permute.xlu0 %696
        %698 = vrot.lane.b32.xlu0 %v490, 8
        %v699 = vpop.permute.xlu0 %698
        %700 = vrot.lane.b32.xlu0 %v475, 8
        %v701 = vpop.permute.xlu0 %700
        %702 = vrot.lane.b32.xlu0 %v491, 8
        %v703 = vpop.permute.xlu0 %702
        %704 = vrot.lane.b32.xlu0 %v476, 8
        %v705 = vpop.permute.xlu0 %704
        %706 = vrot.lane.b32.xlu0 %v492, 8
        %v707 = vpop.permute.xlu0 %706
        %708 = vrot.lane.b32.xlu0 %v477, 8
        %v709 = vpop.permute.xlu0 %708
        %710 = vrot.lane.b32.xlu0 %v493, 8
        %v711 = vpop.permute.xlu0 %710
        %vm743 = vcmask 31744
        %v744 = vsel %vm743, 0.0, %v527
        %v745 = vsel %vm743, %v414, %v529
        %v746 = vsel %vm743, %v398, %v531
        %v747 = vsel %vm743, %v415, %v533
        %v748 = vsel %vm743, %v399, %v535
        %v749 = vsel %vm743, %v416, %v537
        %v750 = vsel %vm743, %v400, %v539
        %v751 = vsel %vm743, %v417, %v541
        %v752 = vsel %vm743, %v401, %v543
        %v753 = vsel %vm743, %v418, %v545
        %v754 = vsel %vm743, %v402, %v547
        %v755 = vsel %vm743, %v419, %v549
        %v756 = vsel %vm743, %v403, %v551
        %v757 = vsel %vm743, %v420, %v553
        %v758 = vsel %vm743, %v404, %v555
        %v759 = vsel %vm743, %v421, %v557
        %v760 = vsel %vm743, %v405, %v559
        %v761 = vsel %vm743, %v422, %v561
        %v762 = vsel %vm743, %v406, %v563
        %v763 = vsel %vm743, %v423, %v565
        %v764 = vsel %vm743, %v407, %v567
        %v765 = vsel %vm743, %v424, %v569
        %v766 = vsel %vm743, %v408, %v571
        %v767 = vsel %vm743, %v425, %v573
        %v768 = vsel %vm743, %v409, %v575
        %v769 = vsel %vm743, %v426, %v577
        %v770 = vsel %vm743, %v410, %v579
        %v771 = vsel %vm743, %v427, %v581
        %v772 = vsel %vm743, %v411, %v583
        %v773 = vsel %vm743, %v428, %v585
        %v774 = vsel %vm743, %v412, %v587
        %vm775 = vcmask 64512
        %v776 = vsel %vm775, %v744, %v651
        %v777 = vsel %vm775, %v745, %v653
        %v778 = vsel %vm775, %v746, %v655
        %v779 = vsel %vm775, %v747, %v657
        %v780 = vsel %vm775, %v748, %v659
        %v781 = vsel %vm775, %v749, %v661
        %v782 = vsel %vm775, %v750, %v663
        %v783 = vsel %vm775, %v751, %v665
        %v784 = vsel %vm775, %v752, %v667
        %v785 = vsel %vm775, %v753, %v669
        %v786 = vsel %vm775, %v754, %v671
        %v787 = vsel %vm775, %v755, %v673
        %v788 = vsel %vm775, %v756, %v675
        %v789 = vsel %vm775, %v757, %v677
        %v790 = vsel %vm775, %v758, %v679
        %v791 = vsel %vm775, %v759, %v681
        %v792 = vsel %vm775, %v760, %v683
        %v793 = vsel %vm775, %v761, %v685
        %v794 = vsel %vm775, %v762, %v687
        %v795 = vsel %vm775, %v763, %v689
        %v796 = vsel %vm775, %v764, %v691
        %v797 = vsel %vm775, %v765, %v693
        %v798 = vsel %vm775, %v766, %v695
        %v799 = vsel %vm775, %v767, %v697
        %v800 = vsel %vm775, %v768, %v699
        %v801 = vsel %vm775, %v769, %v701
        %v802 = vsel %vm775, %v770, %v703
        %v803 = vsel %vm775, %v771, %v705
        %v804 = vsel %vm775, %v772, %v707
        %v805 = vsel %vm775, %v773, %v709
        %v806 = vsel %vm775, %v774, %v711
        %v807 = vld [vmem:[%s1] sm:$0xff]
        %v808 = vld [vmem:[%s1 + $0x8] sm:$0xf]
        %811 = vrot.lane.b32.xlu0 %v361, 4
        %v812 = vpop.permute.xlu0 %811
        %813 = vrot.lane.b32.xlu0 %v362, 4
        %v814 = vpop.permute.xlu0 %813
        %819 = vrot.lane.b32.xlu0 %v478, 8
        %v820 = vpop.permute.xlu0 %819
        %821 = vrot.lane.b32.xlu0 %v494, 8
        %v822 = vpop.permute.xlu0 %821
        %v825 = vsel %vm743, %v429, %v812
        %v826 = vsel %vm743, %v413, %v814
        %v827 = vsel %vm775, %v825, %v820
        %v828 = vsel %vm775, %v826, %v822
        %s829 = scalar_lea.vmem %s1, 16
        %v830 = vld [vmem:[%s829] sm:$0xff]
        %v831 = vld [vmem:[%s829 + $0x8] sm:$0xf]
        %vm832 = vcmask 97280
        %v834 = vsel %vm832, %v777, 0
        %v837 = vsel %vm832, %v778, 0
        %v840 = vsel %vm832, %v779, 0
        %v843 = vsel %vm832, %v780, 0
        %v846 = vsel %vm832, %v781, 0
        %v849 = vsel %vm832, %v782, 0
        %v852 = vsel %vm832, %v783, 0
        %v855 = vsel %vm832, %v784, 0
        %v858 = vsel %vm832, %v785, 0
        %v861 = vsel %vm832, %v786, 0
        %v864 = vsel %vm832, %v787, 0
        %v867 = vsel %vm832, %v788, 0
        %v870 = vsel %vm832, %v789, 0
        %v873 = vsel %vm832, %v790, 0
        %v876 = vsel %vm832, %v791, 0
        %v879 = vsel %vm832, %v792, 0
        %v882 = vsel %vm832, %v793, 0
        %v885 = vsel %vm832, %v794, 0
        %v888 = vsel %vm832, %v795, 0
        %v891 = vsel %vm832, %v796, 0
        %v894 = vsel %vm832, %v797, 0
        %v897 = vsel %vm832, %v798, 0
        %v900 = vsel %vm832, %v799, 0
        %v903 = vsel %vm832, %v800, 0
        %v906 = vsel %vm832, %v801, 0
        %v909 = vsel %vm832, %v802, 0
        %v912 = vsel %vm832, %v803, 0
        %v915 = vsel %vm832, %v804, 0
        %v918 = vsel %vm832, %v805, 0
        %v921 = vsel %vm832, %v806, 0
        %v924 = vsel %vm832, %v827, 0
        %v927 = vsel %vm832, %v828, 0
        %vm929 = vcmask 1043456
        %v931 = vsel %vm929, %v831, 0
        %933 = vmatprep.subr.mxu0 0.0
        %934 = vmatpush1.msra.mxu0 %v830
        %935 = vmatprep.subr.mxu0 0.0
        %936 = vmatpush1.msra.mxu0 %v931
        %937 = vmatprep.subr.mxu0 0.0
        %938 = vmatpush1.msra.mxu0 0.0
        %939 = vmatprep.subr.mxu0 0.0
        %940 = vmatpush1.msra.mxu0 0.0
        %941 = vmatprep.subr.mxu0 0.0
        %942 = vmatpush1.msra.mxu0 0.0
        %943 = vmatprep.subr.mxu0 0.0
        %944 = vmatpush1.msra.mxu0 0.0
        %945 = vmatprep.subr.mxu0 0.0
        %946 = vmatpush1.msra.mxu0 0.0
        %947 = vmatprep.subr.mxu0 0.0
        %948 = vmatpush1.msra.mxu0 0.0
        %949 = vmatprep.subr.mxu0 0.0
        %950 = vmatpush1.msra.mxu0 0.0
        %951 = vmatprep.subr.mxu0 0.0
        %952 = vmatpush1.msra.mxu0 0.0
        %953 = vmatprep.subr.mxu0 0.0
        %954 = vmatpush1.msra.mxu0 0.0
        %955 = vmatprep.subr.mxu0 0.0
        %956 = vmatpush1.msra.mxu0 0.0
        %957 = vmatprep.subr.mxu0 0.0
        %958 = vmatpush1.msra.mxu0 0.0
        %959 = vmatprep.subr.mxu0 0.0
        %960 = vmatpush1.msra.mxu0 0.0
        %961 = vmatprep.subr.mxu0 0.0
        %962 = vmatpush1.msra.mxu0 0.0
        %963 = vmatprep.subr.mxu0 0.0
        %964 = vmatpush1.msra.mxu0 0.0
        %965 = vmatprep.subr.mxu0 0.0
        %966 = vmatpush1.msra.mxu0 0.0
        %967 = vmatprep.subr.mxu0 0.0
        %968 = vmatpush1.msra.mxu0 0.0
        %969 = vmatprep.subr.mxu0 0.0
        %970 = vmatpush1.msra.mxu0 0.0
        %971 = vmatprep.subr.mxu0 0.0
        %972 = vmatpush1.msra.mxu0 0.0
        %973 = vmatprep.subr.mxu0 0.0
        %974 = vmatpush1.msra.mxu0 0.0
        %975 = vmatprep.subr.mxu0 0.0
        %976 = vmatpush1.msra.mxu0 0.0
        %977 = vmatprep.subr.mxu0 0.0
        %978 = vmatpush1.msra.mxu0 0.0
        %979 = vmatprep.subr.mxu0 0.0
        %980 = vmatpush1.msra.mxu0 0.0
        %981 = vmatprep.subr.mxu0 0.0
        %982 = vmatpush1.msra.mxu0 0.0
        %983 = vmatprep.subr.mxu0 0.0
        %984 = vmatpush1.msra.mxu0 0.0
        %985 = vmatprep.subr.mxu0 0.0
        %986 = vmatpush1.msra.mxu0 0.0
        %987 = vmatprep.subr.mxu0 0.0
        %988 = vmatpush1.msra.mxu0 0.0
        %989 = vmatprep.subr.mxu0 0.0
        %990 = vmatpush1.msra.mxu0 0.0
        %991 = vmatprep.subr.mxu0 0.0
        %992 = vmatpush1.msra.mxu0 0.0
        %993 = vmatprep.subr.mxu0 0.0
        %994 = vmatpush1.msra.mxu0 0.0
        %995 = vmatprep.subr.mxu0 0.0
        %996 = vmatpush1.msra.mxu0 0.0
        %997 = vmatprep.mubr.f32.mxu0 0.0
        %998 = vmatmul.mubr.f32.gmra.mrb[0].mxu0 %v834
        %v999 = vpop.f32.mrb[0].mxu0
        %v1000 = vadd.f32 0.0, %v999
        %v1001 = vpop.f32.mrb[0].mxu0
        %1002 = vmatprep.mubr.f32.mxu0 0.0
        %1003 = vmatmul.mubr.f32.gmra.mrb[0].mxu0 %v837
        %v1004 = vpop.f32.mrb[0].mxu0
        %v1005 = vadd.f32 0.0, %v1004
        %v1006 = vpop.f32.mrb[0].mxu0
        %1007 = vmatprep.mubr.f32.mxu0 0.0
        %1008 = vmatmul.mubr.f32.gmra.mrb[0].mxu0 %v840
        %v1009 = vpop.f32.mrb[0].mxu0
        %v1010 = vadd.f32 0.0, %v1009
        %v1011 = vpop.f32.mrb[0].mxu0
        %1012 = vmatprep.mubr.f32.mxu0 0.0
        %1013 = vmatmul.mubr.f32.gmra.mrb[0].mxu0 %v843
        %v1014 = vpop.f32.mrb[0].mxu0
        %v1015 = vadd.f32 0.0, %v1014
        %v1016 = vpop.f32.mrb[0].mxu0
        %1017 = vmatprep.mubr.f32.mxu0 0.0
        %1018 = vmatmul.mubr.f32.gmra.mrb[0].mxu0 %v846
        %v1019 = vpop.f32.mrb[0].mxu0
        %v1020 = vadd.f32 0.0, %v1019
        %v1021 = vpop.f32.mrb[0].mxu0
        %1022 = vmatprep.mubr.f32.mxu0 0.0
        %1023 = vmatmul.mubr.f32.gmra.mrb[0].mxu0 %v849
        %v1024 = vpop.f32.mrb[0].mxu0
        %v1025 = vadd.f32 0.0, %v1024
        %v1026 = vpop.f32.mrb[0].mxu0
        %1027 = vmatprep.mubr.f32.mxu0 0.0
        %1028 = vmatmul.mubr.f32.gmra.mrb[0].mxu0 %v852
        %v1029 = vpop.f32.mrb[0].mxu0
        %v1030 = vadd.f32 0.0, %v1029
        %v1031 = vpop.f32.mrb[0].mxu0
        %1032 = vmatprep.mubr.f32.mxu0 0.0
        %1033 = vmatmul.mubr.f32.gmra.mrb[0].mxu0 %v855
        %v1034 = vpop.f32.mrb[0].mxu0
        %v1035 = vadd.f32 0.0, %v1034
        %v1036 = vpop.f32.mrb[0].mxu0
        %1037 = vmatprep.mubr.f32.mxu0 0.0
        %1038 = vmatmul.mubr.f32.gmra.mrb[0].mxu0 %v858
        %v1039 = vpop.f32.mrb[0].mxu0
        %v1040 = vadd.f32 0.0, %v1039
        %v1041 = vpop.f32.mrb[0].mxu0
        %1042 = vmatprep.mubr.f32.mxu0 0.0
        %1043 = vmatmul.mubr.f32.gmra.mrb[0].mxu0 %v861
        %v1044 = vpop.f32.mrb[0].mxu0
        %v1045 = vadd.f32 0.0, %v1044
        %v1046 = vpop.f32.mrb[0].mxu0
        %1047 = vmatprep.mubr.f32.mxu0 0.0
        %1048 = vmatmul.mubr.f32.gmra.mrb[0].mxu0 %v864
        %v1049 = vpop.f32.mrb[0].mxu0
        %v1050 = vadd.f32 0.0, %v1049
        %v1051 = vpop.f32.mrb[0].mxu0
        %1052 = vmatprep.mubr.f32.mxu0 0.0
        %1053 = vmatmul.mubr.f32.gmra.mrb[0].mxu0 %v867
        %v1054 = vpop.f32.mrb[0].mxu0
        %v1055 = vadd.f32 0.0, %v1054
        %v1056 = vpop.f32.mrb[0].mxu0
        %1057 = vmatprep.mubr.f32.mxu0 0.0
        %1058 = vmatmul.mubr.f32.gmra.mrb[0].mxu0 %v870
        %v1059 = vpop.f32.mrb[0].mxu0
        %v1060 = vadd.f32 0.0, %v1059
        %v1061 = vpop.f32.mrb[0].mxu0
        %1062 = vmatprep.mubr.f32.mxu0 0.0
        %1063 = vmatmul.mubr.f32.gmra.mrb[0].mxu0 %v873
        %v1064 = vpop.f32.mrb[0].mxu0
        %v1065 = vadd.f32 0.0, %v1064
        %v1066 = vpop.f32.mrb[0].mxu0
        %1067 = vmatprep.mubr.f32.mxu0 0.0
        %1068 = vmatmul.mubr.f32.gmra.mrb[0].mxu0 %v876
        %v1069 = vpop.f32.mrb[0].mxu0
        %v1070 = vadd.f32 0.0, %v1069
        %v1071 = vpop.f32.mrb[0].mxu0
        %1072 = vmatprep.mubr.f32.mxu0 0.0
        %1073 = vmatmul.mubr.f32.gmra.mrb[0].mxu0 %v879
        %v1074 = vpop.f32.mrb[0].mxu0
        %v1075 = vadd.f32 0.0, %v1074
        %v1076 = vpop.f32.mrb[0].mxu0
        %1077 = vmatprep.mubr.f32.mxu0 0.0
        %1078 = vmatmul.mubr.f32.gmra.mrb[0].mxu0 %v882
        %v1079 = vpop.f32.mrb[0].mxu0
        %v1080 = vadd.f32 0.0, %v1079
        %v1081 = vpop.f32.mrb[0].mxu0
        %1082 = vmatprep.mubr.f32.mxu0 0.0
        %1083 = vmatmul.mubr.f32.gmra.mrb[0].mxu0 %v885
        %v1084 = vpop.f32.mrb[0].mxu0
        %v1085 = vadd.f32 0.0, %v1084
        %v1086 = vpop.f32.mrb[0].mxu0
        %1087 = vmatprep.mubr.f32.mxu0 0.0
        %1088 = vmatmul.mubr.f32.gmra.mrb[0].mxu0 %v888
        %v1089 = vpop.f32.mrb[0].mxu0
        %v1090 = vadd.f32 0.0, %v1089
        %v1091 = vpop.f32.mrb[0].mxu0
        %1092 = vmatprep.mubr.f32.mxu0 0.0
        %1093 = vmatmul.mubr.f32.gmra.mrb[0].mxu0 %v891
        %v1094 = vpop.f32.mrb[0].mxu0
        %v1095 = vadd.f32 0.0, %v1094
        %v1096 = vpop.f32.mrb[0].mxu0
        %1097 = vmatprep.mubr.f32.mxu0 0.0
        %1098 = vmatmul.mubr.f32.gmra.mrb[0].mxu0 %v894
        %v1099 = vpop.f32.mrb[0].mxu0
        %v1100 = vadd.f32 0.0, %v1099
        %v1101 = vpop.f32.mrb[0].mxu0
        %1102 = vmatprep.mubr.f32.mxu0 0.0
        %1103 = vmatmul.mubr.f32.gmra.mrb[0].mxu0 %v897
        %v1104 = vpop.f32.mrb[0].mxu0
        %v1105 = vadd.f32 0.0, %v1104
        %v1106 = vpop.f32.mrb[0].mxu0
        %1107 = vmatprep.mubr.f32.mxu0 0.0
        %1108 = vmatmul.mubr.f32.gmra.mrb[0].mxu0 %v900
        %v1109 = vpop.f32.mrb[0].mxu0
        %v1110 = vadd.f32 0.0, %v1109
        %v1111 = vpop.f32.mrb[0].mxu0
        %1112 = vmatprep.mubr.f32.mxu0 0.0
        %1113 = vmatmul.mubr.f32.gmra.mrb[0].mxu0 %v903
        %v1114 = vpop.f32.mrb[0].mxu0
        %v1115 = vadd.f32 0.0, %v1114
        %v1116 = vpop.f32.mrb[0].mxu0
        %1117 = vmatprep.mubr.f32.mxu0 0.0
        %1118 = vmatmul.mubr.f32.gmra.mrb[0].mxu0 %v906
        %v1119 = vpop.f32.mrb[0].mxu0
        %v1120 = vadd.f32 0.0, %v1119
        %v1121 = vpop.f32.mrb[0].mxu0
        %1122 = vmatprep.mubr.f32.mxu0 0.0
        %1123 = vmatmul.mubr.f32.gmra.mrb[0].mxu0 %v909
        %v1124 = vpop.f32.mrb[0].mxu0
        %v1125 = vadd.f32 0.0, %v1124
        %v1126 = vpop.f32.mrb[0].mxu0
        %1127 = vmatprep.mubr.f32.mxu0 0.0
        %1128 = vmatmul.mubr.f32.gmra.mrb[0].mxu0 %v912
        %v1129 = vpop.f32.mrb[0].mxu0
        %v1130 = vadd.f32 0.0, %v1129
        %v1131 = vpop.f32.mrb[0].mxu0
        %1132 = vmatprep.mubr.f32.mxu0 0.0
        %1133 = vmatmul.mubr.f32.gmra.mrb[0].mxu0 %v915
        %v1134 = vpop.f32.mrb[0].mxu0
        %v1135 = vadd.f32 0.0, %v1134
        %v1136 = vpop.f32.mrb[0].mxu0
        %1137 = vmatprep.mubr.f32.mxu0 0.0
        %1138 = vmatmul.mubr.f32.gmra.mrb[0].mxu0 %v918
        %v1139 = vpop.f32.mrb[0].mxu0
        %v1140 = vadd.f32 0.0, %v1139
        %v1141 = vpop.f32.mrb[0].mxu0
        %1142 = vmatprep.mubr.f32.mxu0 0.0
        %1143 = vmatmul.mubr.f32.gmra.mrb[0].mxu0 %v921
        %v1144 = vpop.f32.mrb[0].mxu0
        %v1145 = vadd.f32 0.0, %v1144
        %v1146 = vpop.f32.mrb[0].mxu0
        %1147 = vmatprep.mubr.f32.mxu0 0.0
        %1148 = vmatmul.mubr.f32.gmra.mrb[0].mxu0 %v924
        %v1149 = vpop.f32.mrb[0].mxu0
        %v1150 = vadd.f32 0.0, %v1149
        %v1151 = vpop.f32.mrb[0].mxu0
        %1152 = vmatprep.mubr.f32.mxu0 0.0
        %1153 = vmatmul.mubr.f32.gmra.mrb[0].mxu0 %v927
        %v1154 = vpop.f32.mrb[0].mxu0
        %v1155 = vadd.f32 0.0, %v1154
        %v1156 = vpop.f32.mrb[0].mxu0
        %1157 = vdwg.mxu0
        %v1159 = vsel %vm832, %v776, 0
        %v1162 = vsel %vm929, %v808, 0
        %1164 = vmatprep.subr.mxu0 0.0
        %1165 = vmatpush1.msra.mxu0 %v807
        %1166 = vmatprep.subr.mxu0 0.0
        %1167 = vmatpush1.msra.mxu0 %v1162
        %1168 = vmatprep.subr.mxu0 0.0
        %1169 = vmatpush1.msra.mxu0 0.0
        %1170 = vmatprep.subr.mxu0 0.0
        %1171 = vmatpush1.msra.mxu0 0.0
        %1172 = vmatprep.subr.mxu0 0.0
        %1173 = vmatpush1.msra.mxu0 0.0
        %1174 = vmatprep.subr.mxu0 0.0
        %1175 = vmatpush1.msra.mxu0 0.0
        %1176 = vmatprep.subr.mxu0 0.0
        %1177 = vmatpush1.msra.mxu0 0.0
        %1178 = vmatprep.subr.mxu0 0.0
        %1179 = vmatpush1.msra.mxu0 0.0
        %1180 = vmatprep.subr.mxu0 0.0
        %1181 = vmatpush1.msra.mxu0 0.0
        %1182 = vmatprep.subr.mxu0 0.0
        %1183 = vmatpush1.msra.mxu0 0.0
        %1184 = vmatprep.subr.mxu0 0.0
        %1185 = vmatpush1.msra.mxu0 0.0
        %1186 = vmatprep.subr.mxu0 0.0
        %1187 = vmatpush1.msra.mxu0 0.0
        %1188 = vmatprep.subr.mxu0 0.0
        %1189 = vmatpush1.msra.mxu0 0.0
        %1190 = vmatprep.subr.mxu0 0.0
        %1191 = vmatpush1.msra.mxu0 0.0
        %1192 = vmatprep.subr.mxu0 0.0
        %1193 = vmatpush1.msra.mxu0 0.0
        %1194 = vmatprep.subr.mxu0 0.0
        %1195 = vmatpush1.msra.mxu0 0.0
        %1196 = vmatprep.subr.mxu0 0.0
        %1197 = vmatpush1.msra.mxu0 0.0
        %1198 = vmatprep.subr.mxu0 0.0
        %1199 = vmatpush1.msra.mxu0 0.0
        %1200 = vmatprep.subr.mxu0 0.0
        %1201 = vmatpush1.msra.mxu0 0.0
        %1202 = vmatprep.subr.mxu0 0.0
        %1203 = vmatpush1.msra.mxu0 0.0
        %1204 = vmatprep.subr.mxu0 0.0
        %1205 = vmatpush1.msra.mxu0 0.0
        %1206 = vmatprep.subr.mxu0 0.0
        %1207 = vmatpush1.msra.mxu0 0.0
        %1208 = vmatprep.subr.mxu0 0.0
        %1209 = vmatpush1.msra.mxu0 0.0
        %1210 = vmatprep.subr.mxu0 0.0
        %1211 = vmatpush1.msra.mxu0 0.0
        %1212 = vmatprep.subr.mxu0 0.0
        %1213 = vmatpush1.msra.mxu0 0.0
        %1214 = vmatprep.subr.mxu0 0.0
        %1215 = vmatpush1.msra.mxu0 0.0
        %1216 = vmatprep.subr.mxu0 0.0
        %1217 = vmatpush1.msra.mxu0 0.0
        %1218 = vmatprep.subr.mxu0 0.0
        %1219 = vmatpush1.msra.mxu0 0.0
        %1220 = vmatprep.subr.mxu0 0.0
        %1221 = vmatpush1.msra.mxu0 0.0
        %1222 = vmatprep.subr.mxu0 0.0
        %1223 = vmatpush1.msra.mxu0 0.0
        %1224 = vmatprep.subr.mxu0 0.0
        %1225 = vmatpush1.msra.mxu0 0.0
        %1226 = vmatprep.subr.mxu0 0.0
        %1227 = vmatpush1.msra.mxu0 0.0
        %1228 = vmatprep.mubr.f32.mxu0 0.0
        %1229 = vmatmul.mubr.f32.gmra.mrb[0].mxu0 %v1159
        %v1230 = vpop.f32.mrb[0].mxu0
        %v1231 = vadd.f32 %v1000, %v1230
        %v1232 = vpop.f32.mrb[0].mxu0
        %1233 = vmatprep.mubr.f32.mxu0 0.0
        %1234 = vmatmul.mubr.f32.gmra.mrb[0].mxu0 %v1159
        %v1235 = vpop.f32.mrb[0].mxu0
        %v1236 = vadd.f32 %v1005, %v1235
        %v1237 = vpop.f32.mrb[0].mxu0
        %1238 = vmatprep.mubr.f32.mxu0 0.0
        %1239 = vmatmul.mubr.f32.gmra.mrb[0].mxu0 %v834
        %v1240 = vpop.f32.mrb[0].mxu0
        %v1241 = vadd.f32 %v1010, %v1240
        %v1242 = vpop.f32.mrb[0].mxu0
        %1243 = vmatprep.mubr.f32.mxu0 0.0
        %1244 = vmatmul.mubr.f32.gmra.mrb[0].mxu0 %v837
        %v1245 = vpop.f32.mrb[0].mxu0
        %v1246 = vadd.f32 %v1015, %v1245
        %v1247 = vpop.f32.mrb[0].mxu0
        %1248 = vmatprep.mubr.f32.mxu0 0.0
        %1249 = vmatmul.mubr.f32.gmra.mrb[0].mxu0 %v840
        %v1250 = vpop.f32.mrb[0].mxu0
        %v1251 = vadd.f32 %v1020, %v1250
        %v1252 = vpop.f32.mrb[0].mxu0
        %1253 = vmatprep.mubr.f32.mxu0 0.0
        %1254 = vmatmul.mubr.f32.gmra.mrb[0].mxu0 %v843
        %v1255 = vpop.f32.mrb[0].mxu0
        %v1256 = vadd.f32 %v1025, %v1255
        %v1257 = vpop.f32.mrb[0].mxu0
        %1258 = vmatprep.mubr.f32.mxu0 0.0
        %1259 = vmatmul.mubr.f32.gmra.mrb[0].mxu0 %v846
        %v1260 = vpop.f32.mrb[0].mxu0
        %v1261 = vadd.f32 %v1030, %v1260
        %v1262 = vpop.f32.mrb[0].mxu0
        %1263 = vmatprep.mubr.f32.mxu0 0.0
        %1264 = vmatmul.mubr.f32.gmra.mrb[0].mxu0 %v849
        %v1265 = vpop.f32.mrb[0].mxu0
        %v1266 = vadd.f32 %v1035, %v1265
        %v1267 = vpop.f32.mrb[0].mxu0
        %1268 = vmatprep.mubr.f32.mxu0 0.0
        %1269 = vmatmul.mubr.f32.gmra.mrb[0].mxu0 %v852
        %v1270 = vpop.f32.mrb[0].mxu0
        %v1271 = vadd.f32 %v1040, %v1270
        %v1272 = vpop.f32.mrb[0].mxu0
        %1273 = vmatprep.mubr.f32.mxu0 0.0
        %1274 = vmatmul.mubr.f32.gmra.mrb[0].mxu0 %v855
        %v1275 = vpop.f32.mrb[0].mxu0
        %v1276 = vadd.f32 %v1045, %v1275
        %v1277 = vpop.f32.mrb[0].mxu0
        %1278 = vmatprep.mubr.f32.mxu0 0.0
        %1279 = vmatmul.mubr.f32.gmra.mrb[0].mxu0 %v858
        %v1280 = vpop.f32.mrb[0].mxu0
        %v1281 = vadd.f32 %v1050, %v1280
        %v1282 = vpop.f32.mrb[0].mxu0
        %1283 = vmatprep.mubr.f32.mxu0 0.0
        %1284 = vmatmul.mubr.f32.gmra.mrb[0].mxu0 %v861
        %v1285 = vpop.f32.mrb[0].mxu0
        %v1286 = vadd.f32 %v1055, %v1285
        %v1287 = vpop.f32.mrb[0].mxu0
        %1288 = vmatprep.mubr.f32.mxu0 0.0
        %1289 = vmatmul.mubr.f32.gmra.mrb[0].mxu0 %v864
        %v1290 = vpop.f32.mrb[0].mxu0
        %v1291 = vadd.f32 %v1060, %v1290
        %v1292 = vpop.f32.mrb[0].mxu0
        %1293 = vmatprep.mubr.f32.mxu0 0.0
        %1294 = vmatmul.mubr.f32.gmra.mrb[0].mxu0 %v867
        %v1295 = vpop.f32.mrb[0].mxu0
        %v1296 = vadd.f32 %v1065, %v1295
        %v1297 = vpop.f32.mrb[0].mxu0
        %1298 = vmatprep.mubr.f32.mxu0 0.0
        %1299 = vmatmul.mubr.f32.gmra.mrb[0].mxu0 %v870
        %v1300 = vpop.f32.mrb[0].mxu0
        %v1301 = vadd.f32 %v1070, %v1300
        %v1302 = vpop.f32.mrb[0].mxu0
        %1303 = vmatprep.mubr.f32.mxu0 0.0
        %1304 = vmatmul.mubr.f32.gmra.mrb[0].mxu0 %v873
        %v1305 = vpop.f32.mrb[0].mxu0
        %v1306 = vadd.f32 %v1075, %v1305
        %v1307 = vpop.f32.mrb[0].mxu0
        %1308 = vmatprep.mubr.f32.mxu0 0.0
        %1309 = vmatmul.mubr.f32.gmra.mrb[0].mxu0 %v876
        %v1310 = vpop.f32.mrb[0].mxu0
        %v1311 = vadd.f32 %v1080, %v1310
        %v1312 = vpop.f32.mrb[0].mxu0
        %1313 = vmatprep.mubr.f32.mxu0 0.0
        %1314 = vmatmul.mubr.f32.gmra.mrb[0].mxu0 %v879
        %v1315 = vpop.f32.mrb[0].mxu0
        %v1316 = vadd.f32 %v1085, %v1315
        %v1317 = vpop.f32.mrb[0].mxu0
        %1318 = vmatprep.mubr.f32.mxu0 0.0
        %1319 = vmatmul.mubr.f32.gmra.mrb[0].mxu0 %v882
        %v1320 = vpop.f32.mrb[0].mxu0
        %v1321 = vadd.f32 %v1090, %v1320
        %v1322 = vpop.f32.mrb[0].mxu0
        %1323 = vmatprep.mubr.f32.mxu0 0.0
        %1324 = vmatmul.mubr.f32.gmra.mrb[0].mxu0 %v885
        %v1325 = vpop.f32.mrb[0].mxu0
        %v1326 = vadd.f32 %v1095, %v1325
        %v1327 = vpop.f32.mrb[0].mxu0
        %1328 = vmatprep.mubr.f32.mxu0 0.0
        %1329 = vmatmul.mubr.f32.gmra.mrb[0].mxu0 %v888
        %v1330 = vpop.f32.mrb[0].mxu0
        %v1331 = vadd.f32 %v1100, %v1330
        %v1332 = vpop.f32.mrb[0].mxu0
        %1333 = vmatprep.mubr.f32.mxu0 0.0
        %1334 = vmatmul.mubr.f32.gmra.mrb[0].mxu0 %v891
        %v1335 = vpop.f32.mrb[0].mxu0
        %v1336 = vadd.f32 %v1105, %v1335
        %v1337 = vpop.f32.mrb[0].mxu0
        %1338 = vmatprep.mubr.f32.mxu0 0.0
        %1339 = vmatmul.mubr.f32.gmra.mrb[0].mxu0 %v894
        %v1340 = vpop.f32.mrb[0].mxu0
        %v1341 = vadd.f32 %v1110, %v1340
        %v1342 = vpop.f32.mrb[0].mxu0
        %1343 = vmatprep.mubr.f32.mxu0 0.0
        %1344 = vmatmul.mubr.f32.gmra.mrb[0].mxu0 %v897
        %v1345 = vpop.f32.mrb[0].mxu0
        %v1346 = vadd.f32 %v1115, %v1345
        %v1347 = vpop.f32.mrb[0].mxu0
        %1348 = vmatprep.mubr.f32.mxu0 0.0
        %1349 = vmatmul.mubr.f32.gmra.mrb[0].mxu0 %v900
        %v1350 = vpop.f32.mrb[0].mxu0
        %v1351 = vadd.f32 %v1120, %v1350
        %v1352 = vpop.f32.mrb[0].mxu0
        %1353 = vmatprep.mubr.f32.mxu0 0.0
        %1354 = vmatmul.mubr.f32.gmra.mrb[0].mxu0 %v903
        %v1355 = vpop.f32.mrb[0].mxu0
        %v1356 = vadd.f32 %v1125, %v1355
        %v1357 = vpop.f32.mrb[0].mxu0
        %1358 = vmatprep.mubr.f32.mxu0 0.0
        %1359 = vmatmul.mubr.f32.gmra.mrb[0].mxu0 %v906
        %v1360 = vpop.f32.mrb[0].mxu0
        %v1361 = vadd.f32 %v1130, %v1360
        %v1362 = vpop.f32.mrb[0].mxu0
        %1363 = vmatprep.mubr.f32.mxu0 0.0
        %1364 = vmatmul.mubr.f32.gmra.mrb[0].mxu0 %v909
        %v1365 = vpop.f32.mrb[0].mxu0
        %v1366 = vadd.f32 %v1135, %v1365
        %v1367 = vpop.f32.mrb[0].mxu0
        %1368 = vmatprep.mubr.f32.mxu0 0.0
        %1369 = vmatmul.mubr.f32.gmra.mrb[0].mxu0 %v912
        %v1370 = vpop.f32.mrb[0].mxu0
        %v1371 = vadd.f32 %v1140, %v1370
        %v1372 = vpop.f32.mrb[0].mxu0
        %1373 = vmatprep.mubr.f32.mxu0 0.0
        %1374 = vmatmul.mubr.f32.gmra.mrb[0].mxu0 %v915
        %v1375 = vpop.f32.mrb[0].mxu0
        %v1376 = vadd.f32 %v1145, %v1375
        %v1377 = vpop.f32.mrb[0].mxu0
        %1378 = vmatprep.mubr.f32.mxu0 0.0
        %1379 = vmatmul.mubr.f32.gmra.mrb[0].mxu0 %v918
        %v1380 = vpop.f32.mrb[0].mxu0
        %v1381 = vadd.f32 %v1150, %v1380
        %v1382 = vpop.f32.mrb[0].mxu0
        %1383 = vmatprep.mubr.f32.mxu0 0.0
        %1384 = vmatmul.mubr.f32.gmra.mrb[0].mxu0 %v921
        %v1385 = vpop.f32.mrb[0].mxu0
        %v1386 = vadd.f32 %v1155, %v1385
        %v1387 = vpop.f32.mrb[0].mxu0
        %1388 = vdwg.mxu0
        %s1389 = scalar_lea.vmem %s1, 32
        %v1390 = vld [vmem:[%s1389] sm:$0xff]
        %v1391 = vld [vmem:[%s1389 + $0x8] sm:$0xf]
        %v1393 = vsel %vm929, %v1391, 0
        %1395 = vmatprep.subr.mxu0 0.0
        %1396 = vmatpush1.msra.mxu0 %v1390
        %1397 = vmatprep.subr.mxu0 0.0
        %1398 = vmatpush1.msra.mxu0 %v1393
        %1399 = vmatprep.subr.mxu0 0.0
        %1400 = vmatpush1.msra.mxu0 0.0
        %1401 = vmatprep.subr.mxu0 0.0
        %1402 = vmatpush1.msra.mxu0 0.0
        %1403 = vmatprep.subr.mxu0 0.0
        %1404 = vmatpush1.msra.mxu0 0.0
        %1405 = vmatprep.subr.mxu0 0.0
        %1406 = vmatpush1.msra.mxu0 0.0
        %1407 = vmatprep.subr.mxu0 0.0
        %1408 = vmatpush1.msra.mxu0 0.0
        %1409 = vmatprep.subr.mxu0 0.0
        %1410 = vmatpush1.msra.mxu0 0.0
        %1411 = vmatprep.subr.mxu0 0.0
        %1412 = vmatpush1.msra.mxu0 0.0
        %1413 = vmatprep.subr.mxu0 0.0
        %1414 = vmatpush1.msra.mxu0 0.0
        %1415 = vmatprep.subr.mxu0 0.0
        %1416 = vmatpush1.msra.mxu0 0.0
        %1417 = vmatprep.subr.mxu0 0.0
        %1418 = vmatpush1.msra.mxu0 0.0
        %1419 = vmatprep.subr.mxu0 0.0
        %1420 = vmatpush1.msra.mxu0 0.0
        %1421 = vmatprep.subr.mxu0 0.0
        %1422 = vmatpush1.msra.mxu0 0.0
        %1423 = vmatprep.subr.mxu0 0.0
        %1424 = vmatpush1.msra.mxu0 0.0
        %1425 = vmatprep.subr.mxu0 0.0
        %1426 = vmatpush1.msra.mxu0 0.0
        %1427 = vmatprep.subr.mxu0 0.0
        %1428 = vmatpush1.msra.mxu0 0.0
        %1429 = vmatprep.subr.mxu0 0.0
        %1430 = vmatpush1.msra.mxu0 0.0
        %1431 = vmatprep.subr.mxu0 0.0
        %1432 = vmatpush1.msra.mxu0 0.0
        %1433 = vmatprep.subr.mxu0 0.0
        %1434 = vmatpush1.msra.mxu0 0.0
        %1435 = vmatprep.subr.mxu0 0.0
        %1436 = vmatpush1.msra.mxu0 0.0
        %1437 = vmatprep.subr.mxu0 0.0
        %1438 = vmatpush1.msra.mxu0 0.0
        %1439 = vmatprep.subr.mxu0 0.0
        %1440 = vmatpush1.msra.mxu0 0.0
        %1441 = vmatprep.subr.mxu0 0.0
        %1442 = vmatpush1.msra.mxu0 0.0
        %1443 = vmatprep.subr.mxu0 0.0
        %1444 = vmatpush1.msra.mxu0 0.0
        %1445 = vmatprep.subr.mxu0 0.0
        %1446 = vmatpush1.msra.mxu0 0.0
        %1447 = vmatprep.subr.mxu0 0.0
        %1448 = vmatpush1.msra.mxu0 0.0
        %1449 = vmatprep.subr.mxu0 0.0
        %1450 = vmatpush1.msra.mxu0 0.0
        %1451 = vmatprep.subr.mxu0 0.0
        %1452 = vmatpush1.msra.mxu0 0.0
        %1453 = vmatprep.subr.mxu0 0.0
        %1454 = vmatpush1.msra.mxu0 0.0
        %1455 = vmatprep.subr.mxu0 0.0
        %1456 = vmatpush1.msra.mxu0 0.0
        %1457 = vmatprep.subr.mxu0 0.0
        %1458 = vmatpush1.msra.mxu0 0.0
        %1459 = vmatprep.mubr.f32.mxu0 0.0
        %1460 = vmatmul.mubr.f32.gmra.mrb[0].mxu0 %v840
        %v1461 = vpop.f32.mrb[0].mxu0
        %v1462 = vadd.f32 0.0, %v1461
        %v1463 = vpop.f32.mrb[0].mxu0
        %1464 = vmatprep.mubr.f32.mxu0 0.0
        %1465 = vmatmul.mubr.f32.gmra.mrb[0].mxu0 %v843
        %v1466 = vpop.f32.mrb[0].mxu0
        %v1467 = vadd.f32 0.0, %v1466
        %v1468 = vpop.f32.mrb[0].mxu0
        %1469 = vmatprep.mubr.f32.mxu0 0.0
        %1470 = vmatmul.mubr.f32.gmra.mrb[0].mxu0 %v846
        %v1471 = vpop.f32.mrb[0].mxu0
        %v1472 = vadd.f32 0.0, %v1471
        %v1473 = vpop.f32.mrb[0].mxu0
        %1474 = vmatprep.mubr.f32.mxu0 0.0
        %1475 = vmatmul.mubr.f32.gmra.mrb[0].mxu0 %v849
        %v1476 = vpop.f32.mrb[0].mxu0
        %v1477 = vadd.f32 0.0, %v1476
        %v1478 = vpop.f32.mrb[0].mxu0
        %1479 = vmatprep.mubr.f32.mxu0 0.0
        %1480 = vmatmul.mubr.f32.gmra.mrb[0].mxu0 %v852
        %v1481 = vpop.f32.mrb[0].mxu0
        %v1482 = vadd.f32 0.0, %v1481
        %v1483 = vpop.f32.mrb[0].mxu0
        %1484 = vmatprep.mubr.f32.mxu0 0.0
        %1485 = vmatmul.mubr.f32.gmra.mrb[0].mxu0 %v855
        %v1486 = vpop.f32.mrb[0].mxu0
        %v1487 = vadd.f32 0.0, %v1486
        %v1488 = vpop.f32.mrb[0].mxu0
        %1489 = vmatprep.mubr.f32.mxu0 0.0
        %1490 = vmatmul.mubr.f32.gmra.mrb[0].mxu0 %v858
        %v1491 = vpop.f32.mrb[0].mxu0
        %v1492 = vadd.f32 0.0, %v1491
        %v1493 = vpop.f32.mrb[0].mxu0
        %1494 = vmatprep.mubr.f32.mxu0 0.0
        %1495 = vmatmul.mubr.f32.gmra.mrb[0].mxu0 %v861
        %v1496 = vpop.f32.mrb[0].mxu0
        %v1497 = vadd.f32 0.0, %v1496
        %v1498 = vpop.f32.mrb[0].mxu0
        %1499 = vmatprep.mubr.f32.mxu0 0.0
        %1500 = vmatmul.mubr.f32.gmra.mrb[0].mxu0 %v864
        %v1501 = vpop.f32.mrb[0].mxu0
        %v1502 = vadd.f32 0.0, %v1501
        %v1503 = vpop.f32.mrb[0].mxu0
        %1504 = vmatprep.mubr.f32.mxu0 0.0
        %1505 = vmatmul.mubr.f32.gmra.mrb[0].mxu0 %v867
        %v1506 = vpop.f32.mrb[0].mxu0
        %v1507 = vadd.f32 0.0, %v1506
        %v1508 = vpop.f32.mrb[0].mxu0
        %1509 = vmatprep.mubr.f32.mxu0 0.0
        %1510 = vmatmul.mubr.f32.gmra.mrb[0].mxu0 %v870
        %v1511 = vpop.f32.mrb[0].mxu0
        %v1512 = vadd.f32 0.0, %v1511
        %v1513 = vpop.f32.mrb[0].mxu0
        %1514 = vmatprep.mubr.f32.mxu0 0.0
        %1515 = vmatmul.mubr.f32.gmra.mrb[0].mxu0 %v873
        %v1516 = vpop.f32.mrb[0].mxu0
        %v1517 = vadd.f32 0.0, %v1516
        %v1518 = vpop.f32.mrb[0].mxu0
        %1519 = vmatprep.mubr.f32.mxu0 0.0
        %1520 = vmatmul.mubr.f32.gmra.mrb[0].mxu0 %v876
        %v1521 = vpop.f32.mrb[0].mxu0
        %v1522 = vadd.f32 0.0, %v1521
        %v1523 = vpop.f32.mrb[0].mxu0
        %1524 = vmatprep.mubr.f32.mxu0 0.0
        %1525 = vmatmul.mubr.f32.gmra.mrb[0].mxu0 %v879
        %v1526 = vpop.f32.mrb[0].mxu0
        %v1527 = vadd.f32 0.0, %v1526
        %v1528 = vpop.f32.mrb[0].mxu0
        %1529 = vmatprep.mubr.f32.mxu0 0.0
        %1530 = vmatmul.mubr.f32.gmra.mrb[0].mxu0 %v882
        %v1531 = vpop.f32.mrb[0].mxu0
        %v1532 = vadd.f32 0.0, %v1531
        %v1533 = vpop.f32.mrb[0].mxu0
        %1534 = vmatprep.mubr.f32.mxu0 0.0
        %1535 = vmatmul.mubr.f32.gmra.mrb[0].mxu0 %v885
        %v1536 = vpop.f32.mrb[0].mxu0
        %v1537 = vadd.f32 0.0, %v1536
        %v1538 = vpop.f32.mrb[0].mxu0
        %1539 = vmatprep.mubr.f32.mxu0 0.0
        %1540 = vmatmul.mubr.f32.gmra.mrb[0].mxu0 %v888
        %v1541 = vpop.f32.mrb[0].mxu0
        %v1542 = vadd.f32 0.0, %v1541
        %v1543 = vpop.f32.mrb[0].mxu0
        %1544 = vmatprep.mubr.f32.mxu0 0.0
        %1545 = vmatmul.mubr.f32.gmra.mrb[0].mxu0 %v891
        %v1546 = vpop.f32.mrb[0].mxu0
        %v1547 = vadd.f32 0.0, %v1546
        %v1548 = vpop.f32.mrb[0].mxu0
        %1549 = vmatprep.mubr.f32.mxu0 0.0
        %1550 = vmatmul.mubr.f32.gmra.mrb[0].mxu0 %v894
        %v1551 = vpop.f32.mrb[0].mxu0
        %v1552 = vadd.f32 0.0, %v1551
        %v1553 = vpop.f32.mrb[0].mxu0
        %1554 = vmatprep.mubr.f32.mxu0 0.0
        %1555 = vmatmul.mubr.f32.gmra.mrb[0].mxu0 %v897
        %v1556 = vpop.f32.mrb[0].mxu0
        %v1557 = vadd.f32 0.0, %v1556
        %v1558 = vpop.f32.mrb[0].mxu0
        %1559 = vmatprep.mubr.f32.mxu0 0.0
        %1560 = vmatmul.mubr.f32.gmra.mrb[0].mxu0 %v900
        %v1561 = vpop.f32.mrb[0].mxu0
        %v1562 = vadd.f32 0.0, %v1561
        %v1563 = vpop.f32.mrb[0].mxu0
        %1564 = vmatprep.mubr.f32.mxu0 0.0
        %1565 = vmatmul.mubr.f32.gmra.mrb[0].mxu0 %v903
        %v1566 = vpop.f32.mrb[0].mxu0
        %v1567 = vadd.f32 0.0, %v1566
        %v1568 = vpop.f32.mrb[0].mxu0
        %1569 = vmatprep.mubr.f32.mxu0 0.0
        %1570 = vmatmul.mubr.f32.gmra.mrb[0].mxu0 %v906
        %v1571 = vpop.f32.mrb[0].mxu0
        %v1572 = vadd.f32 0.0, %v1571
        %v1573 = vpop.f32.mrb[0].mxu0
        %1574 = vmatprep.mubr.f32.mxu0 0.0
        %1575 = vmatmul.mubr.f32.gmra.mrb[0].mxu0 %v909
        %v1576 = vpop.f32.mrb[0].mxu0
        %v1577 = vadd.f32 0.0, %v1576
        %v1578 = vpop.f32.mrb[0].mxu0
        %1579 = vmatprep.mubr.f32.mxu0 0.0
        %1580 = vmatmul.mubr.f32.gmra.mrb[0].mxu0 %v912
        %v1581 = vpop.f32.mrb[0].mxu0
        %v1582 = vadd.f32 0.0, %v1581
        %v1583 = vpop.f32.mrb[0].mxu0
        %1584 = vmatprep.mubr.f32.mxu0 0.0
        %1585 = vmatmul.mubr.f32.gmra.mrb[0].mxu0 %v915
        %v1586 = vpop.f32.mrb[0].mxu0
        %v1587 = vadd.f32 0.0, %v1586
        %v1588 = vpop.f32.mrb[0].mxu0
        %1589 = vmatprep.mubr.f32.mxu0 0.0
        %1590 = vmatmul.mubr.f32.gmra.mrb[0].mxu0 %v918
        %v1591 = vpop.f32.mrb[0].mxu0
        %v1592 = vadd.f32 0.0, %v1591
        %v1593 = vpop.f32.mrb[0].mxu0
        %1594 = vmatprep.mubr.f32.mxu0 0.0
        %1595 = vmatmul.mubr.f32.gmra.mrb[0].mxu0 %v921
        %v1596 = vpop.f32.mrb[0].mxu0
        %v1597 = vadd.f32 0.0, %v1596
        %v1598 = vpop.f32.mrb[0].mxu0
        %1599 = vmatprep.mubr.f32.mxu0 0.0
        %1600 = vmatmul.mubr.f32.gmra.mrb[0].mxu0 %v924
        %v1601 = vpop.f32.mrb[0].mxu0
        %v1602 = vadd.f32 0.0, %v1601
        %v1603 = vpop.f32.mrb[0].mxu0
        %1604 = vmatprep.mubr.f32.mxu0 0.0
        %1605 = vmatmul.mubr.f32.gmra.mrb[0].mxu0 %v927
        %v1606 = vpop.f32.mrb[0].mxu0
        %v1607 = vadd.f32 0.0, %v1606
        %v1608 = vpop.f32.mrb[0].mxu0
        %1609 = vmatprep.mubr.f32.mxu0 0.0
        %1610 = vmatmul.mubr.f32.gmra.mrb[0].mxu0 %v1159
        %v1611 = vpop.f32.mrb[0].mxu0
        %v1612 = vadd.f32 0.0, %v1611
        %v1613 = vpop.f32.mrb[0].mxu0
        %1614 = vmatprep.mubr.f32.mxu0 0.0
        %1615 = vmatmul.mubr.f32.gmra.mrb[0].mxu0 %v1159
        %v1616 = vpop.f32.mrb[0].mxu0
        %v1617 = vadd.f32 0.0, %v1616
        %v1618 = vpop.f32.mrb[0].mxu0
        %1619 = vdwg.mxu0
        %v1620 = vadd.f32 %v1231, %v1462
        %v1621 = vadd.f32 %v1236, %v1467
        %v1622 = vadd.f32 %v1241, %v1472
        %v1623 = vadd.f32 %v1246, %v1477
        %v1624 = vadd.f32 %v1251, %v1482
        %v1625 = vadd.f32 %v1256, %v1487
        %v1626 = vadd.f32 %v1261, %v1492
        %v1627 = vadd.f32 %v1266, %v1497
        %v1628 = vadd.f32 %v1271, %v1502
        %v1629 = vadd.f32 %v1276, %v1507
        %v1630 = vadd.f32 %v1281, %v1512
        %v1631 = vadd.f32 %v1286, %v1517
        %v1632 = vadd.f32 %v1291, %v1522
        %v1633 = vadd.f32 %v1296, %v1527
        %v1634 = vadd.f32 %v1301, %v1532
        %v1635 = vadd.f32 %v1306, %v1537
        %v1636 = vadd.f32 %v1311, %v1542
        %v1637 = vadd.f32 %v1316, %v1547
        %v1638 = vadd.f32 %v1321, %v1552
        %v1639 = vadd.f32 %v1326, %v1557
        %v1640 = vadd.f32 %v1331, %v1562
        %v1641 = vadd.f32 %v1336, %v1567
        %v1642 = vadd.f32 %v1341, %v1572
        %v1643 = vadd.f32 %v1346, %v1577
        %v1644 = vadd.f32 %v1351, %v1582
        %v1645 = vadd.f32 %v1356, %v1587
        %v1646 = vadd.f32 %v1361, %v1592
        %v1647 = vadd.f32 %v1366, %v1597
        %v1648 = vadd.f32 %v1371, %v1602
        %v1649 = vadd.f32 %v1376, %v1607
        %v1650 = vadd.f32 %v1381, %v1612
        %v1651 = vadd.f32 %v1386, %v1617
        %v1652 = vld [vmem:[%s2] sm:$0x1]
        %v1654 = vlaneseq
        %v1655 = vshrl.u32 %v1654, 7
        %v1656 = vsub.s32 0, %v1655
        %v1657 = vrot.slane %v1652, %v1656
        %v1659 = vadd.f32 %v1620, %v1657
        %v1660 = vadd.f32 %v1621, %v1657
        %v1661 = vadd.f32 %v1622, %v1657
        %v1662 = vadd.f32 %v1623, %v1657
        %v1663 = vadd.f32 %v1624, %v1657
        %v1664 = vadd.f32 %v1625, %v1657
        %v1665 = vadd.f32 %v1626, %v1657
        %v1666 = vadd.f32 %v1627, %v1657
        %v1667 = vadd.f32 %v1628, %v1657
        %v1668 = vadd.f32 %v1629, %v1657
        %v1669 = vadd.f32 %v1630, %v1657
        %v1670 = vadd.f32 %v1631, %v1657
        %v1671 = vadd.f32 %v1632, %v1657
        %v1672 = vadd.f32 %v1633, %v1657
        %v1673 = vadd.f32 %v1634, %v1657
        %v1674 = vadd.f32 %v1635, %v1657
        %v1675 = vadd.f32 %v1636, %v1657
        %v1676 = vadd.f32 %v1637, %v1657
        %v1677 = vadd.f32 %v1638, %v1657
        %v1678 = vadd.f32 %v1639, %v1657
        %v1679 = vadd.f32 %v1640, %v1657
        %v1680 = vadd.f32 %v1641, %v1657
        %v1681 = vadd.f32 %v1642, %v1657
        %v1682 = vadd.f32 %v1643, %v1657
        %v1683 = vadd.f32 %v1644, %v1657
        %v1684 = vadd.f32 %v1645, %v1657
        %v1685 = vadd.f32 %v1646, %v1657
        %v1686 = vadd.f32 %v1647, %v1657
        %v1687 = vadd.f32 %v1648, %v1657
        %v1688 = vadd.f32 %v1649, %v1657
        %v1689 = vadd.f32 %v1650, %v1657
        %v1690 = vadd.f32 %v1651, %v1657
        %v1691 = vmax.f32 %v1659, 0.0
        %v1692 = vmax.f32 %v1660, 0.0
        %v1693 = vmax.f32 %v1661, 0.0
        %v1694 = vmax.f32 %v1662, 0.0
        %v1695 = vmax.f32 %v1663, 0.0
        %v1696 = vmax.f32 %v1664, 0.0
        %v1697 = vmax.f32 %v1665, 0.0
        %v1698 = vmax.f32 %v1666, 0.0
        %v1699 = vmax.f32 %v1667, 0.0
        %v1700 = vmax.f32 %v1668, 0.0
        %v1701 = vmax.f32 %v1669, 0.0
        %v1702 = vmax.f32 %v1670, 0.0
        %v1703 = vmax.f32 %v1671, 0.0
        %v1704 = vmax.f32 %v1672, 0.0
        %v1705 = vmax.f32 %v1673, 0.0
        %v1706 = vmax.f32 %v1674, 0.0
        %v1707 = vmax.f32 %v1675, 0.0
        %v1708 = vmax.f32 %v1676, 0.0
        %v1709 = vmax.f32 %v1677, 0.0
        %v1710 = vmax.f32 %v1678, 0.0
        %v1711 = vmax.f32 %v1679, 0.0
        %v1712 = vmax.f32 %v1680, 0.0
        %v1713 = vmax.f32 %v1681, 0.0
        %v1714 = vmax.f32 %v1682, 0.0
        %v1715 = vmax.f32 %v1683, 0.0
        %v1716 = vmax.f32 %v1684, 0.0
        %v1717 = vmax.f32 %v1685, 0.0
        %v1718 = vmax.f32 %v1686, 0.0
        %v1719 = vmax.f32 %v1687, 0.0
        %v1720 = vmax.f32 %v1688, 0.0
        %v1721 = vmax.f32 %v1689, 0.0
        %v1722 = vmax.f32 %v1690, 0.0
        %v1723 = vrot.slane %v1691, 7
        %v1724 = vrot.slane %v1693, 7
        %v1725 = vrot.slane %v1695, 7
        %v1726 = vrot.slane %v1697, 7
        %v1727 = vrot.slane %v1699, 7
        %v1728 = vrot.slane %v1701, 7
        %v1729 = vrot.slane %v1703, 7
        %v1730 = vrot.slane %v1705, 7
        %v1731 = vrot.slane %v1707, 7
        %v1732 = vrot.slane %v1709, 7
        %v1733 = vrot.slane %v1711, 7
        %v1734 = vrot.slane %v1713, 7
        %v1735 = vrot.slane %v1715, 7
        %v1736 = vrot.slane %v1717, 7
        %v1737 = vrot.slane %v1719, 7
        %v1738 = vrot.slane %v1721, 7
        %v1739 = vrot.slane %v1692, 7
        %v1740 = vrot.slane %v1694, 7
        %v1741 = vrot.slane %v1696, 7
        %v1742 = vrot.slane %v1698, 7
        %v1743 = vrot.slane %v1700, 7
        %v1744 = vrot.slane %v1702, 7
        %v1745 = vrot.slane %v1704, 7
        %v1746 = vrot.slane %v1706, 7
        %v1747 = vrot.slane %v1708, 7
        %v1748 = vrot.slane %v1710, 7
        %v1749 = vrot.slane %v1712, 7
        %v1750 = vrot.slane %v1714, 7
        %v1751 = vrot.slane %v1716, 7
        %v1752 = vrot.slane %v1718, 7
        %v1753 = vrot.slane %v1720, 7
        %v1754 = vrot.slane %v1722, 7
        %v1755 = vsel %vm397, %v1723, %v1739
        %v1756 = vsel %vm397, %v1724, %v1740
        %v1757 = vsel %vm397, %v1725, %v1741
        %v1758 = vsel %vm397, %v1726, %v1742
        %v1759 = vsel %vm397, %v1727, %v1743
        %v1760 = vsel %vm397, %v1728, %v1744
        %v1761 = vsel %vm397, %v1729, %v1745
        %v1762 = vsel %vm397, %v1730, %v1746
        %v1763 = vsel %vm397, %v1731, %v1747
        %v1764 = vsel %vm397, %v1732, %v1748
        %v1765 = vsel %vm397, %v1733, %v1749
        %v1766 = vsel %vm397, %v1734, %v1750
        %v1767 = vsel %vm397, %v1735, %v1751
        %v1768 = vsel %vm397, %v1736, %v1752
        %v1769 = vsel %vm397, %v1737, %v1753
        %v1770 = vsel %vm397, %v1738, %v1754
        %v1771 = vsel %vm397, %v1739, %v1723
        %v1772 = vsel %vm397, %v1740, %v1724
        %v1773 = vsel %vm397, %v1741, %v1725
        %v1774 = vsel %vm397, %v1742, %v1726
        %v1775 = vsel %vm397, %v1743, %v1727
        %v1776 = vsel %vm397, %v1744, %v1728
        %v1777 = vsel %vm397, %v1745, %v1729
        %v1778 = vsel %vm397, %v1746, %v1730
        %v1779 = vsel %vm397, %v1747, %v1731
        %v1780 = vsel %vm397, %v1748, %v1732
        %v1781 = vsel %vm397, %v1749, %v1733
        %v1782 = vsel %vm397, %v1750, %v1734
        %v1783 = vsel %vm397, %v1751, %v1735
        %v1784 = vsel %vm397, %v1752, %v1736
        %v1785 = vsel %vm397, %v1753, %v1737
        %v1786 = vsel %vm397, %v1754, %v1738
        %v1787 = vrot.slane %v1691, 1
        %v1788 = vrot.slane %v1693, 1
        %v1789 = vrot.slane %v1695, 1
        %v1790 = vrot.slane %v1697, 1
        %v1791 = vrot.slane %v1699, 1
        %v1792 = vrot.slane %v1701, 1
        %v1793 = vrot.slane %v1703, 1
        %v1794 = vrot.slane %v1705, 1
        %v1795 = vrot.slane %v1707, 1
        %v1796 = vrot.slane %v1709, 1
        %v1797 = vrot.slane %v1711, 1
        %v1798 = vrot.slane %v1713, 1
        %v1799 = vrot.slane %v1715, 1
        %v1800 = vrot.slane %v1717, 1
        %v1801 = vrot.slane %v1719, 1
        %v1802 = vrot.slane %v1721, 1
        %v1803 = vrot.slane %v1692, 1
        %v1804 = vrot.slane %v1694, 1
        %v1805 = vrot.slane %v1696, 1
        %v1806 = vrot.slane %v1698, 1
        %v1807 = vrot.slane %v1700, 1
        %v1808 = vrot.slane %v1702, 1
        %v1809 = vrot.slane %v1704, 1
        %v1810 = vrot.slane %v1706, 1
        %v1811 = vrot.slane %v1708, 1
        %v1812 = vrot.slane %v1710, 1
        %v1813 = vrot.slane %v1712, 1
        %v1814 = vrot.slane %v1714, 1
        %v1815 = vrot.slane %v1716, 1
        %v1816 = vrot.slane %v1718, 1
        %v1817 = vrot.slane %v1720, 1
        %v1818 = vrot.slane %v1722, 1
        %v1819 = vsel %vm462, %v1787, %v1803
        %v1820 = vsel %vm462, %v1788, %v1804
        %v1821 = vsel %vm462, %v1789, %v1805
        %v1822 = vsel %vm462, %v1790, %v1806
        %v1823 = vsel %vm462, %v1791, %v1807
        %v1824 = vsel %vm462, %v1792, %v1808
        %v1825 = vsel %vm462, %v1793, %v1809
        %v1826 = vsel %vm462, %v1794, %v1810
        %v1827 = vsel %vm462, %v1795, %v1811
        %v1828 = vsel %vm462, %v1796, %v1812
        %v1829 = vsel %vm462, %v1797, %v1813
        %v1830 = vsel %vm462, %v1798, %v1814
        %v1831 = vsel %vm462, %v1799, %v1815
        %v1832 = vsel %vm462, %v1800, %v1816
        %v1833 = vsel %vm462, %v1801, %v1817
        %v1834 = vsel %vm462, %v1802, %v1818
        %v1835 = vsel %vm462, %v1803, %v1787
        %v1836 = vsel %vm462, %v1804, %v1788
        %v1837 = vsel %vm462, %v1805, %v1789
        %v1838 = vsel %vm462, %v1806, %v1790
        %v1839 = vsel %vm462, %v1807, %v1791
        %v1840 = vsel %vm462, %v1808, %v1792
        %v1841 = vsel %vm462, %v1809, %v1793
        %v1842 = vsel %vm462, %v1810, %v1794
        %v1843 = vsel %vm462, %v1811, %v1795
        %v1844 = vsel %vm462, %v1812, %v1796
        %v1845 = vsel %vm462, %v1813, %v1797
        %v1846 = vsel %vm462, %v1814, %v1798
        %v1847 = vsel %vm462, %v1815, %v1799
        %v1848 = vsel %vm462, %v1816, %v1800
        %v1849 = vsel %vm462, %v1817, %v1801
        %v1850 = vsel %vm462, %v1818, %v1802
        %1881 = vrot.lane.b32.xlu0 0.0, 8
        %v1882 = vpop.permute.xlu0 %1881
        %1883 = vrot.lane.b32.xlu0 %v1691, 8
        %v1884 = vpop.permute.xlu0 %1883
        %1885 = vrot.lane.b32.xlu0 %v1692, 8
        %v1886 = vpop.permute.xlu0 %1885
        %1887 = vrot.lane.b32.xlu0 %v1693, 8
        %v1888 = vpop.permute.xlu0 %1887
        %1889 = vrot.lane.b32.xlu0 %v1694, 8
        %v1890 = vpop.permute.xlu0 %1889
        %1891 = vrot.lane.b32.xlu0 %v1695, 8
        %v1892 = vpop.permute.xlu0 %1891
        %1893 = vrot.lane.b32.xlu0 %v1696, 8
        %v1894 = vpop.permute.xlu0 %1893
        %1895 = vrot.lane.b32.xlu0 %v1697, 8
        %v1896 = vpop.permute.xlu0 %1895
        %1897 = vrot.lane.b32.xlu0 %v1698, 8
        %v1898 = vpop.permute.xlu0 %1897
        %1899 = vrot.lane.b32.xlu0 %v1699, 8
        %v1900 = vpop.permute.xlu0 %1899
        %1901 = vrot.lane.b32.xlu0 %v1700, 8
        %v1902 = vpop.permute.xlu0 %1901
        %1903 = vrot.lane.b32.xlu0 %v1701, 8
        %v1904 = vpop.permute.xlu0 %1903
        %1905 = vrot.lane.b32.xlu0 %v1702, 8
        %v1906 = vpop.permute.xlu0 %1905
        %1907 = vrot.lane.b32.xlu0 %v1703, 8
        %v1908 = vpop.permute.xlu0 %1907
        %1909 = vrot.lane.b32.xlu0 %v1704, 8
        %v1910 = vpop.permute.xlu0 %1909
        %1911 = vrot.lane.b32.xlu0 %v1705, 8
        %v1912 = vpop.permute.xlu0 %1911
        %1913 = vrot.lane.b32.xlu0 %v1706, 8
        %v1914 = vpop.permute.xlu0 %1913
        %1915 = vrot.lane.b32.xlu0 %v1707, 8
        %v1916 = vpop.permute.xlu0 %1915
        %1917 = vrot.lane.b32.xlu0 %v1708, 8
        %v1918 = vpop.permute.xlu0 %1917
        %1919 = vrot.lane.b32.xlu0 %v1709, 8
        %v1920 = vpop.permute.xlu0 %1919
        %1921 = vrot.lane.b32.xlu0 %v1710, 8
        %v1922 = vpop.permute.xlu0 %1921
        %1923 = vrot.lane.b32.xlu0 %v1711, 8
        %v1924 = vpop.permute.xlu0 %1923
        %1925 = vrot.lane.b32.xlu0 %v1712, 8
        %v1926 = vpop.permute.xlu0 %1925
        %1927 = vrot.lane.b32.xlu0 %v1713, 8
        %v1928 = vpop.permute.xlu0 %1927
        %1929 = vrot.lane.b32.xlu0 %v1714, 8
        %v1930 = vpop.permute.xlu0 %1929
        %1931 = vrot.lane.b32.xlu0 %v1715, 8
        %v1932 = vpop.permute.xlu0 %1931
        %1933 = vrot.lane.b32.xlu0 %v1716, 8
        %v1934 = vpop.permute.xlu0 %1933
        %1935 = vrot.lane.b32.xlu0 %v1717, 8
        %v1936 = vpop.permute.xlu0 %1935
        %1937 = vrot.lane.b32.xlu0 %v1718, 8
        %v1938 = vpop.permute.xlu0 %1937
        %1939 = vrot.lane.b32.xlu0 %v1719, 8
        %v1940 = vpop.permute.xlu0 %1939
        %1941 = vrot.lane.b32.xlu0 %v1720, 8
        %v1942 = vpop.permute.xlu0 %1941
        %2004 = vrot.lane.b32.xlu0 0.0, 16
        %v2005 = vpop.permute.xlu0 %2004
        %2006 = vrot.lane.b32.xlu0 %v1819, 16
        %v2007 = vpop.permute.xlu0 %2006
        %2008 = vrot.lane.b32.xlu0 %v1835, 16
        %v2009 = vpop.permute.xlu0 %2008
        %2010 = vrot.lane.b32.xlu0 %v1820, 16
        %v2011 = vpop.permute.xlu0 %2010
        %2012 = vrot.lane.b32.xlu0 %v1836, 16
        %v2013 = vpop.permute.xlu0 %2012
        %2014 = vrot.lane.b32.xlu0 %v1821, 16
        %v2015 = vpop.permute.xlu0 %2014
        %2016 = vrot.lane.b32.xlu0 %v1837, 16
        %v2017 = vpop.permute.xlu0 %2016
        %2018 = vrot.lane.b32.xlu0 %v1822, 16
        %v2019 = vpop.permute.xlu0 %2018
        %2020 = vrot.lane.b32.xlu0 %v1838, 16
        %v2021 = vpop.permute.xlu0 %2020
        %2022 = vrot.lane.b32.xlu0 %v1823, 16
        %v2023 = vpop.permute.xlu0 %2022
        %2024 = vrot.lane.b32.xlu0 %v1839, 16
        %v2025 = vpop.permute.xlu0 %2024
        %2026 = vrot.lane.b32.xlu0 %v1824, 16
        %v2027 = vpop.permute.xlu0 %2026
        %2028 = vrot.lane.b32.xlu0 %v1840, 16
        %v2029 = vpop.permute.xlu0 %2028
        %2030 = vrot.lane.b32.xlu0 %v1825, 16
        %v2031 = vpop.permute.xlu0 %2030
        %2032 = vrot.lane.b32.xlu0 %v1841, 16
        %v2033 = vpop.permute.xlu0 %2032
        %2034 = vrot.lane.b32.xlu0 %v1826, 16
        %v2035 = vpop.permute.xlu0 %2034
        %2036 = vrot.lane.b32.xlu0 %v1842, 16
        %v2037 = vpop.permute.xlu0 %2036
        %2038 = vrot.lane.b32.xlu0 %v1827, 16
        %v2039 = vpop.permute.xlu0 %2038
        %2040 = vrot.lane.b32.xlu0 %v1843, 16
        %v2041 = vpop.permute.xlu0 %2040
        %2042 = vrot.lane.b32.xlu0 %v1828, 16
        %v2043 = vpop.permute.xlu0 %2042
        %2044 = vrot.lane.b32.xlu0 %v1844, 16
        %v2045 = vpop.permute.xlu0 %2044
        %2046 = vrot.lane.b32.xlu0 %v1829, 16
        %v2047 = vpop.permute.xlu0 %2046
        %2048 = vrot.lane.b32.xlu0 %v1845, 16
        %v2049 = vpop.permute.xlu0 %2048
        %2050 = vrot.lane.b32.xlu0 %v1830, 16
        %v2051 = vpop.permute.xlu0 %2050
        %2052 = vrot.lane.b32.xlu0 %v1846, 16
        %v2053 = vpop.permute.xlu0 %2052
        %2054 = vrot.lane.b32.xlu0 %v1831, 16
        %v2055 = vpop.permute.xlu0 %2054
        %2056 = vrot.lane.b32.xlu0 %v1847, 16
        %v2057 = vpop.permute.xlu0 %2056
        %2058 = vrot.lane.b32.xlu0 %v1832, 16
        %v2059 = vpop.permute.xlu0 %2058
        %2060 = vrot.lane.b32.xlu0 %v1848, 16
        %v2061 = vpop.permute.xlu0 %2060
        %2062 = vrot.lane.b32.xlu0 %v1833, 16
        %v2063 = vpop.permute.xlu0 %2062
        %2064 = vrot.lane.b32.xlu0 %v1849, 16
        %v2065 = vpop.permute.xlu0 %2064
        %v2097 = vsel %vm775, 0.0, %v1882
        %v2098 = vsel %vm775, %v1771, %v1884
        %v2099 = vsel %vm775, %v1755, %v1886
        %v2100 = vsel %vm775, %v1772, %v1888
        %v2101 = vsel %vm775, %v1756, %v1890
        %v2102 = vsel %vm775, %v1773, %v1892
        %v2103 = vsel %vm775, %v1757, %v1894
        %v2104 = vsel %vm775, %v1774, %v1896
        %v2105 = vsel %vm775, %v1758, %v1898
        %v2106 = vsel %vm775, %v1775, %v1900
        %v2107 = vsel %vm775, %v1759, %v1902
        %v2108 = vsel %vm775, %v1776, %v1904
        %v2109 = vsel %vm775, %v1760, %v1906
        %v2110 = vsel %vm775, %v1777, %v1908
        %v2111 = vsel %vm775, %v1761, %v1910
        %v2112 = vsel %vm775, %v1778, %v1912
        %v2113 = vsel %vm775, %v1762, %v1914
        %v2114 = vsel %vm775, %v1779, %v1916
        %v2115 = vsel %vm775, %v1763, %v1918
        %v2116 = vsel %vm775, %v1780, %v1920
        %v2117 = vsel %vm775, %v1764, %v1922
        %v2118 = vsel %vm775, %v1781, %v1924
        %v2119 = vsel %vm775, %v1765, %v1926
        %v2120 = vsel %vm775, %v1782, %v1928
        %v2121 = vsel %vm775, %v1766, %v1930
        %v2122 = vsel %vm775, %v1783, %v1932
        %v2123 = vsel %vm775, %v1767, %v1934
        %v2124 = vsel %vm775, %v1784, %v1936
        %v2125 = vsel %vm775, %v1768, %v1938
        %v2126 = vsel %vm775, %v1785, %v1940
        %v2127 = vsel %vm775, %v1769, %v1942
        %vm2128 = vcmask 130048
        %v2129 = vsel %vm2128, %v2097, %v2005
        %v2130 = vsel %vm2128, %v2098, %v2007
        %v2131 = vsel %vm2128, %v2099, %v2009
        %v2132 = vsel %vm2128, %v2100, %v2011
        %v2133 = vsel %vm2128, %v2101, %v2013
        %v2134 = vsel %vm2128, %v2102, %v2015
        %v2135 = vsel %vm2128, %v2103, %v2017
        %v2136 = vsel %vm2128, %v2104, %v2019
        %v2137 = vsel %vm2128, %v2105, %v2021
        %v2138 = vsel %vm2128, %v2106, %v2023
        %v2139 = vsel %vm2128, %v2107, %v2025
        %v2140 = vsel %vm2128, %v2108, %v2027
        %v2141 = vsel %vm2128, %v2109, %v2029
        %v2142 = vsel %vm2128, %v2110, %v2031
        %v2143 = vsel %vm2128, %v2111, %v2033
        %v2144 = vsel %vm2128, %v2112, %v2035
        %v2145 = vsel %vm2128, %v2113, %v2037
        %v2146 = vsel %vm2128, %v2114, %v2039
        %v2147 = vsel %vm2128, %v2115, %v2041
        %v2148 = vsel %vm2128, %v2116, %v2043
        %v2149 = vsel %vm2128, %v2117, %v2045
        %v2150 = vsel %vm2128, %v2118, %v2047
        %v2151 = vsel %vm2128, %v2119, %v2049
        %v2152 = vsel %vm2128, %v2120, %v2051
        %v2153 = vsel %vm2128, %v2121, %v2053
        %v2154 = vsel %vm2128, %v2122, %v2055
        %v2155 = vsel %vm2128, %v2123, %v2057
        %v2156 = vsel %vm2128, %v2124, %v2059
        %v2157 = vsel %vm2128, %v2125, %v2061
        %v2158 = vsel %vm2128, %v2126, %v2063
        %v2159 = vsel %vm2128, %v2127, %v2065
        %v2160 = vld [vmem:[%s3] sm:$0xff]
        %v2161 = vld [vmem:[%s3 + $0x8] sm:$0xff]
        %v2162 = vld [vmem:[%s3 + $0x10] sm:$0xff]
        %2165 = vrot.lane.b32.xlu0 %v1721, 8
        %v2166 = vpop.permute.xlu0 %2165
        %2167 = vrot.lane.b32.xlu0 %v1722, 8
        %v2168 = vpop.permute.xlu0 %2167
        %2173 = vrot.lane.b32.xlu0 %v1834, 16
        %v2174 = vpop.permute.xlu0 %2173
        %2175 = vrot.lane.b32.xlu0 %v1850, 16
        %v2176 = vpop.permute.xlu0 %2175
        %v2179 = vsel %vm775, %v1786, %v2166
        %v2180 = vsel %vm775, %v1770, %v2168
        %v2181 = vsel %vm2128, %v2179, %v2174
        %v2182 = vsel %vm2128, %v2180, %v2176
        %s2183 = scalar_lea.vmem %s3, 24
        %v2184 = vld [vmem:[%s2183] sm:$0xff]
        %v2185 = vld [vmem:[%s2183 + $0x8] sm:$0xff]
        %v2186 = vld [vmem:[%s2183 + $0x10] sm:$0xff]
        %vm2187 = vcmask 195584
        %v2189 = vsel %vm2187, %v2130, 0
        %v2192 = vsel %vm2187, %v2131, 0
        %v2195 = vsel %vm2187, %v2132, 0
        %v2198 = vsel %vm2187, %v2133, 0
        %v2201 = vsel %vm2187, %v2134, 0
        %v2204 = vsel %vm2187, %v2135, 0
        %v2207 = vsel %vm2187, %v2136, 0
        %v2210 = vsel %vm2187, %v2137, 0
        %v2213 = vsel %vm2187, %v2138, 0
        %v2216 = vsel %vm2187, %v2139, 0
        %v2219 = vsel %vm2187, %v2140, 0
        %v2222 = vsel %vm2187, %v2141, 0
        %v2225 = vsel %vm2187, %v2142, 0
        %v2228 = vsel %vm2187, %v2143, 0
        %v2231 = vsel %vm2187, %v2144, 0
        %v2234 = vsel %vm2187, %v2145, 0
        %v2237 = vsel %vm2187, %v2146, 0
        %v2240 = vsel %vm2187, %v2147, 0
        %v2243 = vsel %vm2187, %v2148, 0
        %v2246 = vsel %vm2187, %v2149, 0
        %v2249 = vsel %vm2187, %v2150, 0
        %v2252 = vsel %vm2187, %v2151, 0
        %v2255 = vsel %vm2187, %v2152, 0
        %v2258 = vsel %vm2187, %v2153, 0
        %v2261 = vsel %vm2187, %v2154, 0
        %v2264 = vsel %vm2187, %v2155, 0
        %v2267 = vsel %vm2187, %v2156, 0
        %v2270 = vsel %vm2187, %v2157, 0
        %v2273 = vsel %vm2187, %v2158, 0
        %v2276 = vsel %vm2187, %v2159, 0
        %v2279 = vsel %vm2187, %v2181, 0
        %v2282 = vsel %vm2187, %v2182, 0
        %2284 = vmatprep.subr.mxu0 0.0
        %2285 = vmatpush1.msra.mxu0 %v2184
        %2286 = vmatprep.subr.mxu0 0.0
        %2287 = vmatpush1.msra.mxu0 %v2185
        %2288 = vmatprep.subr.mxu0 0.0
        %2289 = vmatpush1.msra.mxu0 %v2186
        %2290 = vmatprep.subr.mxu0 0.0
        %2291 = vmatpush1.msra.mxu0 0.0
        %2292 = vmatprep.subr.mxu0 0.0
        %2293 = vmatpush1.msra.mxu0 0.0
        %2294 = vmatprep.subr.mxu0 0.0
        %2295 = vmatpush1.msra.mxu0 0.0
        %2296 = vmatprep.subr.mxu0 0.0
        %2297 = vmatpush1.msra.mxu0 0.0
        %2298 = vmatprep.subr.mxu0 0.0
        %2299 = vmatpush1.msra.mxu0 0.0
        %2300 = vmatprep.subr.mxu0 0.0
        %2301 = vmatpush1.msra.mxu0 0.0
        %2302 = vmatprep.subr.mxu0 0.0
        %2303 = vmatpush1.msra.mxu0 0.0
        %2304 = vmatprep.subr.mxu0 0.0
        %2305 = vmatpush1.msra.mxu0 0.0
        %2306 = vmatprep.subr.mxu0 0.0
        %2307 = vmatpush1.msra.mxu0 0.0
        %2308 = vmatprep.subr.mxu0 0.0
        %2309 = vmatpush1.msra.mxu0 0.0
        %2310 = vmatprep.subr.mxu0 0.0
        %2311 = vmatpush1.msra.mxu0 0.0
        %2312 = vmatprep.subr.mxu0 0.0
        %2313 = vmatpush1.msra.mxu0 0.0
        %2314 = vmatprep.subr.mxu0 0.0
        %2315 = vmatpush1.msra.mxu0 0.0
        %2316 = vmatprep.subr.mxu0 0.0
        %2317 = vmatpush1.msra.mxu0 0.0
        %2318 = vmatprep.subr.mxu0 0.0
        %2319 = vmatpush1.msra.mxu0 0.0
        %2320 = vmatprep.subr.mxu0 0.0
        %2321 = vmatpush1.msra.mxu0 0.0
        %2322 = vmatprep.subr.mxu0 0.0
        %2323 = vmatpush1.msra.mxu0 0.0
        %2324 = vmatprep.subr.mxu0 0.0
        %2325 = vmatpush1.msra.mxu0 0.0
        %2326 = vmatprep.subr.mxu0 0.0
        %2327 = vmatpush1.msra.mxu0 0.0
        %2328 = vmatprep.subr.mxu0 0.0
        %2329 = vmatpush1.msra.mxu0 0.0
        %2330 = vmatprep.subr.mxu0 0.0
        %2331 = vmatpush1.msra.mxu0 0.0
        %2332 = vmatprep.subr.mxu0 0.0
        %2333 = vmatpush1.msra.mxu0 0.0
        %2334 = vmatprep.subr.mxu0 0.0
        %2335 = vmatpush1.msra.mxu0 0.0
        %2336 = vmatprep.subr.mxu0 0.0
        %2337 = vmatpush1.msra.mxu0 0.0
        %2338 = vmatprep.subr.mxu0 0.0
        %2339 = vmatpush1.msra.mxu0 0.0
        %2340 = vmatprep.subr.mxu0 0.0
        %2341 = vmatpush1.msra.mxu0 0.0
        %2342 = vmatprep.subr.mxu0 0.0
        %2343 = vmatpush1.msra.mxu0 0.0
        %2344 = vmatprep.subr.mxu0 0.0
        %2345 = vmatpush1.msra.mxu0 0.0
        %2346 = vmatprep.subr.mxu0 0.0
        %2347 = vmatpush1.msra.mxu0 0.0
        %2348 = vmatprep.mubr.f32.mxu0 0.0
        %2349 = vmatmul.mubr.f32.gmra.mrb[0].mxu0 %v2189
        %v2350 = vpop.f32.mrb[0].mxu0
        %v2351 = vadd.f32 0.0, %v2350
        %v2352 = vpop.f32.mrb[0].mxu0
        %2353 = vmatprep.mubr.f32.mxu0 0.0
        %2354 = vmatmul.mubr.f32.gmra.mrb[0].mxu0 %v2192
        %v2355 = vpop.f32.mrb[0].mxu0
        %v2356 = vadd.f32 0.0, %v2355
        %v2357 = vpop.f32.mrb[0].mxu0
        %2358 = vmatprep.mubr.f32.mxu0 0.0
        %2359 = vmatmul.mubr.f32.gmra.mrb[0].mxu0 %v2195
        %v2360 = vpop.f32.mrb[0].mxu0
        %v2361 = vadd.f32 0.0, %v2360
        %v2362 = vpop.f32.mrb[0].mxu0
        %2363 = vmatprep.mubr.f32.mxu0 0.0
        %2364 = vmatmul.mubr.f32.gmra.mrb[0].mxu0 %v2198
        %v2365 = vpop.f32.mrb[0].mxu0
        %v2366 = vadd.f32 0.0, %v2365
        %v2367 = vpop.f32.mrb[0].mxu0
        %2368 = vmatprep.mubr.f32.mxu0 0.0
        %2369 = vmatmul.mubr.f32.gmra.mrb[0].mxu0 %v2201
        %v2370 = vpop.f32.mrb[0].mxu0
        %v2371 = vadd.f32 0.0, %v2370
        %v2372 = vpop.f32.mrb[0].mxu0
        %2373 = vmatprep.mubr.f32.mxu0 0.0
        %2374 = vmatmul.mubr.f32.gmra.mrb[0].mxu0 %v2204
        %v2375 = vpop.f32.mrb[0].mxu0
        %v2376 = vadd.f32 0.0, %v2375
        %v2377 = vpop.f32.mrb[0].mxu0
        %2378 = vmatprep.mubr.f32.mxu0 0.0
        %2379 = vmatmul.mubr.f32.gmra.mrb[0].mxu0 %v2207
        %v2380 = vpop.f32.mrb[0].mxu0
        %v2381 = vadd.f32 0.0, %v2380
        %v2382 = vpop.f32.mrb[0].mxu0
        %2383 = vmatprep.mubr.f32.mxu0 0.0
        %2384 = vmatmul.mubr.f32.gmra.mrb[0].mxu0 %v2210
        %v2385 = vpop.f32.mrb[0].mxu0
        %v2386 = vadd.f32 0.0, %v2385
        %v2387 = vpop.f32.mrb[0].mxu0
        %2388 = vmatprep.mubr.f32.mxu0 0.0
        %2389 = vmatmul.mubr.f32.gmra.mrb[0].mxu0 %v2213
        %v2390 = vpop.f32.mrb[0].mxu0
        %v2391 = vadd.f32 0.0, %v2390
        %v2392 = vpop.f32.mrb[0].mxu0
        %2393 = vmatprep.mubr.f32.mxu0 0.0
        %2394 = vmatmul.mubr.f32.gmra.mrb[0].mxu0 %v2216
        %v2395 = vpop.f32.mrb[0].mxu0
        %v2396 = vadd.f32 0.0, %v2395
        %v2397 = vpop.f32.mrb[0].mxu0
        %2398 = vmatprep.mubr.f32.mxu0 0.0
        %2399 = vmatmul.mubr.f32.gmra.mrb[0].mxu0 %v2219
        %v2400 = vpop.f32.mrb[0].mxu0
        %v2401 = vadd.f32 0.0, %v2400
        %v2402 = vpop.f32.mrb[0].mxu0
        %2403 = vmatprep.mubr.f32.mxu0 0.0
        %2404 = vmatmul.mubr.f32.gmra.mrb[0].mxu0 %v2222
        %v2405 = vpop.f32.mrb[0].mxu0
        %v2406 = vadd.f32 0.0, %v2405
        %v2407 = vpop.f32.mrb[0].mxu0
        %2408 = vmatprep.mubr.f32.mxu0 0.0
        %2409 = vmatmul.mubr.f32.gmra.mrb[0].mxu0 %v2225
        %v2410 = vpop.f32.mrb[0].mxu0
        %v2411 = vadd.f32 0.0, %v2410
        %v2412 = vpop.f32.mrb[0].mxu0
        %2413 = vmatprep.mubr.f32.mxu0 0.0
        %2414 = vmatmul.mubr.f32.gmra.mrb[0].mxu0 %v2228
        %v2415 = vpop.f32.mrb[0].mxu0
        %v2416 = vadd.f32 0.0, %v2415
        %v2417 = vpop.f32.mrb[0].mxu0
        %2418 = vmatprep.mubr.f32.mxu0 0.0
        %2419 = vmatmul.mubr.f32.gmra.mrb[0].mxu0 %v2231
        %v2420 = vpop.f32.mrb[0].mxu0
        %v2421 = vadd.f32 0.0, %v2420
        %v2422 = vpop.f32.mrb[0].mxu0
        %2423 = vmatprep.mubr.f32.mxu0 0.0
        %2424 = vmatmul.mubr.f32.gmra.mrb[0].mxu0 %v2234
        %v2425 = vpop.f32.mrb[0].mxu0
        %v2426 = vadd.f32 0.0, %v2425
        %v2427 = vpop.f32.mrb[0].mxu0
        %2428 = vmatprep.mubr.f32.mxu0 0.0
        %2429 = vmatmul.mubr.f32.gmra.mrb[0].mxu0 %v2237
        %v2430 = vpop.f32.mrb[0].mxu0
        %v2431 = vadd.f32 0.0, %v2430
        %v2432 = vpop.f32.mrb[0].mxu0
        %2433 = vmatprep.mubr.f32.mxu0 0.0
        %2434 = vmatmul.mubr.f32.gmra.mrb[0].mxu0 %v2240
        %v2435 = vpop.f32.mrb[0].mxu0
        %v2436 = vadd.f32 0.0, %v2435
        %v2437 = vpop.f32.mrb[0].mxu0
        %2438 = vmatprep.mubr.f32.mxu0 0.0
        %2439 = vmatmul.mubr.f32.gmra.mrb[0].mxu0 %v2243
        %v2440 = vpop.f32.mrb[0].mxu0
        %v2441 = vadd.f32 0.0, %v2440
        %v2442 = vpop.f32.mrb[0].mxu0
        %2443 = vmatprep.mubr.f32.mxu0 0.0
        %2444 = vmatmul.mubr.f32.gmra.mrb[0].mxu0 %v2246
        %v2445 = vpop.f32.mrb[0].mxu0
        %v2446 = vadd.f32 0.0, %v2445
        %v2447 = vpop.f32.mrb[0].mxu0
        %2448 = vmatprep.mubr.f32.mxu0 0.0
        %2449 = vmatmul.mubr.f32.gmra.mrb[0].mxu0 %v2249
        %v2450 = vpop.f32.mrb[0].mxu0
        %v2451 = vadd.f32 0.0, %v2450
        %v2452 = vpop.f32.mrb[0].mxu0
        %2453 = vmatprep.mubr.f32.mxu0 0.0
        %2454 = vmatmul.mubr.f32.gmra.mrb[0].mxu0 %v2252
        %v2455 = vpop.f32.mrb[0].mxu0
        %v2456 = vadd.f32 0.0, %v2455
        %v2457 = vpop.f32.mrb[0].mxu0
        %2458 = vmatprep.mubr.f32.mxu0 0.0
        %2459 = vmatmul.mubr.f32.gmra.mrb[0].mxu0 %v2255
        %v2460 = vpop.f32.mrb[0].mxu0
        %v2461 = vadd.f32 0.0, %v2460
        %v2462 = vpop.f32.mrb[0].mxu0
        %2463 = vmatprep.mubr.f32.mxu0 0.0
        %2464 = vmatmul.mubr.f32.gmra.mrb[0].mxu0 %v2258
        %v2465 = vpop.f32.mrb[0].mxu0
        %v2466 = vadd.f32 0.0, %v2465
        %v2467 = vpop.f32.mrb[0].mxu0
        %2468 = vmatprep.mubr.f32.mxu0 0.0
        %2469 = vmatmul.mubr.f32.gmra.mrb[0].mxu0 %v2261
        %v2470 = vpop.f32.mrb[0].mxu0
        %v2471 = vadd.f32 0.0, %v2470
        %v2472 = vpop.f32.mrb[0].mxu0
        %2473 = vmatprep.mubr.f32.mxu0 0.0
        %2474 = vmatmul.mubr.f32.gmra.mrb[0].mxu0 %v2264
        %v2475 = vpop.f32.mrb[0].mxu0
        %v2476 = vadd.f32 0.0, %v2475
        %v2477 = vpop.f32.mrb[0].mxu0
        %2478 = vmatprep.mubr.f32.mxu0 0.0
        %2479 = vmatmul.mubr.f32.gmra.mrb[0].mxu0 %v2267
        %v2480 = vpop.f32.mrb[0].mxu0
        %v2481 = vadd.f32 0.0, %v2480
        %v2482 = vpop.f32.mrb[0].mxu0
        %2483 = vmatprep.mubr.f32.mxu0 0.0
        %2484 = vmatmul.mubr.f32.gmra.mrb[0].mxu0 %v2270
        %v2485 = vpop.f32.mrb[0].mxu0
        %v2486 = vadd.f32 0.0, %v2485
        %v2487 = vpop.f32.mrb[0].mxu0
        %2488 = vmatprep.mubr.f32.mxu0 0.0
        %2489 = vmatmul.mubr.f32.gmra.mrb[0].mxu0 %v2273
        %v2490 = vpop.f32.mrb[0].mxu0
        %v2491 = vadd.f32 0.0, %v2490
        %v2492 = vpop.f32.mrb[0].mxu0
        %2493 = vmatprep.mubr.f32.mxu0 0.0
        %2494 = vmatmul.mubr.f32.gmra.mrb[0].mxu0 %v2276
        %v2495 = vpop.f32.mrb[0].mxu0
        %v2496 = vadd.f32 0.0, %v2495
        %v2497 = vpop.f32.mrb[0].mxu0
        %2498 = vmatprep.mubr.f32.mxu0 0.0
        %2499 = vmatmul.mubr.f32.gmra.mrb[0].mxu0 %v2279
        %v2500 = vpop.f32.mrb[0].mxu0
        %v2501 = vadd.f32 0.0, %v2500
        %v2502 = vpop.f32.mrb[0].mxu0
        %2503 = vmatprep.mubr.f32.mxu0 0.0
        %2504 = vmatmul.mubr.f32.gmra.mrb[0].mxu0 %v2282
        %v2505 = vpop.f32.mrb[0].mxu0
        %v2506 = vadd.f32 0.0, %v2505
        %v2507 = vpop.f32.mrb[0].mxu0
        %2508 = vdwg.mxu0
        %v2510 = vsel %vm2187, %v2129, 0
        %2512 = vmatprep.subr.mxu0 0.0
        %2513 = vmatpush1.msra.mxu0 %v2160
        %2514 = vmatprep.subr.mxu0 0.0
        %2515 = vmatpush1.msra.mxu0 %v2161
        %2516 = vmatprep.subr.mxu0 0.0
        %2517 = vmatpush1.msra.mxu0 %v2162
        %2518 = vmatprep.subr.mxu0 0.0
        %2519 = vmatpush1.msra.mxu0 0.0
        %2520 = vmatprep.subr.mxu0 0.0
        %2521 = vmatpush1.msra.mxu0 0.0
        %2522 = vmatprep.subr.mxu0 0.0
        %2523 = vmatpush1.msra.mxu0 0.0
        %2524 = vmatprep.subr.mxu0 0.0
        %2525 = vmatpush1.msra.mxu0 0.0
        %2526 = vmatprep.subr.mxu0 0.0
        %2527 = vmatpush1.msra.mxu0 0.0
        %2528 = vmatprep.subr.mxu0 0.0
        %2529 = vmatpush1.msra.mxu0 0.0
        %2530 = vmatprep.subr.mxu0 0.0
        %2531 = vmatpush1.msra.mxu0 0.0
        %2532 = vmatprep.subr.mxu0 0.0
        %2533 = vmatpush1.msra.mxu0 0.0
        %2534 = vmatprep.subr.mxu0 0.0
        %2535 = vmatpush1.msra.mxu0 0.0
        %2536 = vmatprep.subr.mxu0 0.0
        %2537 = vmatpush1.msra.mxu0 0.0
        %2538 = vmatprep.subr.mxu0 0.0
        %2539 = vmatpush1.msra.mxu0 0.0
        %2540 = vmatprep.subr.mxu0 0.0
        %2541 = vmatpush1.msra.mxu0 0.0
        %2542 = vmatprep.subr.mxu0 0.0
        %2543 = vmatpush1.msra.mxu0 0.0
        %2544 = vmatprep.subr.mxu0 0.0
        %2545 = vmatpush1.msra.mxu0 0.0
        %2546 = vmatprep.subr.mxu0 0.0
        %2547 = vmatpush1.msra.mxu0 0.0
        %2548 = vmatprep.subr.mxu0 0.0
        %2549 = vmatpush1.msra.mxu0 0.0
        %2550 = vmatprep.subr.mxu0 0.0
        %2551 = vmatpush1.msra.mxu0 0.0
        %2552 = vmatprep.subr.mxu0 0.0
        %2553 = vmatpush1.msra.mxu0 0.0
        %2554 = vmatprep.subr.mxu0 0.0
        %2555 = vmatpush1.msra.mxu0 0.0
        %2556 = vmatprep.subr.mxu0 0.0
        %2557 = vmatpush1.msra.mxu0 0.0
        %2558 = vmatprep.subr.mxu0 0.0
        %2559 = vmatpush1.msra.mxu0 0.0
        %2560 = vmatprep.subr.mxu0 0.0
        %2561 = vmatpush1.msra.mxu0 0.0
        %2562 = vmatprep.subr.mxu0 0.0
        %2563 = vmatpush1.msra.mxu0 0.0
        %2564 = vmatprep.subr.mxu0 0.0
        %2565 = vmatpush1.msra.mxu0 0.0
        %2566 = vmatprep.subr.mxu0 0.0
        %2567 = vmatpush1.msra.mxu0 0.0
        %2568 = vmatprep.subr.mxu0 0.0
        %2569 = vmatpush1.msra.mxu0 0.0
        %2570 = vmatprep.subr.mxu0 0.0
        %2571 = vmatpush1.msra.mxu0 0.0
        %2572 = vmatprep.subr.mxu0 0.0
        %2573 = vmatpush1.msra.mxu0 0.0
        %2574 = vmatprep.subr.mxu0 0.0
        %2575 = vmatpush1.msra.mxu0 0.0
        %2576 = vmatprep.mubr.f32.mxu0 0.0
        %2577 = vmatmul.mubr.f32.gmra.mrb[0].mxu0 %v2510
        %v2578 = vpop.f32.mrb[0].mxu0
        %v2579 = vadd.f32 %v2351, %v2578
        %v2580 = vpop.f32.mrb[0].mxu0
        %2581 = vmatprep.mubr.f32.mxu0 0.0
        %2582 = vmatmul.mubr.f32.gmra.mrb[0].mxu0 %v2510
        %v2583 = vpop.f32.mrb[0].mxu0
        %v2584 = vadd.f32 %v2356, %v2583
        %v2585 = vpop.f32.mrb[0].mxu0
        %2586 = vmatprep.mubr.f32.mxu0 0.0
        %2587 = vmatmul.mubr.f32.gmra.mrb[0].mxu0 %v2189
        %v2588 = vpop.f32.mrb[0].mxu0
        %v2589 = vadd.f32 %v2361, %v2588
        %v2590 = vpop.f32.mrb[0].mxu0
        %2591 = vmatprep.mubr.f32.mxu0 0.0
        %2592 = vmatmul.mubr.f32.gmra.mrb[0].mxu0 %v2192
        %v2593 = vpop.f32.mrb[0].mxu0
        %v2594 = vadd.f32 %v2366, %v2593
        %v2595 = vpop.f32.mrb[0].mxu0
        %2596 = vmatprep.mubr.f32.mxu0 0.0
        %2597 = vmatmul.mubr.f32.gmra.mrb[0].mxu0 %v2195
        %v2598 = vpop.f32.mrb[0].mxu0
        %v2599 = vadd.f32 %v2371, %v2598
        %v2600 = vpop.f32.mrb[0].mxu0
        %2601 = vmatprep.mubr.f32.mxu0 0.0
        %2602 = vmatmul.mubr.f32.gmra.mrb[0].mxu0 %v2198
        %v2603 = vpop.f32.mrb[0].mxu0
        %v2604 = vadd.f32 %v2376, %v2603
        %v2605 = vpop.f32.mrb[0].mxu0
        %2606 = vmatprep.mubr.f32.mxu0 0.0
        %2607 = vmatmul.mubr.f32.gmra.mrb[0].mxu0 %v2201
        %v2608 = vpop.f32.mrb[0].mxu0
        %v2609 = vadd.f32 %v2381, %v2608
        %v2610 = vpop.f32.mrb[0].mxu0
        %2611 = vmatprep.mubr.f32.mxu0 0.0
        %2612 = vmatmul.mubr.f32.gmra.mrb[0].mxu0 %v2204
        %v2613 = vpop.f32.mrb[0].mxu0
        %v2614 = vadd.f32 %v2386, %v2613
        %v2615 = vpop.f32.mrb[0].mxu0
        %2616 = vmatprep.mubr.f32.mxu0 0.0
        %2617 = vmatmul.mubr.f32.gmra.mrb[0].mxu0 %v2207
        %v2618 = vpop.f32.mrb[0].mxu0
        %v2619 = vadd.f32 %v2391, %v2618
        %v2620 = vpop.f32.mrb[0].mxu0
        %2621 = vmatprep.mubr.f32.mxu0 0.0
        %2622 = vmatmul.mubr.f32.gmra.mrb[0].mxu0 %v2210
        %v2623 = vpop.f32.mrb[0].mxu0
        %v2624 = vadd.f32 %v2396, %v2623
        %v2625 = vpop.f32.mrb[0].mxu0
        %2626 = vmatprep.mubr.f32.mxu0 0.0
        %2627 = vmatmul.mubr.f32.gmra.mrb[0].mxu0 %v2213
        %v2628 = vpop.f32.mrb[0].mxu0
        %v2629 = vadd.f32 %v2401, %v2628
        %v2630 = vpop.f32.mrb[0].mxu0
        %2631 = vmatprep.mubr.f32.mxu0 0.0
        %2632 = vmatmul.mubr.f32.gmra.mrb[0].mxu0 %v2216
        %v2633 = vpop.f32.mrb[0].mxu0
        %v2634 = vadd.f32 %v2406, %v2633
        %v2635 = vpop.f32.mrb[0].mxu0
        %2636 = vmatprep.mubr.f32.mxu0 0.0
        %2637 = vmatmul.mubr.f32.gmra.mrb[0].mxu0 %v2219
        %v2638 = vpop.f32.mrb[0].mxu0
        %v2639 = vadd.f32 %v2411, %v2638
        %v2640 = vpop.f32.mrb[0].mxu0
        %2641 = vmatprep.mubr.f32.mxu0 0.0
        %2642 = vmatmul.mubr.f32.gmra.mrb[0].mxu0 %v2222
        %v2643 = vpop.f32.mrb[0].mxu0
        %v2644 = vadd.f32 %v2416, %v2643
        %v2645 = vpop.f32.mrb[0].mxu0
        %2646 = vmatprep.mubr.f32.mxu0 0.0
        %2647 = vmatmul.mubr.f32.gmra.mrb[0].mxu0 %v2225
        %v2648 = vpop.f32.mrb[0].mxu0
        %v2649 = vadd.f32 %v2421, %v2648
        %v2650 = vpop.f32.mrb[0].mxu0
        %2651 = vmatprep.mubr.f32.mxu0 0.0
        %2652 = vmatmul.mubr.f32.gmra.mrb[0].mxu0 %v2228
        %v2653 = vpop.f32.mrb[0].mxu0
        %v2654 = vadd.f32 %v2426, %v2653
        %v2655 = vpop.f32.mrb[0].mxu0
        %2656 = vmatprep.mubr.f32.mxu0 0.0
        %2657 = vmatmul.mubr.f32.gmra.mrb[0].mxu0 %v2231
        %v2658 = vpop.f32.mrb[0].mxu0
        %v2659 = vadd.f32 %v2431, %v2658
        %v2660 = vpop.f32.mrb[0].mxu0
        %2661 = vmatprep.mubr.f32.mxu0 0.0
        %2662 = vmatmul.mubr.f32.gmra.mrb[0].mxu0 %v2234
        %v2663 = vpop.f32.mrb[0].mxu0
        %v2664 = vadd.f32 %v2436, %v2663
        %v2665 = vpop.f32.mrb[0].mxu0
        %2666 = vmatprep.mubr.f32.mxu0 0.0
        %2667 = vmatmul.mubr.f32.gmra.mrb[0].mxu0 %v2237
        %v2668 = vpop.f32.mrb[0].mxu0
        %v2669 = vadd.f32 %v2441, %v2668
        %v2670 = vpop.f32.mrb[0].mxu0
        %2671 = vmatprep.mubr.f32.mxu0 0.0
        %2672 = vmatmul.mubr.f32.gmra.mrb[0].mxu0 %v2240
        %v2673 = vpop.f32.mrb[0].mxu0
        %v2674 = vadd.f32 %v2446, %v2673
        %v2675 = vpop.f32.mrb[0].mxu0
        %2676 = vmatprep.mubr.f32.mxu0 0.0
        %2677 = vmatmul.mubr.f32.gmra.mrb[0].mxu0 %v2243
        %v2678 = vpop.f32.mrb[0].mxu0
        %v2679 = vadd.f32 %v2451, %v2678
        %v2680 = vpop.f32.mrb[0].mxu0
        %2681 = vmatprep.mubr.f32.mxu0 0.0
        %2682 = vmatmul.mubr.f32.gmra.mrb[0].mxu0 %v2246
        %v2683 = vpop.f32.mrb[0].mxu0
        %v2684 = vadd.f32 %v2456, %v2683
        %v2685 = vpop.f32.mrb[0].mxu0
        %2686 = vmatprep.mubr.f32.mxu0 0.0
        %2687 = vmatmul.mubr.f32.gmra.mrb[0].mxu0 %v2249
        %v2688 = vpop.f32.mrb[0].mxu0
        %v2689 = vadd.f32 %v2461, %v2688
        %v2690 = vpop.f32.mrb[0].mxu0
        %2691 = vmatprep.mubr.f32.mxu0 0.0
        %2692 = vmatmul.mubr.f32.gmra.mrb[0].mxu0 %v2252
        %v2693 = vpop.f32.mrb[0].mxu0
        %v2694 = vadd.f32 %v2466, %v2693
        %v2695 = vpop.f32.mrb[0].mxu0
        %2696 = vmatprep.mubr.f32.mxu0 0.0
        %2697 = vmatmul.mubr.f32.gmra.mrb[0].mxu0 %v2255
        %v2698 = vpop.f32.mrb[0].mxu0
        %v2699 = vadd.f32 %v2471, %v2698
        %v2700 = vpop.f32.mrb[0].mxu0
        %2701 = vmatprep.mubr.f32.mxu0 0.0
        %2702 = vmatmul.mubr.f32.gmra.mrb[0].mxu0 %v2258
        %v2703 = vpop.f32.mrb[0].mxu0
        %v2704 = vadd.f32 %v2476, %v2703
        %v2705 = vpop.f32.mrb[0].mxu0
        %2706 = vmatprep.mubr.f32.mxu0 0.0
        %2707 = vmatmul.mubr.f32.gmra.mrb[0].mxu0 %v2261
        %v2708 = vpop.f32.mrb[0].mxu0
        %v2709 = vadd.f32 %v2481, %v2708
        %v2710 = vpop.f32.mrb[0].mxu0
        %2711 = vmatprep.mubr.f32.mxu0 0.0
        %2712 = vmatmul.mubr.f32.gmra.mrb[0].mxu0 %v2264
        %v2713 = vpop.f32.mrb[0].mxu0
        %v2714 = vadd.f32 %v2486, %v2713
        %v2715 = vpop.f32.mrb[0].mxu0
        %2716 = vmatprep.mubr.f32.mxu0 0.0
        %2717 = vmatmul.mubr.f32.gmra.mrb[0].mxu0 %v2267
        %v2718 = vpop.f32.mrb[0].mxu0
        %v2719 = vadd.f32 %v2491, %v2718
        %v2720 = vpop.f32.mrb[0].mxu0
        %2721 = vmatprep.mubr.f32.mxu0 0.0
        %2722 = vmatmul.mubr.f32.gmra.mrb[0].mxu0 %v2270
        %v2723 = vpop.f32.mrb[0].mxu0
        %v2724 = vadd.f32 %v2496, %v2723
        %v2725 = vpop.f32.mrb[0].mxu0
        %2726 = vmatprep.mubr.f32.mxu0 0.0
        %2727 = vmatmul.mubr.f32.gmra.mrb[0].mxu0 %v2273
        %v2728 = vpop.f32.mrb[0].mxu0
        %v2729 = vadd.f32 %v2501, %v2728
        %v2730 = vpop.f32.mrb[0].mxu0
        %2731 = vmatprep.mubr.f32.mxu0 0.0
        %2732 = vmatmul.mubr.f32.gmra.mrb[0].mxu0 %v2276
        %v2733 = vpop.f32.mrb[0].mxu0
        %v2734 = vadd.f32 %v2506, %v2733
        %v2735 = vpop.f32.mrb[0].mxu0
        %2736 = vdwg.mxu0
        %s2737 = scalar_lea.vmem %s3, 48
        %v2738 = vld [vmem:[%s2737] sm:$0xff]
        %v2739 = vld [vmem:[%s2737 + $0x8] sm:$0xff]
        %v2740 = vld [vmem:[%s2737 + $0x10] sm:$0xff]
        %2741 = vmatprep.subr.mxu0 0.0
        %2742 = vmatpush1.msra.mxu0 %v2738
        %2743 = vmatprep.subr.mxu0 0.0
        %2744 = vmatpush1.msra.mxu0 %v2739
        %2745 = vmatprep.subr.mxu0 0.0
        %2746 = vmatpush1.msra.mxu0 %v2740
        %2747 = vmatprep.subr.mxu0 0.0
        %2748 = vmatpush1.msra.mxu0 0.0
        %2749 = vmatprep.subr.mxu0 0.0
        %2750 = vmatpush1.msra.mxu0 0.0
        %2751 = vmatprep.subr.mxu0 0.0
        %2752 = vmatpush1.msra.mxu0 0.0
        %2753 = vmatprep.subr.mxu0 0.0
        %2754 = vmatpush1.msra.mxu0 0.0
        %2755 = vmatprep.subr.mxu0 0.0
        %2756 = vmatpush1.msra.mxu0 0.0
        %2757 = vmatprep.subr.mxu0 0.0
        %2758 = vmatpush1.msra.mxu0 0.0
        %2759 = vmatprep.subr.mxu0 0.0
        %2760 = vmatpush1.msra.mxu0 0.0
        %2761 = vmatprep.subr.mxu0 0.0
        %2762 = vmatpush1.msra.mxu0 0.0
        %2763 = vmatprep.subr.mxu0 0.0
        %2764 = vmatpush1.msra.mxu0 0.0
        %2765 = vmatprep.subr.mxu0 0.0
        %2766 = vmatpush1.msra.mxu0 0.0
        %2767 = vmatprep.subr.mxu0 0.0
        %2768 = vmatpush1.msra.mxu0 0.0
        %2769 = vmatprep.subr.mxu0 0.0
        %2770 = vmatpush1.msra.mxu0 0.0
        %2771 = vmatprep.subr.mxu0 0.0
        %2772 = vmatpush1.msra.mxu0 0.0
        %2773 = vmatprep.subr.mxu0 0.0
        %2774 = vmatpush1.msra.mxu0 0.0
        %2775 = vmatprep.subr.mxu0 0.0
        %2776 = vmatpush1.msra.mxu0 0.0
        %2777 = vmatprep.subr.mxu0 0.0
        %2778 = vmatpush1.msra.mxu0 0.0
        %2779 = vmatprep.subr.mxu0 0.0
        %2780 = vmatpush1.msra.mxu0 0.0
        %2781 = vmatprep.subr.mxu0 0.0
        %2782 = vmatpush1.msra.mxu0 0.0
        %2783 = vmatprep.subr.mxu0 0.0
        %2784 = vmatpush1.msra.mxu0 0.0
        %2785 = vmatprep.subr.mxu0 0.0
        %2786 = vmatpush1.msra.mxu0 0.0
        %2787 = vmatprep.subr.mxu0 0.0
        %2788 = vmatpush1.msra.mxu0 0.0
        %2789 = vmatprep.subr.mxu0 0.0
        %2790 = vmatpush1.msra.mxu0 0.0
        %2791 = vmatprep.subr.mxu0 0.0
        %2792 = vmatpush1.msra.mxu0 0.0
        %2793 = vmatprep.subr.mxu0 0.0
        %2794 = vmatpush1.msra.mxu0 0.0
        %2795 = vmatprep.subr.mxu0 0.0
        %2796 = vmatpush1.msra.mxu0 0.0
        %2797 = vmatprep.subr.mxu0 0.0
        %2798 = vmatpush1.msra.mxu0 0.0
        %2799 = vmatprep.subr.mxu0 0.0
        %2800 = vmatpush1.msra.mxu0 0.0
        %2801 = vmatprep.subr.mxu0 0.0
        %2802 = vmatpush1.msra.mxu0 0.0
        %2803 = vmatprep.subr.mxu0 0.0
        %2804 = vmatpush1.msra.mxu0 0.0
        %2805 = vmatprep.mubr.f32.mxu0 0.0
        %2806 = vmatmul.mubr.f32.gmra.mrb[0].mxu0 %v2195
        %v2807 = vpop.f32.mrb[0].mxu0
        %v2808 = vadd.f32 0.0, %v2807
        %v2809 = vpop.f32.mrb[0].mxu0
        %2810 = vmatprep.mubr.f32.mxu0 0.0
        %2811 = vmatmul.mubr.f32.gmra.mrb[0].mxu0 %v2198
        %v2812 = vpop.f32.mrb[0].mxu0
        %v2813 = vadd.f32 0.0, %v2812
        %v2814 = vpop.f32.mrb[0].mxu0
        %2815 = vmatprep.mubr.f32.mxu0 0.0
        %2816 = vmatmul.mubr.f32.gmra.mrb[0].mxu0 %v2201
        %v2817 = vpop.f32.mrb[0].mxu0
        %v2818 = vadd.f32 0.0, %v2817
        %v2819 = vpop.f32.mrb[0].mxu0
        %2820 = vmatprep.mubr.f32.mxu0 0.0
        %2821 = vmatmul.mubr.f32.gmra.mrb[0].mxu0 %v2204
        %v2822 = vpop.f32.mrb[0].mxu0
        %v2823 = vadd.f32 0.0, %v2822
        %v2824 = vpop.f32.mrb[0].mxu0
        %2825 = vmatprep.mubr.f32.mxu0 0.0
        %2826 = vmatmul.mubr.f32.gmra.mrb[0].mxu0 %v2207
        %v2827 = vpop.f32.mrb[0].mxu0
        %v2828 = vadd.f32 0.0, %v2827
        %v2829 = vpop.f32.mrb[0].mxu0
        %2830 = vmatprep.mubr.f32.mxu0 0.0
        %2831 = vmatmul.mubr.f32.gmra.mrb[0].mxu0 %v2210
        %v2832 = vpop.f32.mrb[0].mxu0
        %v2833 = vadd.f32 0.0, %v2832
        %v2834 = vpop.f32.mrb[0].mxu0
        %2835 = vmatprep.mubr.f32.mxu0 0.0
        %2836 = vmatmul.mubr.f32.gmra.mrb[0].mxu0 %v2213
        %v2837 = vpop.f32.mrb[0].mxu0
        %v2838 = vadd.f32 0.0, %v2837
        %v2839 = vpop.f32.mrb[0].mxu0
        %2840 = vmatprep.mubr.f32.mxu0 0.0
        %2841 = vmatmul.mubr.f32.gmra.mrb[0].mxu0 %v2216
        %v2842 = vpop.f32.mrb[0].mxu0
        %v2843 = vadd.f32 0.0, %v2842
        %v2844 = vpop.f32.mrb[0].mxu0
        %2845 = vmatprep.mubr.f32.mxu0 0.0
        %2846 = vmatmul.mubr.f32.gmra.mrb[0].mxu0 %v2219
        %v2847 = vpop.f32.mrb[0].mxu0
        %v2848 = vadd.f32 0.0, %v2847
        %v2849 = vpop.f32.mrb[0].mxu0
        %2850 = vmatprep.mubr.f32.mxu0 0.0
        %2851 = vmatmul.mubr.f32.gmra.mrb[0].mxu0 %v2222
        %v2852 = vpop.f32.mrb[0].mxu0
        %v2853 = vadd.f32 0.0, %v2852
        %v2854 = vpop.f32.mrb[0].mxu0
        %2855 = vmatprep.mubr.f32.mxu0 0.0
        %2856 = vmatmul.mubr.f32.gmra.mrb[0].mxu0 %v2225
        %v2857 = vpop.f32.mrb[0].mxu0
        %v2858 = vadd.f32 0.0, %v2857
        %v2859 = vpop.f32.mrb[0].mxu0
        %2860 = vmatprep.mubr.f32.mxu0 0.0
        %2861 = vmatmul.mubr.f32.gmra.mrb[0].mxu0 %v2228
        %v2862 = vpop.f32.mrb[0].mxu0
        %v2863 = vadd.f32 0.0, %v2862
        %v2864 = vpop.f32.mrb[0].mxu0
        %2865 = vmatprep.mubr.f32.mxu0 0.0
        %2866 = vmatmul.mubr.f32.gmra.mrb[0].mxu0 %v2231
        %v2867 = vpop.f32.mrb[0].mxu0
        %v2868 = vadd.f32 0.0, %v2867
        %v2869 = vpop.f32.mrb[0].mxu0
        %2870 = vmatprep.mubr.f32.mxu0 0.0
        %2871 = vmatmul.mubr.f32.gmra.mrb[0].mxu0 %v2234
        %v2872 = vpop.f32.mrb[0].mxu0
        %v2873 = vadd.f32 0.0, %v2872
        %v2874 = vpop.f32.mrb[0].mxu0
        %2875 = vmatprep.mubr.f32.mxu0 0.0
        %2876 = vmatmul.mubr.f32.gmra.mrb[0].mxu0 %v2237
        %v2877 = vpop.f32.mrb[0].mxu0
        %v2878 = vadd.f32 0.0, %v2877
        %v2879 = vpop.f32.mrb[0].mxu0
        %2880 = vmatprep.mubr.f32.mxu0 0.0
        %2881 = vmatmul.mubr.f32.gmra.mrb[0].mxu0 %v2240
        %v2882 = vpop.f32.mrb[0].mxu0
        %v2883 = vadd.f32 0.0, %v2882
        %v2884 = vpop.f32.mrb[0].mxu0
        %2885 = vmatprep.mubr.f32.mxu0 0.0
        %2886 = vmatmul.mubr.f32.gmra.mrb[0].mxu0 %v2243
        %v2887 = vpop.f32.mrb[0].mxu0
        %v2888 = vadd.f32 0.0, %v2887
        %v2889 = vpop.f32.mrb[0].mxu0
        %2890 = vmatprep.mubr.f32.mxu0 0.0
        %2891 = vmatmul.mubr.f32.gmra.mrb[0].mxu0 %v2246
        %v2892 = vpop.f32.mrb[0].mxu0
        %v2893 = vadd.f32 0.0, %v2892
        %v2894 = vpop.f32.mrb[0].mxu0
        %2895 = vmatprep.mubr.f32.mxu0 0.0
        %2896 = vmatmul.mubr.f32.gmra.mrb[0].mxu0 %v2249
        %v2897 = vpop.f32.mrb[0].mxu0
        %v2898 = vadd.f32 0.0, %v2897
        %v2899 = vpop.f32.mrb[0].mxu0
        %2900 = vmatprep.mubr.f32.mxu0 0.0
        %2901 = vmatmul.mubr.f32.gmra.mrb[0].mxu0 %v2252
        %v2902 = vpop.f32.mrb[0].mxu0
        %v2903 = vadd.f32 0.0, %v2902
        %v2904 = vpop.f32.mrb[0].mxu0
        %2905 = vmatprep.mubr.f32.mxu0 0.0
        %2906 = vmatmul.mubr.f32.gmra.mrb[0].mxu0 %v2255
        %v2907 = vpop.f32.mrb[0].mxu0
        %v2908 = vadd.f32 0.0, %v2907
        %v2909 = vpop.f32.mrb[0].mxu0
        %2910 = vmatprep.mubr.f32.mxu0 0.0
        %2911 = vmatmul.mubr.f32.gmra.mrb[0].mxu0 %v2258
        %v2912 = vpop.f32.mrb[0].mxu0
        %v2913 = vadd.f32 0.0, %v2912
        %v2914 = vpop.f32.mrb[0].mxu0
        %2915 = vmatprep.mubr.f32.mxu0 0.0
        %2916 = vmatmul.mubr.f32.gmra.mrb[0].mxu0 %v2261
        %v2917 = vpop.f32.mrb[0].mxu0
        %v2918 = vadd.f32 0.0, %v2917
        %v2919 = vpop.f32.mrb[0].mxu0
        %2920 = vmatprep.mubr.f32.mxu0 0.0
        %2921 = vmatmul.mubr.f32.gmra.mrb[0].mxu0 %v2264
        %v2922 = vpop.f32.mrb[0].mxu0
        %v2923 = vadd.f32 0.0, %v2922
        %v2924 = vpop.f32.mrb[0].mxu0
        %2925 = vmatprep.mubr.f32.mxu0 0.0
        %2926 = vmatmul.mubr.f32.gmra.mrb[0].mxu0 %v2267
        %v2927 = vpop.f32.mrb[0].mxu0
        %v2928 = vadd.f32 0.0, %v2927
        %v2929 = vpop.f32.mrb[0].mxu0
        %2930 = vmatprep.mubr.f32.mxu0 0.0
        %2931 = vmatmul.mubr.f32.gmra.mrb[0].mxu0 %v2270
        %v2932 = vpop.f32.mrb[0].mxu0
        %v2933 = vadd.f32 0.0, %v2932
        %v2934 = vpop.f32.mrb[0].mxu0
        %2935 = vmatprep.mubr.f32.mxu0 0.0
        %2936 = vmatmul.mubr.f32.gmra.mrb[0].mxu0 %v2273
        %v2937 = vpop.f32.mrb[0].mxu0
        %v2938 = vadd.f32 0.0, %v2937
        %v2939 = vpop.f32.mrb[0].mxu0
        %2940 = vmatprep.mubr.f32.mxu0 0.0
        %2941 = vmatmul.mubr.f32.gmra.mrb[0].mxu0 %v2276
        %v2942 = vpop.f32.mrb[0].mxu0
        %v2943 = vadd.f32 0.0, %v2942
        %v2944 = vpop.f32.mrb[0].mxu0
        %2945 = vmatprep.mubr.f32.mxu0 0.0
        %2946 = vmatmul.mubr.f32.gmra.mrb[0].mxu0 %v2279
        %v2947 = vpop.f32.mrb[0].mxu0
        %v2948 = vadd.f32 0.0, %v2947
        %v2949 = vpop.f32.mrb[0].mxu0
        %2950 = vmatprep.mubr.f32.mxu0 0.0
        %2951 = vmatmul.mubr.f32.gmra.mrb[0].mxu0 %v2282
        %v2952 = vpop.f32.mrb[0].mxu0
        %v2953 = vadd.f32 0.0, %v2952
        %v2954 = vpop.f32.mrb[0].mxu0
        %2955 = vmatprep.mubr.f32.mxu0 0.0
        %2956 = vmatmul.mubr.f32.gmra.mrb[0].mxu0 %v2510
        %v2957 = vpop.f32.mrb[0].mxu0
        %v2958 = vadd.f32 0.0, %v2957
        %v2959 = vpop.f32.mrb[0].mxu0
        %2960 = vmatprep.mubr.f32.mxu0 0.0
        %2961 = vmatmul.mubr.f32.gmra.mrb[0].mxu0 %v2510
        %v2962 = vpop.f32.mrb[0].mxu0
        %v2963 = vadd.f32 0.0, %v2962
        %v2964 = vpop.f32.mrb[0].mxu0
        %2965 = vdwg.mxu0
        %v2966 = vadd.f32 %v2579, %v2808
        %v2967 = vadd.f32 %v2584, %v2813
        %v2968 = vadd.f32 %v2589, %v2818
        %v2969 = vadd.f32 %v2594, %v2823
        %v2970 = vadd.f32 %v2599, %v2828
        %v2971 = vadd.f32 %v2604, %v2833
        %v2972 = vadd.f32 %v2609, %v2838
        %v2973 = vadd.f32 %v2614, %v2843
        %v2974 = vadd.f32 %v2619, %v2848
        %v2975 = vadd.f32 %v2624, %v2853
        %v2976 = vadd.f32 %v2629, %v2858
        %v2977 = vadd.f32 %v2634, %v2863
        %v2978 = vadd.f32 %v2639, %v2868
        %v2979 = vadd.f32 %v2644, %v2873
        %v2980 = vadd.f32 %v2649, %v2878
        %v2981 = vadd.f32 %v2654, %v2883
        %v2982 = vadd.f32 %v2659, %v2888
        %v2983 = vadd.f32 %v2664, %v2893
        %v2984 = vadd.f32 %v2669, %v2898
        %v2985 = vadd.f32 %v2674, %v2903
        %v2986 = vadd.f32 %v2679, %v2908
        %v2987 = vadd.f32 %v2684, %v2913
        %v2988 = vadd.f32 %v2689, %v2918
        %v2989 = vadd.f32 %v2694, %v2923
        %v2990 = vadd.f32 %v2699, %v2928
        %v2991 = vadd.f32 %v2704, %v2933
        %v2992 = vadd.f32 %v2709, %v2938
        %v2993 = vadd.f32 %v2714, %v2943
        %v2994 = vadd.f32 %v2719, %v2948
        %v2995 = vadd.f32 %v2724, %v2953
        %v2996 = vadd.f32 %v2729, %v2958
        %v2997 = vadd.f32 %v2734, %v2963
        %v2998 = vld [vmem:[%s4] sm:$0x1]
        %v3000 = vlaneseq
        %v3001 = vshrl.u32 %v3000, 7
        %v3002 = vsub.s32 0, %v3001
        %v3003 = vrot.slane %v2998, %v3002
        %v3005 = vadd.f32 %v2966, %v3003
        %v3006 = vadd.f32 %v2967, %v3003
        %v3007 = vadd.f32 %v2968, %v3003
        %v3008 = vadd.f32 %v2969, %v3003
        %v3009 = vadd.f32 %v2970, %v3003
        %v3010 = vadd.f32 %v2971, %v3003
        %v3011 = vadd.f32 %v2972, %v3003
        %v3012 = vadd.f32 %v2973, %v3003
        %v3013 = vadd.f32 %v2974, %v3003
        %v3014 = vadd.f32 %v2975, %v3003
        %v3015 = vadd.f32 %v2976, %v3003
        %v3016 = vadd.f32 %v2977, %v3003
        %v3017 = vadd.f32 %v2978, %v3003
        %v3018 = vadd.f32 %v2979, %v3003
        %v3019 = vadd.f32 %v2980, %v3003
        %v3020 = vadd.f32 %v2981, %v3003
        %v3021 = vadd.f32 %v2982, %v3003
        %v3022 = vadd.f32 %v2983, %v3003
        %v3023 = vadd.f32 %v2984, %v3003
        %v3024 = vadd.f32 %v2985, %v3003
        %v3025 = vadd.f32 %v2986, %v3003
        %v3026 = vadd.f32 %v2987, %v3003
        %v3027 = vadd.f32 %v2988, %v3003
        %v3028 = vadd.f32 %v2989, %v3003
        %v3029 = vadd.f32 %v2990, %v3003
        %v3030 = vadd.f32 %v2991, %v3003
        %v3031 = vadd.f32 %v2992, %v3003
        %v3032 = vadd.f32 %v2993, %v3003
        %v3033 = vadd.f32 %v2994, %v3003
        %v3034 = vadd.f32 %v2995, %v3003
        %v3035 = vadd.f32 %v2996, %v3003
        %v3036 = vadd.f32 %v2997, %v3003
        %v3037 = vmax.f32 %v3005, 0.0
        %v3038 = vmax.f32 %v3006, 0.0
        %v3039 = vmax.f32 %v3007, 0.0
        %v3040 = vmax.f32 %v3008, 0.0
        %v3041 = vmax.f32 %v3009, 0.0
        %v3042 = vmax.f32 %v3010, 0.0
        %v3043 = vmax.f32 %v3011, 0.0
        %v3044 = vmax.f32 %v3012, 0.0
        %v3045 = vmax.f32 %v3013, 0.0
        %v3046 = vmax.f32 %v3014, 0.0
        %v3047 = vmax.f32 %v3015, 0.0
        %v3048 = vmax.f32 %v3016, 0.0
        %v3049 = vmax.f32 %v3017, 0.0
        %v3050 = vmax.f32 %v3018, 0.0
        %v3051 = vmax.f32 %v3019, 0.0
        %v3052 = vmax.f32 %v3020, 0.0
        %v3053 = vmax.f32 %v3021, 0.0
        %v3054 = vmax.f32 %v3022, 0.0
        %v3055 = vmax.f32 %v3023, 0.0
        %v3056 = vmax.f32 %v3024, 0.0
        %v3057 = vmax.f32 %v3025, 0.0
        %v3058 = vmax.f32 %v3026, 0.0
        %v3059 = vmax.f32 %v3027, 0.0
        %v3060 = vmax.f32 %v3028, 0.0
        %v3061 = vmax.f32 %v3029, 0.0
        %v3062 = vmax.f32 %v3030, 0.0
        %v3063 = vmax.f32 %v3031, 0.0
        %v3064 = vmax.f32 %v3032, 0.0
        %v3065 = vmax.f32 %v3033, 0.0
        %v3066 = vmax.f32 %v3034, 0.0
        %v3067 = vmax.f32 %v3035, 0.0
        %v3068 = vmax.f32 %v3036, 0.0
        %v3069 = vsel %vm775, %v3037, 0.0
        %v3070 = vsel %vm775, %v3039, 0.0
        %v3071 = vadd.f32 %v3069, %v3070
        %v3072 = vsel %vm775, %v3041, 0.0
        %v3073 = vadd.f32 %v3071, %v3072
        %v3074 = vsel %vm775, %v3043, 0.0
        %v3075 = vadd.f32 %v3073, %v3074
        %v3076 = vsel %vm775, %v3045, 0.0
        %v3077 = vadd.f32 %v3075, %v3076
        %v3078 = vsel %vm775, %v3047, 0.0
        %v3079 = vadd.f32 %v3077, %v3078
        %v3080 = vsel %vm775, %v3049, 0.0
        %v3081 = vadd.f32 %v3079, %v3080
        %v3082 = vsel %vm775, %v3051, 0.0
        %v3083 = vadd.f32 %v3081, %v3082
        %v3084 = vsel %vm775, %v3053, 0.0
        %v3085 = vadd.f32 %v3083, %v3084
        %v3086 = vsel %vm775, %v3055, 0.0
        %v3087 = vadd.f32 %v3085, %v3086
        %v3088 = vsel %vm775, %v3057, 0.0
        %v3089 = vadd.f32 %v3087, %v3088
        %v3090 = vsel %vm775, %v3059, 0.0
        %v3091 = vadd.f32 %v3089, %v3090
        %v3092 = vsel %vm775, %v3061, 0.0
        %v3093 = vadd.f32 %v3091, %v3092
        %v3094 = vsel %vm775, %v3063, 0.0
        %v3095 = vadd.f32 %v3093, %v3094
        %v3096 = vsel %vm775, %v3065, 0.0
        %v3097 = vadd.f32 %v3095, %v3096
        %v3098 = vsel %vm775, %v3067, 0.0
        %v3099 = vadd.f32 %v3097, %v3098
        %v3100 = vsel %vm775, %v3038, 0.0
        %v3101 = vsel %vm775, %v3040, 0.0
        %v3102 = vadd.f32 %v3100, %v3101
        %v3103 = vsel %vm775, %v3042, 0.0
        %v3104 = vadd.f32 %v3102, %v3103
        %v3105 = vsel %vm775, %v3044, 0.0
        %v3106 = vadd.f32 %v3104, %v3105
        %v3107 = vsel %vm775, %v3046, 0.0
        %v3108 = vadd.f32 %v3106, %v3107
        %v3109 = vsel %vm775, %v3048, 0.0
        %v3110 = vadd.f32 %v3108, %v3109
        %v3111 = vsel %vm775, %v3050, 0.0
        %v3112 = vadd.f32 %v3110, %v3111
        %v3113 = vsel %vm775, %v3052, 0.0
        %v3114 = vadd.f32 %v3112, %v3113
        %v3115 = vsel %vm775, %v3054, 0.0
        %v3116 = vadd.f32 %v3114, %v3115
        %v3117 = vsel %vm775, %v3056, 0.0
        %v3118 = vadd.f32 %v3116, %v3117
        %v3119 = vsel %vm775, %v3058, 0.0
        %v3120 = vadd.f32 %v3118, %v3119
        %v3121 = vsel %vm775, %v3060, 0.0
        %v3122 = vadd.f32 %v3120, %v3121
        %v3123 = vsel %vm775, %v3062, 0.0
        %v3124 = vadd.f32 %v3122, %v3123
        %v3125 = vsel %vm775, %v3064, 0.0
        %v3126 = vadd.f32 %v3124, %v3125
        %v3127 = vsel %vm775, %v3066, 0.0
        %v3128 = vadd.f32 %v3126, %v3127
        %v3129 = vsel %vm775, %v3068, 0.0
        %v3130 = vadd.f32 %v3128, %v3129
        %v3131 = vld [vmem:[%s5] sm:$0xff]
        %v3132 = vld [vmem:[%s6] sm:$0x1]
        %v3134 = vlaneseq
        %v3135 = vshrl.u32 %v3134, 7
        %v3136 = vsub.s32 0, %v3135
        %v3137 = vrot.slane %v3132, %v3136
        %v3140 = vsel %vm775, %v3099, 0
        %v3143 = vsel %vm775, %v3130, 0
        %3145 = vmatprep.subr.mxu0 0.0
        %3146 = vmatpush1.msra.mxu0 %v3131
        %3147 = vmatprep.subr.mxu0 0.0
        %3148 = vmatpush1.msra.mxu0 0.0
        %3149 = vmatprep.subr.mxu0 0.0
        %3150 = vmatpush1.msra.mxu0 0.0
        %3151 = vmatprep.subr.mxu0 0.0
        %3152 = vmatpush1.msra.mxu0 0.0
        %3153 = vmatprep.subr.mxu0 0.0
        %3154 = vmatpush1.msra.mxu0 0.0
        %3155 = vmatprep.subr.mxu0 0.0
        %3156 = vmatpush1.msra.mxu0 0.0
        %3157 = vmatprep.subr.mxu0 0.0
        %3158 = vmatpush1.msra.mxu0 0.0
        %3159 = vmatprep.subr.mxu0 0.0
        %3160 = vmatpush1.msra.mxu0 0.0
        %3161 = vmatprep.subr.mxu0 0.0
        %3162 = vmatpush1.msra.mxu0 0.0
        %3163 = vmatprep.subr.mxu0 0.0
        %3164 = vmatpush1.msra.mxu0 0.0
        %3165 = vmatprep.subr.mxu0 0.0
        %3166 = vmatpush1.msra.mxu0 0.0
        %3167 = vmatprep.subr.mxu0 0.0
        %3168 = vmatpush1.msra.mxu0 0.0
        %3169 = vmatprep.subr.mxu0 0.0
        %3170 = vmatpush1.msra.mxu0 0.0
        %3171 = vmatprep.subr.mxu0 0.0
        %3172 = vmatpush1.msra.mxu0 0.0
        %3173 = vmatprep.subr.mxu0 0.0
        %3174 = vmatpush1.msra.mxu0 0.0
        %3175 = vmatprep.subr.mxu0 0.0
        %3176 = vmatpush1.msra.mxu0 0.0
        %3177 = vmatprep.subr.mxu0 0.0
        %3178 = vmatpush1.msra.mxu0 0.0
        %3179 = vmatprep.subr.mxu0 0.0
        %3180 = vmatpush1.msra.mxu0 0.0
        %3181 = vmatprep.subr.mxu0 0.0
        %3182 = vmatpush1.msra.mxu0 0.0
        %3183 = vmatprep.subr.mxu0 0.0
        %3184 = vmatpush1.msra.mxu0 0.0
        %3185 = vmatprep.subr.mxu0 0.0
        %3186 = vmatpush1.msra.mxu0 0.0
        %3187 = vmatprep.subr.mxu0 0.0
        %3188 = vmatpush1.msra.mxu0 0.0
        %3189 = vmatprep.subr.mxu0 0.0
        %3190 = vmatpush1.msra.mxu0 0.0
        %3191 = vmatprep.subr.mxu0 0.0
        %3192 = vmatpush1.msra.mxu0 0.0
        %3193 = vmatprep.subr.mxu0 0.0
        %3194 = vmatpush1.msra.mxu0 0.0
        %3195 = vmatprep.subr.mxu0 0.0
        %3196 = vmatpush1.msra.mxu0 0.0
        %3197 = vmatprep.subr.mxu0 0.0
        %3198 = vmatpush1.msra.mxu0 0.0
        %3199 = vmatprep.subr.mxu0 0.0
        %3200 = vmatpush1.msra.mxu0 0.0
        %3201 = vmatprep.subr.mxu0 0.0
        %3202 = vmatpush1.msra.mxu0 0.0
        %3203 = vmatprep.subr.mxu0 0.0
        %3204 = vmatpush1.msra.mxu0 0.0
        %3205 = vmatprep.subr.mxu0 0.0
        %3206 = vmatpush1.msra.mxu0 0.0
        %3207 = vmatprep.subr.mxu0 0.0
        %3208 = vmatpush1.msra.mxu0 0.0
        %3209 = vmatprep.mubr.f32.mxu0 0.0
        %3210 = vmatmul.mubr.f32.gmra.mrb[0].mxu0 %v3140
        %v3211 = vpop.f32.mrb[0].mxu0
        %v3212 = vadd.f32 %v3137, %v3211
        %v3213 = vpop.f32.mrb[0].mxu0
        %3214 = vmatprep.mubr.f32.mxu0 0.0
        %3215 = vmatmul.mubr.f32.gmra.mrb[0].mxu0 %v3143
        %v3216 = vpop.f32.mrb[0].mxu0
        %v3217 = vadd.f32 %v3137, %v3216
        %v3218 = vpop.f32.mrb[0].mxu0
        %3219 = vdwg.mxu0
        %v3220 = vmax.f32 %v3212, 0.0
        %v3221 = vmax.f32 %v3217, 0.0
        %v3222 = vld [vmem:[%s7] sm:$0xff]
        %v3223 = vld [vmem:[%s7 + $0x8] sm:$0xff]
        %v3224 = vld [vmem:[%s7 + $0x10] sm:$0xff]
        %v3225 = vld [vmem:[%s7 + $0x18] sm:$0xff]
        %v3226 = vld [vmem:[%s8] sm:$0x1]
        %v3228 = vlaneseq
        %v3229 = vshrl.u32 %v3228, 7
        %v3230 = vsub.s32 0, %v3229
        %v3231 = vrot.slane %v3226, %v3230
        %vm3233 = vcmask 261120
        %v3235 = vsel %vm3233, %v3220, 0
        %v3238 = vsel %vm3233, %v3221, 0
        %3240 = vmatprep.subr.mxu0 0.0
        %3241 = vmatpush1.msra.mxu0 %v3222
        %3242 = vmatprep.subr.mxu0 0.0
        %3243 = vmatpush1.msra.mxu0 %v3223
        %3244 = vmatprep.subr.mxu0 0.0
        %3245 = vmatpush1.msra.mxu0 %v3224
        %3246 = vmatprep.subr.mxu0 0.0
        %3247 = vmatpush1.msra.mxu0 %v3225
        %3248 = vmatprep.subr.mxu0 0.0
        %3249 = vmatpush1.msra.mxu0 0.0
        %3250 = vmatprep.subr.mxu0 0.0
        %3251 = vmatpush1.msra.mxu0 0.0
        %3252 = vmatprep.subr.mxu0 0.0
        %3253 = vmatpush1.msra.mxu0 0.0
        %3254 = vmatprep.subr.mxu0 0.0
        %3255 = vmatpush1.msra.mxu0 0.0
        %3256 = vmatprep.subr.mxu0 0.0
        %3257 = vmatpush1.msra.mxu0 0.0
        %3258 = vmatprep.subr.mxu0 0.0
        %3259 = vmatpush1.msra.mxu0 0.0
        %3260 = vmatprep.subr.mxu0 0.0
        %3261 = vmatpush1.msra.mxu0 0.0
        %3262 = vmatprep.subr.mxu0 0.0
        %3263 = vmatpush1.msra.mxu0 0.0
        %3264 = vmatprep.subr.mxu0 0.0
        %3265 = vmatpush1.msra.mxu0 0.0
        %3266 = vmatprep.subr.mxu0 0.0
        %3267 = vmatpush1.msra.mxu0 0.0
        %3268 = vmatprep.subr.mxu0 0.0
        %3269 = vmatpush1.msra.mxu0 0.0
        %3270 = vmatprep.subr.mxu0 0.0
        %3271 = vmatpush1.msra.mxu0 0.0
        %3272 = vmatprep.subr.mxu0 0.0
        %3273 = vmatpush1.msra.mxu0 0.0
        %3274 = vmatprep.subr.mxu0 0.0
        %3275 = vmatpush1.msra.mxu0 0.0
        %3276 = vmatprep.subr.mxu0 0.0
        %3277 = vmatpush1.msra.mxu0 0.0
        %3278 = vmatprep.subr.mxu0 0.0
        %3279 = vmatpush1.msra.mxu0 0.0
        %3280 = vmatprep.subr.mxu0 0.0
        %3281 = vmatpush1.msra.mxu0 0.0
        %3282 = vmatprep.subr.mxu0 0.0
        %3283 = vmatpush1.msra.mxu0 0.0
        %3284 = vmatprep.subr.mxu0 0.0
        %3285 = vmatpush1.msra.mxu0 0.0
        %3286 = vmatprep.subr.mxu0 0.0
        %3287 = vmatpush1.msra.mxu0 0.0
        %3288 = vmatprep.subr.mxu0 0.0
        %3289 = vmatpush1.msra.mxu0 0.0
        %3290 = vmatprep.subr.mxu0 0.0
        %3291 = vmatpush1.msra.mxu0 0.0
        %3292 = vmatprep.subr.mxu0 0.0
        %3293 = vmatpush1.msra.mxu0 0.0
        %3294 = vmatprep.subr.mxu0 0.0
        %3295 = vmatpush1.msra.mxu0 0.0
        %3296 = vmatprep.subr.mxu0 0.0
        %3297 = vmatpush1.msra.mxu0 0.0
        %3298 = vmatprep.subr.mxu0 0.0
        %3299 = vmatpush1.msra.mxu0 0.0
        %3300 = vmatprep.subr.mxu0 0.0
        %3301 = vmatpush1.msra.mxu0 0.0
        %3302 = vmatprep.subr.mxu0 0.0
        %3303 = vmatpush1.msra.mxu0 0.0
        %3304 = vmatprep.mubr.f32.mxu0 0.0
        %3305 = vmatmul.mubr.f32.gmra.mrb[0].mxu0 %v3235
        %v3306 = vpop.f32.mrb[0].mxu0
        %v3307 = vadd.f32 %v3231, %v3306
        %v3308 = vpop.f32.mrb[0].mxu0
        %3309 = vmatprep.mubr.f32.mxu0 0.0
        %3310 = vmatmul.mubr.f32.gmra.mrb[0].mxu0 %v3238
        %v3311 = vpop.f32.mrb[0].mxu0
        %v3312 = vadd.f32 %v3231, %v3311
        %v3313 = vpop.f32.mrb[0].mxu0
        %3314 = vdwg.mxu0
        %v3315 = vxor.u32 %v3307, 2147483648
        %v3316 = vxor.u32 %v3312, 2147483648
        %v3317 = vmul.f32 %v3315, 1.442695
        %v3318 = vpow.pop %v3317
        %v3319 = vmul.f32 %v3316, 1.442695
        %v3320 = vpow.pop %v3319
        %v3321 = vadd.f32 %v3318, 1.0
        %v3322 = vadd.f32 %v3320, 1.0
        %v3323 = vrcp.pop %v3321
        %v3324 = vmul.f32 1.0, %v3323
        %v3325 = vrcp.pop %v3322
        %v3326 = vmul.f32 1.0, %v3325
        %3327 = vst [vmem:[%s325] sm:$0xff] %v3324
        %3328 = vst [vmem:[%s325 + $0x8] sm:$0xff] %v3326
        %s3329 = sand.u32 %s225, 1
        %s3330 = scalar_lea.sflag [#allocation3], %s3329
        %s3331 = sand.u32 %s225, 1
        %s3332 = smul.addr %s3331, 16
        %s3333 = scalar_lea.vmem [#allocation2], %s3332
        // Predicated region
        $region57: #{tpu_custom_call.1} parent=55 // pred_check
          %p3334 = pneg %p235
        $region58: #{tpu_custom_call.1} parent=55 // pred_check_branch
          %3336 = sbr.rel (%p3334) target = $region60
        $region59: #{tpu_custom_call.1} parent=55 // pred_region
          %s3338 = ssub.s32 256, 256
          %3339 = vsyncadd %s3330, %s3338
          %s3340 = smul.addr %s23, 2
          %s3341 = smul.addr %s3340, 128
          %s3342 = scalar_lea.hbm %s9, %s3341
          %s3343 = sshll.u32 %s3333, 4
          %s3344 = int_to_ptr.vmem [resolvable:$true] %s3343
          %3349 = dma.vmem_to_hbm [thread:$0]  %s3344, 256, %s3342, %s3330, 128, 128, 8
        $region60: #{tpu_custom_call.1} parent=55 // pred_fallthru
          _
      $region56: #{tpu_custom_call.1} parent=5 // pred_fallthru
        _
      %p3350 = scmp.le.s32.totalorder 2, %s18
      // Predicated region
      $region61: #{tpu_custom_call.1} parent=5 // pred_check
        %p3351 = pneg %p3350
      $region62: #{tpu_custom_call.1} parent=5 // pred_check_branch
        %3353 = sbr.rel (%p3351) target = $region64
      $region63: #{tpu_custom_call.1} parent=5 // pred_region
        %s3354 = ssub.s32 %s18, 2
        // Predicated region
        $region65: #{tpu_custom_call.1} parent=63 // pred_check
          %p3355 = pneg %p241
        $region66: #{tpu_custom_call.1} parent=63 // pred_check_branch
          %3357 = sbr.rel (%p3355) target = $region68
        $region67: #{tpu_custom_call.1} parent=63 // pred_region
          %s3358 = sand.u32 %s226, 1
          %s3359 = scalar_lea.sflag [#allocation3], %s3358
          %s3360 = sand.u32 %s226, 1
          %s3361 = smul.addr %s3360, 16
          %s3362 = scalar_lea.vmem [#allocation2], %s3361
          %3363 = dma.done %s3359, 256
        $region68: #{tpu_custom_call.1} parent=63 // pred_fallthru
          _
      $region64: #{tpu_custom_call.1} parent=5 // pred_fallthru
        _
    $region6: #{tpu_custom_call.1} parent=1 // loop_footer
      %s22 = sadd.s32 1, %s18
    $region7: #{tpu_custom_call.1} parent=1 // loop_footer_branch
      %17 = sbr.rel target = $region3
    $region8: #{tpu_custom_call.1} parent=1 // loop_exit
      _
    %3364 = vsyncpa [#allocation3], 1
    %s3365 = scalar_lea.sflag [#allocation3], 1
    %3366 = vsyncpa %s3365, 1

</llo_original>
